<compile_context>
chip_gen: v7x
topology: tpu7x:2x2x1
jax: 0.10.0
libtpu: 0.0.40
codegen_flags: <defaults>
</compile_context>

<pallas_src>
import numpy as np
import jax
import jax.numpy as jnp
from jax.experimental import pallas as pl

# ---------------------------------------------------------------------------
# Small synthetic config (mirrors self.config / args in the PyTorch module)
# ---------------------------------------------------------------------------
B = 2              # batch
S = 16             # sequence length (includes the [CLS]-like position 0)
H = 32             # config.hidden_size
HEADS = 4          # config.num_attention_heads
LAYERS = 2         # config.num_hidden_layers
A = HEADS * LAYERS # attention-feature dim of z
H1 = 16            # args.hidden_size1
H2 = 16            # args.hidden_size2
ENTITY = 5
RELATION = 6
EVENT = 4
ROLE = 7
N = 7              # per-sample table size n (n + 1 <= S)
N2 = N * N
BN = B * N
BN2 = B * N2
NHEAD = ENTITY + RELATION + EVENT + ROLE   # 22 packed head-logit lanes
NOUT = NHEAD + 4                           # + 4 bin-logit lanes (w_re, w_ee, c_re, c_ee)
LN_EPS = 1e-5


def _gelu(x):
    # TODO(synk): torch F.gelu defaults to the exact erf GELU; the tanh
    # approximation is used in-kernel for Mosaic-safe lowering.
    return jax.nn.gelu(x, approximate=True)


# ---------------------------------------------------------------------------
# The single fused kernel
# ---------------------------------------------------------------------------
def _fused_table_kernel(ctx2_ref, zf_ref,
                        rsel_ref, csel_ref, summat_ref, lnavg_ref, pick_ref,
                        wr_ref, wc_ref, wz_ref, bp_ref,
                        bw1_ref, bb1_ref, bw2_ref, bb2_ref,
                        g_ref, be_ref, wa_ref, wb_ref, bs_ref,
                        wh1_ref, bh1_ref, wh2_ref, bh2_ref,
                        out_ref):
    f32 = jnp.float32
    ctx2 = ctx2_ref[...]        # (BN, 2H)   packed [ctx | ctx]
    zf = zf_ref[...]            # (BN2, A)
    rsel = rsel_ref[...]        # (BN2, BN)  per-sample row broadcast (block-diag)
    csel = csel_ref[...]        # (BN2, BN)  per-sample col broadcast (block-diag)
    summat = summat_ref[...]    # (BN, BN2)  per-sample row-sum + col-sum
    lnavg = lnavg_ref[...]      # (2H, 2H)   per-half mean matrix (1/H blocks)
    pick = pick_ref[...]        # (2H, 2)    extract one lane per half

    def dot(x, y):
        return jnp.dot(x, y, preferred_element_type=f32)

    def pair_stage(rows, k):
        # rows: (BN, 2H) packed [re | ee] per-token features for this stage.
        rproj = dot(rows, wr_ref[k])                    # (BN, 2H)
        cproj = dot(rows, wc_ref[k])                    # (BN, 2H)
        zproj = dot(zf, wz_ref[k])                      # (BN2, 2H)
        broad = dot(rsel, rproj) + dot(csel, cproj)     # (BN2, 2H)
        return _gelu(zproj + broad + bp_ref[k])

    def gate_seq_stage(tab, k):
        hid = _gelu(dot(tab, bw1_ref[k]) + bb1_ref[k])  # (BN2, 2*H1)  bin hidden
        glog = dot(hid, bw2_ref[k]) + bb2_ref[k]        # (BN2, 2H)  gate logits, replicated per half
        lg = dot(glog, pick)                            # (BN2, 2)   bin logits [re, ee]
        gated = tab * jax.nn.sigmoid(glog)              # per-half sigmoid gate
        s = dot(summat, gated)                          # (BN, 2H)  sum(0)+sum(1) per sample
        mu = dot(s, lnavg)                              # per-half mean
        d = s - mu
        var = dot(d * d, lnavg)                         # per-half biased variance
        info = d * jax.lax.rsqrt(var + LN_EPS) * g_ref[k] + be_ref[k]
        new = _gelu(dot(ctx2, wa_ref[k]) + dot(info, wb_ref[k]) + bs_ref[k])  # (BN, 2H)
        return new, lg

    tab0 = pair_stage(ctx2, 0)                 # table0 over [re | ee]
    new1, lg_w = gate_seq_stage(tab0, 0)       # within_table  (block-diag wb)
    tab1 = pair_stage(new1, 1)                 # table1
    new2, lg_c = gate_seq_stage(tab1, 1)       # cross_table   (swap baked into wb)
    tab2 = pair_stage(new2, 2)                 # table2

    hh = _gelu(dot(tab2, wh1_ref[...]) + bh1_ref[...])   # (BN2, 4*H2)
    heads = dot(hh, wh2_ref[...]) + bh2_ref[...]         # (BN2, 22)

    # Single 26-lane output slab: [entity|relation|trigger|argument|binW|binC].
    out_ref[:, 0:NHEAD] = heads
    out_ref[:, NHEAD:NHEAD + 2] = lg_w
    out_ref[:, NHEAD + 2:NHEAD + 4] = lg_c


def fused_table(ctx2, zf, consts, prep):
    return pl.pallas_call(
        _fused_table_kernel,
        out_shape=jax.ShapeDtypeStruct((BN2, NOUT), jnp.float32),
    )(ctx2, zf,
      consts["rsel"], consts["csel"], consts["summat"], consts["lnavg"], consts["pick"],
      prep["wr"], prep["wc"], prep["wz"], prep["bp"],
      prep["bw1"], prep["bb1"], prep["bw2"], prep["bb2"],
      prep["g"], prep["be"], prep["wa"], prep["wb"], prep["bs"],
      prep["wh1"], prep["bh1"], prep["wh2"], prep["bh2"])


# ---------------------------------------------------------------------------
# Losses (plain-JAX glue inside the same jit, matching torch semantics)
# ---------------------------------------------------------------------------
def bce_mean(logits, targets):
    # logits/targets: (B, N2); BCEWithLogitsLoss(reduction="mean") per sample.
    loss = (jnp.maximum(logits, 0.0) - logits * targets
            + jnp.log1p(jnp.exp(-jnp.abs(logits))))
    return jnp.mean(loss, axis=-1)                                    # (B,)


def masked_ce_mean(logits, labels, mask):
    # logits: (B, N, N, C); labels: (B, N, N) int; mask: (N, N) int
    targets = (labels * mask[None]).astype(jnp.int32)
    logz = jax.nn.logsumexp(logits, axis=-1)
    picked = jnp.take_along_axis(logits, targets[..., None], axis=-1)[..., 0]
    per = logz - picked
    m = mask.astype(jnp.float32)
    return jnp.sum(per * m[None], axis=(1, 2)) / jnp.sum(m)           # (B,)


# ---------------------------------------------------------------------------
# Batched, jitted forward
# ---------------------------------------------------------------------------
def _forward_impl(prep, consts, seq_out, z, labels1, labels2):
    bb = seq_out.shape[0]
    ctx = seq_out[:, 1:N + 1, :]                                      # (B, N, H)
    ctx2 = jnp.concatenate([ctx, ctx], axis=-1).reshape(bb * N, 2 * H)
    zf = z[:, 1:N + 1, 1:N + 1, :].reshape(bb * N2, A)

    slab = fused_table(ctx2, zf, consts, prep)                        # (B*N2, 26)

    head = slab[:, :NHEAD].reshape(bb, N, N, NHEAD)
    entity_logits = head[..., :ENTITY]
    relation_logits = head[..., ENTITY:ENTITY + RELATION]
    trigger_logits = head[..., ENTITY + RELATION:ENTITY + RELATION + EVENT]
    argument_logits = head[..., ENTITY + RELATION + EVENT:]
    binlg = slab[:, NHEAD:].reshape(bb, N2, 4)

    mask1 = jnp.eye(N, dtype=jnp.int32)
    mask2 = (jnp.ones((N, N), jnp.float32) - jnp.eye(N)).astype(jnp.int32)

    lab1_bin = jnp.clip(labels1, 0, 1).astype(jnp.float32).reshape(bb, N2)
    lab2_bin = jnp.clip(labels2, 0, 1).astype(jnp.float32).reshape(bb, N2)
    lb1 = bce_mean(binlg[..., 0], lab1_bin)
    lb2 = bce_mean(binlg[..., 1], lab2_bin)
    lb3 = bce_mean(binlg[..., 2], lab1_bin)
    lb4 = bce_mean(binlg[..., 3], lab2_bin)

    entity_loss = masked_ce_mean(entity_logits, labels1, mask1)
    relation_loss = masked_ce_mean(relation_logits, labels1, mask2)
    trigger_loss = masked_ce_mean(trigger_logits, labels2, mask1)
    argument_loss = masked_ce_mean(argument_logits, labels2, mask2)

    per_sample = (entity_loss + trigger_loss + relation_loss + argument_loss
                  + 3.0 * (lb1 + lb2 + lb3 + lb4))
    total_loss = jnp.mean(per_sample)

    entity_res = jnp.argmax(entity_logits, axis=-1).astype(jnp.int32)
    relation_res = jnp.argmax(relation_logits, axis=-1).astype(jnp.int32)
    trigger_res = jnp.argmax(trigger_logits, axis=-1).astype(jnp.int32)
    argument_res = jnp.argmax(
        argument_logits + jnp.swapaxes(argument_logits, 1, 2), axis=-1).astype(jnp.int32)
    res1 = entity_res * mask1[None] + relation_res * mask2[None]
    res2 = trigger_res * mask1[None] + argument_res * mask2[None]
    return total_loss, res1, res2


table_forward = jax.jit(_forward_impl)


# ---------------------------------------------------------------------------
# One-time parameter packing (block-diag / replicated / concatenated weights)
# ---------------------------------------------------------------------------
def prepare_params(params):
    f32 = jnp.float32
    zHH = jnp.zeros((H, H), f32)
    zH_H1 = jnp.zeros((H, H1), f32)
    zH1_H = jnp.zeros((H1, H), f32)

    def pair_block(re_name, ee_name):
        wre, wee = params[re_name]["w"], params[ee_name]["w"]          # (H, 2H+A)
        wrow = jnp.block([[wre[:, :H].T, zHH], [zHH, wee[:, :H].T]])                # (2H,2H)
        wcol = jnp.block([[wre[:, H:2 * H].T, zHH], [zHH, wee[:, H:2 * H].T]])      # (2H,2H)
        wz = jnp.concatenate([wre[:, 2 * H:].T, wee[:, 2 * H:].T], axis=1)          # (A,2H)
        b = jnp.concatenate([params[re_name]["b"], params[ee_name]["b"]])[None]     # (1,2H)
        return wrow, wcol, wz, b

    p0 = pair_block("re_table0", "ee_table0")
    p1 = pair_block("re_table1", "ee_table1")
    p2 = pair_block("re_table2", "ee_table2")
    wr = jnp.stack([p0[0], p1[0], p2[0]])
    wc = jnp.stack([p0[1], p1[1], p2[1]])
    wz = jnp.stack([p0[2], p1[2], p2[2]])
    bp = jnp.stack([p0[3], p1[3], p2[3]])

    def gate_block(b1re, b1ee, b2re, b2ee, nre, nee, sre, see, cross):
        bw1 = jnp.block([[params[b1re]["w"].T, zH_H1],
                         [zH_H1, params[b1ee]["w"].T]])                             # (2H,2H1)
        bb1 = jnp.concatenate([params[b1re]["b"], params[b1ee]["b"]])[None]         # (1,2H1)
        # Gate-logit weights replicated across each half's H lanes -> full-width
        # sigmoid gate without any width-1 lane work.
        wre2 = jnp.broadcast_to(params[b2re]["w"].T, (H1, H))
        wee2 = jnp.broadcast_to(params[b2ee]["w"].T, (H1, H))
        bw2 = jnp.block([[wre2, zH1_H], [zH1_H, wee2]])                             # (2H1,2H)
        bb2 = jnp.concatenate([jnp.broadcast_to(params[b2re]["b"], (H,)),
                               jnp.broadcast_to(params[b2ee]["b"], (H,))])[None]    # (1,2H)
        g = jnp.concatenate([params[nre]["g"], params[nee]["g"]])[None]             # (1,2H)
        be = jnp.concatenate([params[nre]["b"], params[nee]["b"]])[None]            # (1,2H)
        # Seq head: ctx part (top rows only, ctx2 = [ctx|ctx]) ...
        wa_top = jnp.concatenate([params[sre]["w"][:, :H].T,
                                  params[see]["w"][:, :H].T], axis=1)               # (H,2H)
        wa = jnp.concatenate([wa_top, jnp.zeros((H, 2 * H), f32)], axis=0)          # (2H,2H)
        # ... info part: block-diag for within, anti-block-diag for cross (swap).
        wb_re = params[sre]["w"][:, H:].T
        wb_ee = params[see]["w"][:, H:].T
        if cross:
            wb = jnp.block([[zHH, wb_ee], [wb_re, zHH]])
        else:
            wb = jnp.block([[wb_re, zHH], [zHH, wb_ee]])
        bs = jnp.concatenate([params[sre]["b"], params[see]["b"]])[None]            # (1,2H)
        return bw1, bb1, bw2, bb2, g, be, wa, wb, bs

    gw = gate_block("re_bin1", "ee_bin1", "re_bin2", "ee_bin2",
                    "norm1", "norm2", "re_seq1", "ee_seq1", cross=False)
    gc = gate_block("re_bin3", "ee_bin3", "re_bin4", "ee_bin4",
                    "norm3", "norm4", "re_seq2", "ee_seq2", cross=True)
    bw1, bb1, bw2, bb2, g, be, wa, wb, bs = (jnp.stack([a, b]) for a, b in zip(gw, gc))

    # Output heads packed so two dots on the 2H-lane table yield all 22 logits.
    zH_H2 = jnp.zeros((H, H2), f32)
    e1 = params["entity_out1"]["w"].T
    r1 = params["relation_out1"]["w"].T
    t1 = params["trigger_out1"]["w"].T
    a1 = params["argument_out1"]["w"].T
    wh1 = jnp.block([[e1, r1, zH_H2, zH_H2], [zH_H2, zH_H2, t1, a1]])               # (2H,4H2)
    bh1 = jnp.concatenate([params["entity_out1"]["b"], params["relation_out1"]["b"],
                           params["trigger_out1"]["b"], params["argument_out1"]["b"]])[None]
    e2 = params["entity_out2"]["w"].T
    r2 = params["relation_out2"]["w"].T
    t2 = params["trigger_out2"]["w"].T
    a2 = params["argument_out2"]["w"].T

    def zz(c):
        return jnp.zeros((H2, c), f32)

    wh2 = jnp.block([[e2, zz(RELATION), zz(EVENT), zz(ROLE)],
                     [zz(ENTITY), r2, zz(EVENT), zz(ROLE)],
                     [zz(ENTITY), zz(RELATION), t2, zz(ROLE)],
                     [zz(ENTITY), zz(RELATION), zz(EVENT), a2]])                    # (4H2,22)
    bh2 = jnp.concatenate([params["entity_out2"]["b"], params["relation_out2"]["b"],
                           params["trigger_out2"]["b"], params["argument_out2"]["b"]])[None]

    return dict(wr=wr, wc=wc, wz=wz, bp=bp,
                bw1=bw1, bb1=bb1, bw2=bw2, bb2=bb2, g=g, be=be, wa=wa, wb=wb, bs=bs,
                wh1=wh1, bh1=bh1, wh2=wh2, bh2=bh2)


def make_constants():
    idx = np.arange(N2)
    ii, jj = idx // N, idx % N
    rsel1 = (ii[:, None] == np.arange(N)[None]).astype(np.float32)    # (N2,N) row broadcast
    csel1 = (jj[:, None] == np.arange(N)[None]).astype(np.float32)    # (N2,N) col broadcast
    summat1 = rsel1.T + csel1.T                                       # (N,N2) sum(0)+sum(1)
    eyeb = np.eye(B, dtype=np.float32)
    rsel = np.kron(eyeb, rsel1)          # (B*N2, B*N) block-diag: batch folded into rows
    csel = np.kron(eyeb, csel1)
    summat = np.kron(eyeb, summat1)      # (B*N, B*N2)
    lnavg = np.kron(np.eye(2, dtype=np.float32),
                    np.full((H, H), 1.0 / H, np.float32))             # per-half mean matrix
    pick = np.zeros((2 * H, 2), np.float32)
    pick[0, 0] = 1.0
    pick[H, 1] = 1.0
    return dict(rsel=jnp.asarray(rsel), csel=jnp.asarray(csel),
                summat=jnp.asarray(summat), lnavg=jnp.asarray(lnavg),
                pick=jnp.asarray(pick))


# ---------------------------------------------------------------------------
# Deterministic parameter init (shapes follow the torch __init__)
# ---------------------------------------------------------------------------
def init_params(key):
    shapes = {
        "re_table0": (H, 2 * H + A), "ee_table0": (H, 2 * H + A),
        "re_table1": (H, 2 * H + A), "ee_table1": (H, 2 * H + A),
        "re_table2": (H, 2 * H + A), "ee_table2": (H, 2 * H + A),
        "re_seq1": (H, 2 * H), "ee_seq1": (H, 2 * H),
        "re_seq2": (H, 2 * H), "ee_seq2": (H, 2 * H),
        "re_bin1": (H1, H), "ee_bin1": (H1, H),
        "re_bin2": (1, H1), "ee_bin2": (1, H1),
        "re_bin3": (H1, H), "ee_bin3": (H1, H),
        "re_bin4": (1, H1), "ee_bin4": (1, H1),
        "entity_out1": (H2, H), "relation_out1": (H2, H),
        "trigger_out1": (H2, H), "argument_out1": (H2, H),
        "entity_out2": (ENTITY, H2), "relation_out2": (RELATION, H2),
        "trigger_out2": (EVENT, H2), "argument_out2": (ROLE, H2),
    }
    names = sorted(shapes)
    keys = jax.random.split(key, len(names))
    params = {}
    for kk, name in zip(keys, names):
        kw, kb = jax.random.split(kk)
        out_d, in_d = shapes[name]
        params[name] = {
            "w": 0.05 * jax.random.normal(kw, (out_d, in_d), jnp.float32),
            "b": 0.05 * jax.random.normal(kb, (out_d,), jnp.float32),
        }
    for name in ("norm1", "norm2", "norm3", "norm4"):
        params[name] = {"g": jnp.ones((H,), jnp.float32),
                        "b": jnp.zeros((H,), jnp.float32)}
    return params


# ---------------------------------------------------------------------------
if __name__ == "__main__":
    root = jax.random.PRNGKey(0)
    k_par, k_ids, k_seq, k_attn, k_t1a, k_t1b, k_t2a, k_t2b = jax.random.split(root, 8)

    params = init_params(k_par)
    prep = prepare_params(params)
    consts = make_constants()

    # Inputs of the torch forward (only consumed by the synthesized BERT stand-in).
    input_ids = jax.random.randint(k_ids, (B, S), 0, 100, dtype=jnp.int32)
    input_mask = jnp.ones((B, S), jnp.int32)

    # TODO(synk): self.bert (the wrapped BERT encoder) has no clean Pallas
    # equivalent here; its outputs (last hidden state + per-layer attention
    # probabilities) are synthesized deterministically instead.
    sequence_output = jax.random.normal(k_seq, (B, S, H), jnp.float32)
    attentions = jax.nn.softmax(
        jax.random.normal(k_attn, (LAYERS, B, HEADS, S, S), jnp.float32), axis=-1)
    # z = stack(attentions).permute(1,3,4,0,2).flatten(3,4)  ->  (B, S, S, L*heads)
    z = jnp.transpose(attentions, (1, 3, 4, 0, 2)).reshape(B, S, S, LAYERS * HEADS)

    max_lab1 = min(ENTITY, RELATION)
    max_lab2 = min(EVENT, ROLE)
    # TODO(synk): all samples share the same table size N here; ragged per-sample
    # n would need padding + per-sample masking before batching.
    tables1 = jnp.stack(
        [jax.random.randint(k_t1a, (N, N), 0, max_lab1, dtype=jnp.int32),
         jax.random.randint(k_t1b, (N, N), 0, max_lab1, dtype=jnp.int32)])
    tables2 = jnp.stack(
        [jax.random.randint(k_t2a, (N, N), 0, max_lab2, dtype=jnp.int32),
         jax.random.randint(k_t2b, (N, N), 0, max_lab2, dtype=jnp.int32)])

    total_loss, res1, res2 = table_forward(prep, consts, sequence_output, z,
                                           tables1, tables2)
    jax.block_until_ready((total_loss, res1, res2))

    # Single device->host transfer for all per-sample results.
    res1_np = np.asarray(res1)
    res2_np = np.asarray(res2)
    results = [(res1_np[k], res2_np[k]) for k in range(B)]

    assert np.isfinite(float(total_loss))
    assert len(results) == B and results[0][0].shape == (N, N)
    print("KERNEL_OK")
</pallas_src>

<mosaic_0001>
module attributes {stable_mosaic.version = 11 : i64} {
  func.func @_fused_table_kernel(%arg0: memref<14x64xf32, #tpu.memory_space<vmem>>, %arg1: memref<98x8xf32, #tpu.memory_space<vmem>>, %arg2: memref<98x14xf32, #tpu.memory_space<vmem>>, %arg3: memref<98x14xf32, #tpu.memory_space<vmem>>, %arg4: memref<14x98xf32, #tpu.memory_space<vmem>>, %arg5: memref<64x64xf32, #tpu.memory_space<vmem>>, %arg6: memref<64x2xf32, #tpu.memory_space<vmem>>, %arg7: memref<3x64x64xf32, #tpu.memory_space<vmem>>, %arg8: memref<3x64x64xf32, #tpu.memory_space<vmem>>, %arg9: memref<3x8x64xf32, #tpu.memory_space<vmem>>, %arg10: memref<3x1x64xf32, #tpu.memory_space<vmem>>, %arg11: memref<2x64x32xf32, #tpu.memory_space<vmem>>, %arg12: memref<2x1x32xf32, #tpu.memory_space<vmem>>, %arg13: memref<2x32x64xf32, #tpu.memory_space<vmem>>, %arg14: memref<2x1x64xf32, #tpu.memory_space<vmem>>, %arg15: memref<2x1x64xf32, #tpu.memory_space<vmem>>, %arg16: memref<2x1x64xf32, #tpu.memory_space<vmem>>, %arg17: memref<2x64x64xf32, #tpu.memory_space<vmem>>, %arg18: memref<2x64x64xf32, #tpu.memory_space<vmem>>, %arg19: memref<2x1x64xf32, #tpu.memory_space<vmem>>, %arg20: memref<64x64xf32, #tpu.memory_space<vmem>>, %arg21: memref<1x64xf32, #tpu.memory_space<vmem>>, %arg22: memref<64x22xf32, #tpu.memory_space<vmem>>, %arg23: memref<1x22xf32, #tpu.memory_space<vmem>>, %arg24: memref<98x26xf32, #tpu.memory_space<vmem>>) attributes {dimension_semantics = [], scalar_prefetch = 0 : i64, scratch_operands = 0 : i64, tpu.core_type = #tpu.core_type<tc>} {
    %c0 = arith.constant 0 : index
    %c0_0 = arith.constant 0 : index
    %0 = vector.load %arg0[%c0, %c0_0] : memref<14x64xf32, #tpu.memory_space<vmem>>, vector<14x64xf32>
    %c0_1 = arith.constant 0 : index
    %c0_2 = arith.constant 0 : index
    %1 = vector.load %arg1[%c0_1, %c0_2] : memref<98x8xf32, #tpu.memory_space<vmem>>, vector<98x8xf32>
    %c0_3 = arith.constant 0 : index
    %c0_4 = arith.constant 0 : index
    %2 = vector.load %arg2[%c0_3, %c0_4] : memref<98x14xf32, #tpu.memory_space<vmem>>, vector<98x14xf32>
    %c0_5 = arith.constant 0 : index
    %c0_6 = arith.constant 0 : index
    %3 = vector.load %arg3[%c0_5, %c0_6] : memref<98x14xf32, #tpu.memory_space<vmem>>, vector<98x14xf32>
    %c0_7 = arith.constant 0 : index
    %c0_8 = arith.constant 0 : index
    %4 = vector.load %arg4[%c0_7, %c0_8] : memref<14x98xf32, #tpu.memory_space<vmem>>, vector<14x98xf32>
    %c0_9 = arith.constant 0 : index
    %c0_10 = arith.constant 0 : index
    %5 = vector.load %arg5[%c0_9, %c0_10] : memref<64x64xf32, #tpu.memory_space<vmem>>, vector<64x64xf32>
    %c0_11 = arith.constant 0 : index
    %c0_12 = arith.constant 0 : index
    %6 = vector.load %arg6[%c0_11, %c0_12] : memref<64x2xf32, #tpu.memory_space<vmem>>, vector<64x2xf32>
    %c0_13 = arith.constant 0 : index
    %c0_14 = arith.constant 0 : index
    %c0_15 = arith.constant 0 : index
    %7 = vector.load %arg7[%c0_13, %c0_14, %c0_15] : memref<3x64x64xf32, #tpu.memory_space<vmem>>, vector<1x64x64xf32>
    %8 = vector.shape_cast %7 : vector<1x64x64xf32> to vector<64x64xf32>
    %cst = arith.constant dense<0.000000e+00> : vector<14x64xf32>
    %9 = tpu.matmul %0, %8, %cst {dimension_numbers = #tpu.dot_dimension_numbers<[1], [0], [0], [1], [0, 0, 1, 1], [], []>} : vector<14x64xf32>, vector<64x64xf32>, vector<14x64xf32> -> vector<14x64xf32>
    %c0_16 = arith.constant 0 : index
    %c0_17 = arith.constant 0 : index
    %c0_18 = arith.constant 0 : index
    %10 = vector.load %arg8[%c0_16, %c0_17, %c0_18] : memref<3x64x64xf32, #tpu.memory_space<vmem>>, vector<1x64x64xf32>
    %11 = vector.shape_cast %10 : vector<1x64x64xf32> to vector<64x64xf32>
    %cst_19 = arith.constant dense<0.000000e+00> : vector<14x64xf32>
    %12 = tpu.matmul %0, %11, %cst_19 {dimension_numbers = #tpu.dot_dimension_numbers<[1], [0], [0], [1], [0, 0, 1, 1], [], []>} : vector<14x64xf32>, vector<64x64xf32>, vector<14x64xf32> -> vector<14x64xf32>
    %c0_20 = arith.constant 0 : index
    %c0_21 = arith.constant 0 : index
    %c0_22 = arith.constant 0 : index
    %13 = vector.load %arg9[%c0_20, %c0_21, %c0_22] : memref<3x8x64xf32, #tpu.memory_space<vmem>>, vector<1x8x64xf32>
    %14 = vector.shape_cast %13 : vector<1x8x64xf32> to vector<8x64xf32>
    %cst_23 = arith.constant dense<0.000000e+00> : vector<98x64xf32>
    %15 = tpu.matmul %1, %14, %cst_23 {dimension_numbers = #tpu.dot_dimension_numbers<[1], [0], [0], [1], [0, 0, 1, 1], [], []>} : vector<98x8xf32>, vector<8x64xf32>, vector<98x64xf32> -> vector<98x64xf32>
    %cst_24 = arith.constant dense<0.000000e+00> : vector<98x64xf32>
    %16 = tpu.matmul %2, %9, %cst_24 {dimension_numbers = #tpu.dot_dimension_numbers<[1], [0], [0], [1], [0, 0, 1, 1], [], []>} : vector<98x14xf32>, vector<14x64xf32>, vector<98x64xf32> -> vector<98x64xf32>
    %cst_25 = arith.constant dense<0.000000e+00> : vector<98x64xf32>
    %17 = tpu.matmul %3, %12, %cst_25 {dimension_numbers = #tpu.dot_dimension_numbers<[1], [0], [0], [1], [0, 0, 1, 1], [], []>} : vector<98x14xf32>, vector<14x64xf32>, vector<98x64xf32> -> vector<98x64xf32>
    %18 = arith.addf %16, %17 : vector<98x64xf32>
    %19 = arith.addf %15, %18 : vector<98x64xf32>
    %c0_26 = arith.constant 0 : index
    %c0_27 = arith.constant 0 : index
    %c0_28 = arith.constant 0 : index
    %20 = vector.load %arg10[%c0_26, %c0_27, %c0_28] : memref<3x1x64xf32, #tpu.memory_space<vmem>>, vector<1x1x64xf32>
    %21 = vector.shape_cast %20 : vector<1x1x64xf32> to vector<1x64xf32>
    %22 = vector.broadcast %21 : vector<1x64xf32> to vector<98x64xf32>
    %23 = arith.addf %19, %22 : vector<98x64xf32>
    %24 = arith.mulf %23, %23 : vector<98x64xf32>
    %25 = arith.mulf %23, %24 : vector<98x64xf32>
    %cst_29 = arith.constant 4.471500e-02 : f32
    %26 = vector.broadcast %cst_29 : f32 to vector<98x64xf32>
    %27 = arith.mulf %26, %25 : vector<98x64xf32>
    %28 = arith.addf %23, %27 : vector<98x64xf32>
    %cst_30 = arith.constant 0.797884583 : f32
    %29 = vector.broadcast %cst_30 : f32 to vector<98x64xf32>
    %30 = arith.mulf %29, %28 : vector<98x64xf32>
    %31 = math.tanh %30 : vector<98x64xf32>
    %cst_31 = arith.constant 1.000000e+00 : f32
    %32 = vector.broadcast %cst_31 : f32 to vector<98x64xf32>
    %33 = arith.addf %32, %31 : vector<98x64xf32>
    %cst_32 = arith.constant 5.000000e-01 : f32
    %34 = vector.broadcast %cst_32 : f32 to vector<98x64xf32>
    %35 = arith.mulf %34, %33 : vector<98x64xf32>
    %36 = arith.mulf %23, %35 : vector<98x64xf32>
    %c0_33 = arith.constant 0 : index
    %c0_34 = arith.constant 0 : index
    %c0_35 = arith.constant 0 : index
    %37 = vector.load %arg11[%c0_33, %c0_34, %c0_35] : memref<2x64x32xf32, #tpu.memory_space<vmem>>, vector<1x64x32xf32>
    %38 = vector.shape_cast %37 : vector<1x64x32xf32> to vector<64x32xf32>
    %cst_36 = arith.constant dense<0.000000e+00> : vector<98x32xf32>
    %39 = tpu.matmul %36, %38, %cst_36 {dimension_numbers = #tpu.dot_dimension_numbers<[1], [0], [0], [1], [0, 0, 1, 1], [], []>} : vector<98x64xf32>, vector<64x32xf32>, vector<98x32xf32> -> vector<98x32xf32>
    %c0_37 = arith.constant 0 : index
    %c0_38 = arith.constant 0 : index
    %c0_39 = arith.constant 0 : index
    %40 = vector.load %arg12[%c0_37, %c0_38, %c0_39] : memref<2x1x32xf32, #tpu.memory_space<vmem>>, vector<1x1x32xf32>
    %41 = vector.shape_cast %40 : vector<1x1x32xf32> to vector<1x32xf32>
    %42 = vector.broadcast %41 : vector<1x32xf32> to vector<98x32xf32>
    %43 = arith.addf %39, %42 : vector<98x32xf32>
    %44 = arith.mulf %43, %43 : vector<98x32xf32>
    %45 = arith.mulf %43, %44 : vector<98x32xf32>
    %cst_40 = arith.constant 4.471500e-02 : f32
    %46 = vector.broadcast %cst_40 : f32 to vector<98x32xf32>
    %47 = arith.mulf %46, %45 : vector<98x32xf32>
    %48 = arith.addf %43, %47 : vector<98x32xf32>
    %cst_41 = arith.constant 0.797884583 : f32
    %49 = vector.broadcast %cst_41 : f32 to vector<98x32xf32>
    %50 = arith.mulf %49, %48 : vector<98x32xf32>
    %51 = math.tanh %50 : vector<98x32xf32>
    %cst_42 = arith.constant 1.000000e+00 : f32
    %52 = vector.broadcast %cst_42 : f32 to vector<98x32xf32>
    %53 = arith.addf %52, %51 : vector<98x32xf32>
    %cst_43 = arith.constant 5.000000e-01 : f32
    %54 = vector.broadcast %cst_43 : f32 to vector<98x32xf32>
    %55 = arith.mulf %54, %53 : vector<98x32xf32>
    %56 = arith.mulf %43, %55 : vector<98x32xf32>
    %c0_44 = arith.constant 0 : index
    %c0_45 = arith.constant 0 : index
    %c0_46 = arith.constant 0 : index
    %57 = vector.load %arg13[%c0_44, %c0_45, %c0_46] : memref<2x32x64xf32, #tpu.memory_space<vmem>>, vector<1x32x64xf32>
    %58 = vector.shape_cast %57 : vector<1x32x64xf32> to vector<32x64xf32>
    %cst_47 = arith.constant dense<0.000000e+00> : vector<98x64xf32>
    %59 = tpu.matmul %56, %58, %cst_47 {dimension_numbers = #tpu.dot_dimension_numbers<[1], [0], [0], [1], [0, 0, 1, 1], [], []>} : vector<98x32xf32>, vector<32x64xf32>, vector<98x64xf32> -> vector<98x64xf32>
    %c0_48 = arith.constant 0 : index
    %c0_49 = arith.constant 0 : index
    %c0_50 = arith.constant 0 : index
    %60 = vector.load %arg14[%c0_48, %c0_49, %c0_50] : memref<2x1x64xf32, #tpu.memory_space<vmem>>, vector<1x1x64xf32>
    %61 = vector.shape_cast %60 : vector<1x1x64xf32> to vector<1x64xf32>
    %62 = vector.broadcast %61 : vector<1x64xf32> to vector<98x64xf32>
    %63 = arith.addf %59, %62 : vector<98x64xf32>
    %cst_51 = arith.constant dense<0.000000e+00> : vector<98x2xf32>
    %64 = tpu.matmul %63, %6, %cst_51 {dimension_numbers = #tpu.dot_dimension_numbers<[1], [0], [0], [1], [0, 0, 1, 1], [], []>} : vector<98x64xf32>, vector<64x2xf32>, vector<98x2xf32> -> vector<98x2xf32>
    %65 = arith.negf %63 : vector<98x64xf32>
    %66 = math.exp %65 : vector<98x64xf32>
    %cst_52 = arith.constant 1.000000e+00 : f32
    %67 = vector.broadcast %cst_52 : f32 to vector<98x64xf32>
    %68 = arith.addf %67, %66 : vector<98x64xf32>
    %69 = arith.divf %67, %68 : vector<98x64xf32>
    %70 = arith.mulf %36, %69 : vector<98x64xf32>
    %cst_53 = arith.constant dense<0.000000e+00> : vector<14x64xf32>
    %71 = tpu.matmul %4, %70, %cst_53 {dimension_numbers = #tpu.dot_dimension_numbers<[1], [0], [0], [1], [0, 0, 1, 1], [], []>} : vector<14x98xf32>, vector<98x64xf32>, vector<14x64xf32> -> vector<14x64xf32>
    %cst_54 = arith.constant dense<0.000000e+00> : vector<14x64xf32>
    %72 = tpu.matmul %71, %5, %cst_54 {dimension_numbers = #tpu.dot_dimension_numbers<[1], [0], [0], [1], [0, 0, 1, 1], [], []>} : vector<14x64xf32>, vector<64x64xf32>, vector<14x64xf32> -> vector<14x64xf32>
    %73 = arith.subf %71, %72 : vector<14x64xf32>
    %74 = arith.mulf %73, %73 : vector<14x64xf32>
    %cst_55 = arith.constant dense<0.000000e+00> : vector<14x64xf32>
    %75 = tpu.matmul %74, %5, %cst_55 {dimension_numbers = #tpu.dot_dimension_numbers<[1], [0], [0], [1], [0, 0, 1, 1], [], []>} : vector<14x64xf32>, vector<64x64xf32>, vector<14x64xf32> -> vector<14x64xf32>
    %cst_56 = arith.constant 9.99999974E-6 : f32
    %76 = vector.broadcast %cst_56 : f32 to vector<14x64xf32>
    %77 = arith.addf %75, %76 : vector<14x64xf32>
    %78 = math.rsqrt %77 : vector<14x64xf32>
    %79 = arith.mulf %73, %78 : vector<14x64xf32>
    %c0_57 = arith.constant 0 : index
    %c0_58 = arith.constant 0 : index
    %c0_59 = arith.constant 0 : index
    %80 = vector.load %arg15[%c0_57, %c0_58, %c0_59] : memref<2x1x64xf32, #tpu.memory_space<vmem>>, vector<1x1x64xf32>
    %81 = vector.shape_cast %80 : vector<1x1x64xf32> to vector<1x64xf32>
    %82 = vector.broadcast %81 : vector<1x64xf32> to vector<14x64xf32>
    %83 = arith.mulf %79, %82 : vector<14x64xf32>
    %c0_60 = arith.constant 0 : index
    %c0_61 = arith.constant 0 : index
    %c0_62 = arith.constant 0 : index
    %84 = vector.load %arg16[%c0_60, %c0_61, %c0_62] : memref<2x1x64xf32, #tpu.memory_space<vmem>>, vector<1x1x64xf32>
    %85 = vector.shape_cast %84 : vector<1x1x64xf32> to vector<1x64xf32>
    %86 = vector.broadcast %85 : vector<1x64xf32> to vector<14x64xf32>
    %87 = arith.addf %83, %86 : vector<14x64xf32>
    %c0_63 = arith.constant 0 : index
    %c0_64 = arith.constant 0 : index
    %c0_65 = arith.constant 0 : index
    %88 = vector.load %arg17[%c0_63, %c0_64, %c0_65] : memref<2x64x64xf32, #tpu.memory_space<vmem>>, vector<1x64x64xf32>
    %89 = vector.shape_cast %88 : vector<1x64x64xf32> to vector<64x64xf32>
    %cst_66 = arith.constant dense<0.000000e+00> : vector<14x64xf32>
    %90 = tpu.matmul %0, %89, %cst_66 {dimension_numbers = #tpu.dot_dimension_numbers<[1], [0], [0], [1], [0, 0, 1, 1], [], []>} : vector<14x64xf32>, vector<64x64xf32>, vector<14x64xf32> -> vector<14x64xf32>
    %c0_67 = arith.constant 0 : index
    %c0_68 = arith.constant 0 : index
    %c0_69 = arith.constant 0 : index
    %91 = vector.load %arg18[%c0_67, %c0_68, %c0_69] : memref<2x64x64xf32, #tpu.memory_space<vmem>>, vector<1x64x64xf32>
    %92 = vector.shape_cast %91 : vector<1x64x64xf32> to vector<64x64xf32>
    %cst_70 = arith.constant dense<0.000000e+00> : vector<14x64xf32>
    %93 = tpu.matmul %87, %92, %cst_70 {dimension_numbers = #tpu.dot_dimension_numbers<[1], [0], [0], [1], [0, 0, 1, 1], [], []>} : vector<14x64xf32>, vector<64x64xf32>, vector<14x64xf32> -> vector<14x64xf32>
    %94 = arith.addf %90, %93 : vector<14x64xf32>
    %c0_71 = arith.constant 0 : index
    %c0_72 = arith.constant 0 : index
    %c0_73 = arith.constant 0 : index
    %95 = vector.load %arg19[%c0_71, %c0_72, %c0_73] : memref<2x1x64xf32, #tpu.memory_space<vmem>>, vector<1x1x64xf32>
    %96 = vector.shape_cast %95 : vector<1x1x64xf32> to vector<1x64xf32>
    %97 = vector.broadcast %96 : vector<1x64xf32> to vector<14x64xf32>
    %98 = arith.addf %94, %97 : vector<14x64xf32>
    %99 = arith.mulf %98, %98 : vector<14x64xf32>
    %100 = arith.mulf %98, %99 : vector<14x64xf32>
    %cst_74 = arith.constant 4.471500e-02 : f32
    %101 = vector.broadcast %cst_74 : f32 to vector<14x64xf32>
    %102 = arith.mulf %101, %100 : vector<14x64xf32>
    %103 = arith.addf %98, %102 : vector<14x64xf32>
    %cst_75 = arith.constant 0.797884583 : f32
    %104 = vector.broadcast %cst_75 : f32 to vector<14x64xf32>
    %105 = arith.mulf %104, %103 : vector<14x64xf32>
    %106 = math.tanh %105 : vector<14x64xf32>
    %cst_76 = arith.constant 1.000000e+00 : f32
    %107 = vector.broadcast %cst_76 : f32 to vector<14x64xf32>
    %108 = arith.addf %107, %106 : vector<14x64xf32>
    %cst_77 = arith.constant 5.000000e-01 : f32
    %109 = vector.broadcast %cst_77 : f32 to vector<14x64xf32>
    %110 = arith.mulf %109, %108 : vector<14x64xf32>
    %111 = arith.mulf %98, %110 : vector<14x64xf32>
    %c1 = arith.constant 1 : index
    %c0_78 = arith.constant 0 : index
    %c0_79 = arith.constant 0 : index
    %112 = vector.load %arg7[%c1, %c0_78, %c0_79] : memref<3x64x64xf32, #tpu.memory_space<vmem>>, vector<1x64x64xf32>
    %113 = vector.shape_cast %112 : vector<1x64x64xf32> to vector<64x64xf32>
    %cst_80 = arith.constant dense<0.000000e+00> : vector<14x64xf32>
    %114 = tpu.matmul %111, %113, %cst_80 {dimension_numbers = #tpu.dot_dimension_numbers<[1], [0], [0], [1], [0, 0, 1, 1], [], []>} : vector<14x64xf32>, vector<64x64xf32>, vector<14x64xf32> -> vector<14x64xf32>
    %c1_81 = arith.constant 1 : index
    %c0_82 = arith.constant 0 : index
    %c0_83 = arith.constant 0 : index
    %115 = vector.load %arg8[%c1_81, %c0_82, %c0_83] : memref<3x64x64xf32, #tpu.memory_space<vmem>>, vector<1x64x64xf32>
    %116 = vector.shape_cast %115 : vector<1x64x64xf32> to vector<64x64xf32>
    %cst_84 = arith.constant dense<0.000000e+00> : vector<14x64xf32>
    %117 = tpu.matmul %111, %116, %cst_84 {dimension_numbers = #tpu.dot_dimension_numbers<[1], [0], [0], [1], [0, 0, 1, 1], [], []>} : vector<14x64xf32>, vector<64x64xf32>, vector<14x64xf32> -> vector<14x64xf32>
    %c1_85 = arith.constant 1 : index
    %c0_86 = arith.constant 0 : index
    %c0_87 = arith.constant 0 : index
    %118 = vector.load %arg9[%c1_85, %c0_86, %c0_87] : memref<3x8x64xf32, #tpu.memory_space<vmem>>, vector<1x8x64xf32>
    %119 = vector.shape_cast %118 : vector<1x8x64xf32> to vector<8x64xf32>
    %cst_88 = arith.constant dense<0.000000e+00> : vector<98x64xf32>
    %120 = tpu.matmul %1, %119, %cst_88 {dimension_numbers = #tpu.dot_dimension_numbers<[1], [0], [0], [1], [0, 0, 1, 1], [], []>} : vector<98x8xf32>, vector<8x64xf32>, vector<98x64xf32> -> vector<98x64xf32>
    %cst_89 = arith.constant dense<0.000000e+00> : vector<98x64xf32>
    %121 = tpu.matmul %2, %114, %cst_89 {dimension_numbers = #tpu.dot_dimension_numbers<[1], [0], [0], [1], [0, 0, 1, 1], [], []>} : vector<98x14xf32>, vector<14x64xf32>, vector<98x64xf32> -> vector<98x64xf32>
    %cst_90 = arith.constant dense<0.000000e+00> : vector<98x64xf32>
    %122 = tpu.matmul %3, %117, %cst_90 {dimension_numbers = #tpu.dot_dimension_numbers<[1], [0], [0], [1], [0, 0, 1, 1], [], []>} : vector<98x14xf32>, vector<14x64xf32>, vector<98x64xf32> -> vector<98x64xf32>
    %123 = arith.addf %121, %122 : vector<98x64xf32>
    %124 = arith.addf %120, %123 : vector<98x64xf32>
    %c1_91 = arith.constant 1 : index
    %c0_92 = arith.constant 0 : index
    %c0_93 = arith.constant 0 : index
    %125 = vector.load %arg10[%c1_91, %c0_92, %c0_93] : memref<3x1x64xf32, #tpu.memory_space<vmem>>, vector<1x1x64xf32>
    %126 = vector.shape_cast %125 : vector<1x1x64xf32> to vector<1x64xf32>
    %127 = vector.broadcast %126 : vector<1x64xf32> to vector<98x64xf32>
    %128 = arith.addf %124, %127 : vector<98x64xf32>
    %129 = arith.mulf %128, %128 : vector<98x64xf32>
    %130 = arith.mulf %128, %129 : vector<98x64xf32>
    %cst_94 = arith.constant 4.471500e-02 : f32
    %131 = vector.broadcast %cst_94 : f32 to vector<98x64xf32>
    %132 = arith.mulf %131, %130 : vector<98x64xf32>
    %133 = arith.addf %128, %132 : vector<98x64xf32>
    %cst_95 = arith.constant 0.797884583 : f32
    %134 = vector.broadcast %cst_95 : f32 to vector<98x64xf32>
    %135 = arith.mulf %134, %133 : vector<98x64xf32>
    %136 = math.tanh %135 : vector<98x64xf32>
    %cst_96 = arith.constant 1.000000e+00 : f32
    %137 = vector.broadcast %cst_96 : f32 to vector<98x64xf32>
    %138 = arith.addf %137, %136 : vector<98x64xf32>
    %cst_97 = arith.constant 5.000000e-01 : f32
    %139 = vector.broadcast %cst_97 : f32 to vector<98x64xf32>
    %140 = arith.mulf %139, %138 : vector<98x64xf32>
    %141 = arith.mulf %128, %140 : vector<98x64xf32>
    %c1_98 = arith.constant 1 : index
    %c0_99 = arith.constant 0 : index
    %c0_100 = arith.constant 0 : index
    %142 = vector.load %arg11[%c1_98, %c0_99, %c0_100] : memref<2x64x32xf32, #tpu.memory_space<vmem>>, vector<1x64x32xf32>
    %143 = vector.shape_cast %142 : vector<1x64x32xf32> to vector<64x32xf32>
    %cst_101 = arith.constant dense<0.000000e+00> : vector<98x32xf32>
    %144 = tpu.matmul %141, %143, %cst_101 {dimension_numbers = #tpu.dot_dimension_numbers<[1], [0], [0], [1], [0, 0, 1, 1], [], []>} : vector<98x64xf32>, vector<64x32xf32>, vector<98x32xf32> -> vector<98x32xf32>
    %c1_102 = arith.constant 1 : index
    %c0_103 = arith.constant 0 : index
    %c0_104 = arith.constant 0 : index
    %145 = vector.load %arg12[%c1_102, %c0_103, %c0_104] : memref<2x1x32xf32, #tpu.memory_space<vmem>>, vector<1x1x32xf32>
    %146 = vector.shape_cast %145 : vector<1x1x32xf32> to vector<1x32xf32>
    %147 = vector.broadcast %146 : vector<1x32xf32> to vector<98x32xf32>
    %148 = arith.addf %144, %147 : vector<98x32xf32>
    %149 = arith.mulf %148, %148 : vector<98x32xf32>
    %150 = arith.mulf %148, %149 : vector<98x32xf32>
    %cst_105 = arith.constant 4.471500e-02 : f32
    %151 = vector.broadcast %cst_105 : f32 to vector<98x32xf32>
    %152 = arith.mulf %151, %150 : vector<98x32xf32>
    %153 = arith.addf %148, %152 : vector<98x32xf32>
    %cst_106 = arith.constant 0.797884583 : f32
    %154 = vector.broadcast %cst_106 : f32 to vector<98x32xf32>
    %155 = arith.mulf %154, %153 : vector<98x32xf32>
    %156 = math.tanh %155 : vector<98x32xf32>
    %cst_107 = arith.constant 1.000000e+00 : f32
    %157 = vector.broadcast %cst_107 : f32 to vector<98x32xf32>
    %158 = arith.addf %157, %156 : vector<98x32xf32>
    %cst_108 = arith.constant 5.000000e-01 : f32
    %159 = vector.broadcast %cst_108 : f32 to vector<98x32xf32>
    %160 = arith.mulf %159, %158 : vector<98x32xf32>
    %161 = arith.mulf %148, %160 : vector<98x32xf32>
    %c1_109 = arith.constant 1 : index
    %c0_110 = arith.constant 0 : index
    %c0_111 = arith.constant 0 : index
    %162 = vector.load %arg13[%c1_109, %c0_110, %c0_111] : memref<2x32x64xf32, #tpu.memory_space<vmem>>, vector<1x32x64xf32>
    %163 = vector.shape_cast %162 : vector<1x32x64xf32> to vector<32x64xf32>
    %cst_112 = arith.constant dense<0.000000e+00> : vector<98x64xf32>
    %164 = tpu.matmul %161, %163, %cst_112 {dimension_numbers = #tpu.dot_dimension_numbers<[1], [0], [0], [1], [0, 0, 1, 1], [], []>} : vector<98x32xf32>, vector<32x64xf32>, vector<98x64xf32> -> vector<98x64xf32>
    %c1_113 = arith.constant 1 : index
    %c0_114 = arith.constant 0 : index
    %c0_115 = arith.constant 0 : index
    %165 = vector.load %arg14[%c1_113, %c0_114, %c0_115] : memref<2x1x64xf32, #tpu.memory_space<vmem>>, vector<1x1x64xf32>
    %166 = vector.shape_cast %165 : vector<1x1x64xf32> to vector<1x64xf32>
    %167 = vector.broadcast %166 : vector<1x64xf32> to vector<98x64xf32>
    %168 = arith.addf %164, %167 : vector<98x64xf32>
    %cst_116 = arith.constant dense<0.000000e+00> : vector<98x2xf32>
    %169 = tpu.matmul %168, %6, %cst_116 {dimension_numbers = #tpu.dot_dimension_numbers<[1], [0], [0], [1], [0, 0, 1, 1], [], []>} : vector<98x64xf32>, vector<64x2xf32>, vector<98x2xf32> -> vector<98x2xf32>
    %170 = arith.negf %168 : vector<98x64xf32>
    %171 = math.exp %170 : vector<98x64xf32>
    %cst_117 = arith.constant 1.000000e+00 : f32
    %172 = vector.broadcast %cst_117 : f32 to vector<98x64xf32>
    %173 = arith.addf %172, %171 : vector<98x64xf32>
    %174 = arith.divf %172, %173 : vector<98x64xf32>
    %175 = arith.mulf %141, %174 : vector<98x64xf32>
    %cst_118 = arith.constant dense<0.000000e+00> : vector<14x64xf32>
    %176 = tpu.matmul %4, %175, %cst_118 {dimension_numbers = #tpu.dot_dimension_numbers<[1], [0], [0], [1], [0, 0, 1, 1], [], []>} : vector<14x98xf32>, vector<98x64xf32>, vector<14x64xf32> -> vector<14x64xf32>
    %cst_119 = arith.constant dense<0.000000e+00> : vector<14x64xf32>
    %177 = tpu.matmul %176, %5, %cst_119 {dimension_numbers = #tpu.dot_dimension_numbers<[1], [0], [0], [1], [0, 0, 1, 1], [], []>} : vector<14x64xf32>, vector<64x64xf32>, vector<14x64xf32> -> vector<14x64xf32>
    %178 = arith.subf %176, %177 : vector<14x64xf32>
    %179 = arith.mulf %178, %178 : vector<14x64xf32>
    %cst_120 = arith.constant dense<0.000000e+00> : vector<14x64xf32>
    %180 = tpu.matmul %179, %5, %cst_120 {dimension_numbers = #tpu.dot_dimension_numbers<[1], [0], [0], [1], [0, 0, 1, 1], [], []>} : vector<14x64xf32>, vector<64x64xf32>, vector<14x64xf32> -> vector<14x64xf32>
    %cst_121 = arith.constant 9.99999974E-6 : f32
    %181 = vector.broadcast %cst_121 : f32 to vector<14x64xf32>
    %182 = arith.addf %180, %181 : vector<14x64xf32>
    %183 = math.rsqrt %182 : vector<14x64xf32>
    %184 = arith.mulf %178, %183 : vector<14x64xf32>
    %c1_122 = arith.constant 1 : index
    %c0_123 = arith.constant 0 : index
    %c0_124 = arith.constant 0 : index
    %185 = vector.load %arg15[%c1_122, %c0_123, %c0_124] : memref<2x1x64xf32, #tpu.memory_space<vmem>>, vector<1x1x64xf32>
    %186 = vector.shape_cast %185 : vector<1x1x64xf32> to vector<1x64xf32>
    %187 = vector.broadcast %186 : vector<1x64xf32> to vector<14x64xf32>
    %188 = arith.mulf %184, %187 : vector<14x64xf32>
    %c1_125 = arith.constant 1 : index
    %c0_126 = arith.constant 0 : index
    %c0_127 = arith.constant 0 : index
    %189 = vector.load %arg16[%c1_125, %c0_126, %c0_127] : memref<2x1x64xf32, #tpu.memory_space<vmem>>, vector<1x1x64xf32>
    %190 = vector.shape_cast %189 : vector<1x1x64xf32> to vector<1x64xf32>
    %191 = vector.broadcast %190 : vector<1x64xf32> to vector<14x64xf32>
    %192 = arith.addf %188, %191 : vector<14x64xf32>
    %c1_128 = arith.constant 1 : index
    %c0_129 = arith.constant 0 : index
    %c0_130 = arith.constant 0 : index
    %193 = vector.load %arg17[%c1_128, %c0_129, %c0_130] : memref<2x64x64xf32, #tpu.memory_space<vmem>>, vector<1x64x64xf32>
    %194 = vector.shape_cast %193 : vector<1x64x64xf32> to vector<64x64xf32>
    %cst_131 = arith.constant dense<0.000000e+00> : vector<14x64xf32>
    %195 = tpu.matmul %0, %194, %cst_131 {dimension_numbers = #tpu.dot_dimension_numbers<[1], [0], [0], [1], [0, 0, 1, 1], [], []>} : vector<14x64xf32>, vector<64x64xf32>, vector<14x64xf32> -> vector<14x64xf32>
    %c1_132 = arith.constant 1 : index
    %c0_133 = arith.constant 0 : index
    %c0_134 = arith.constant 0 : index
    %196 = vector.load %arg18[%c1_132, %c0_133, %c0_134] : memref<2x64x64xf32, #tpu.memory_space<vmem>>, vector<1x64x64xf32>
    %197 = vector.shape_cast %196 : vector<1x64x64xf32> to vector<64x64xf32>
    %cst_135 = arith.constant dense<0.000000e+00> : vector<14x64xf32>
    %198 = tpu.matmul %192, %197, %cst_135 {dimension_numbers = #tpu.dot_dimension_numbers<[1], [0], [0], [1], [0, 0, 1, 1], [], []>} : vector<14x64xf32>, vector<64x64xf32>, vector<14x64xf32> -> vector<14x64xf32>
    %199 = arith.addf %195, %198 : vector<14x64xf32>
    %c1_136 = arith.constant 1 : index
    %c0_137 = arith.constant 0 : index
    %c0_138 = arith.constant 0 : index
    %200 = vector.load %arg19[%c1_136, %c0_137, %c0_138] : memref<2x1x64xf32, #tpu.memory_space<vmem>>, vector<1x1x64xf32>
    %201 = vector.shape_cast %200 : vector<1x1x64xf32> to vector<1x64xf32>
    %202 = vector.broadcast %201 : vector<1x64xf32> to vector<14x64xf32>
    %203 = arith.addf %199, %202 : vector<14x64xf32>
    %204 = arith.mulf %203, %203 : vector<14x64xf32>
    %205 = arith.mulf %203, %204 : vector<14x64xf32>
    %cst_139 = arith.constant 4.471500e-02 : f32
    %206 = vector.broadcast %cst_139 : f32 to vector<14x64xf32>
    %207 = arith.mulf %206, %205 : vector<14x64xf32>
    %208 = arith.addf %203, %207 : vector<14x64xf32>
    %cst_140 = arith.constant 0.797884583 : f32
    %209 = vector.broadcast %cst_140 : f32 to vector<14x64xf32>
    %210 = arith.mulf %209, %208 : vector<14x64xf32>
    %211 = math.tanh %210 : vector<14x64xf32>
    %cst_141 = arith.constant 1.000000e+00 : f32
    %212 = vector.broadcast %cst_141 : f32 to vector<14x64xf32>
    %213 = arith.addf %212, %211 : vector<14x64xf32>
    %cst_142 = arith.constant 5.000000e-01 : f32
    %214 = vector.broadcast %cst_142 : f32 to vector<14x64xf32>
    %215 = arith.mulf %214, %213 : vector<14x64xf32>
    %216 = arith.mulf %203, %215 : vector<14x64xf32>
    %c2 = arith.constant 2 : index
    %c0_143 = arith.constant 0 : index
    %c0_144 = arith.constant 0 : index
    %217 = vector.load %arg7[%c2, %c0_143, %c0_144] : memref<3x64x64xf32, #tpu.memory_space<vmem>>, vector<1x64x64xf32>
    %218 = vector.shape_cast %217 : vector<1x64x64xf32> to vector<64x64xf32>
    %cst_145 = arith.constant dense<0.000000e+00> : vector<14x64xf32>
    %219 = tpu.matmul %216, %218, %cst_145 {dimension_numbers = #tpu.dot_dimension_numbers<[1], [0], [0], [1], [0, 0, 1, 1], [], []>} : vector<14x64xf32>, vector<64x64xf32>, vector<14x64xf32> -> vector<14x64xf32>
    %c2_146 = arith.constant 2 : index
    %c0_147 = arith.constant 0 : index
    %c0_148 = arith.constant 0 : index
    %220 = vector.load %arg8[%c2_146, %c0_147, %c0_148] : memref<3x64x64xf32, #tpu.memory_space<vmem>>, vector<1x64x64xf32>
    %221 = vector.shape_cast %220 : vector<1x64x64xf32> to vector<64x64xf32>
    %cst_149 = arith.constant dense<0.000000e+00> : vector<14x64xf32>
    %222 = tpu.matmul %216, %221, %cst_149 {dimension_numbers = #tpu.dot_dimension_numbers<[1], [0], [0], [1], [0, 0, 1, 1], [], []>} : vector<14x64xf32>, vector<64x64xf32>, vector<14x64xf32> -> vector<14x64xf32>
    %c2_150 = arith.constant 2 : index
    %c0_151 = arith.constant 0 : index
    %c0_152 = arith.constant 0 : index
    %223 = vector.load %arg9[%c2_150, %c0_151, %c0_152] : memref<3x8x64xf32, #tpu.memory_space<vmem>>, vector<1x8x64xf32>
    %224 = vector.shape_cast %223 : vector<1x8x64xf32> to vector<8x64xf32>
    %cst_153 = arith.constant dense<0.000000e+00> : vector<98x64xf32>
    %225 = tpu.matmul %1, %224, %cst_153 {dimension_numbers = #tpu.dot_dimension_numbers<[1], [0], [0], [1], [0, 0, 1, 1], [], []>} : vector<98x8xf32>, vector<8x64xf32>, vector<98x64xf32> -> vector<98x64xf32>
    %cst_154 = arith.constant dense<0.000000e+00> : vector<98x64xf32>
    %226 = tpu.matmul %2, %219, %cst_154 {dimension_numbers = #tpu.dot_dimension_numbers<[1], [0], [0], [1], [0, 0, 1, 1], [], []>} : vector<98x14xf32>, vector<14x64xf32>, vector<98x64xf32> -> vector<98x64xf32>
    %cst_155 = arith.constant dense<0.000000e+00> : vector<98x64xf32>
    %227 = tpu.matmul %3, %222, %cst_155 {dimension_numbers = #tpu.dot_dimension_numbers<[1], [0], [0], [1], [0, 0, 1, 1], [], []>} : vector<98x14xf32>, vector<14x64xf32>, vector<98x64xf32> -> vector<98x64xf32>
    %228 = arith.addf %226, %227 : vector<98x64xf32>
    %229 = arith.addf %225, %228 : vector<98x64xf32>
    %c2_156 = arith.constant 2 : index
    %c0_157 = arith.constant 0 : index
    %c0_158 = arith.constant 0 : index
    %230 = vector.load %arg10[%c2_156, %c0_157, %c0_158] : memref<3x1x64xf32, #tpu.memory_space<vmem>>, vector<1x1x64xf32>
    %231 = vector.shape_cast %230 : vector<1x1x64xf32> to vector<1x64xf32>
    %232 = vector.broadcast %231 : vector<1x64xf32> to vector<98x64xf32>
    %233 = arith.addf %229, %232 : vector<98x64xf32>
    %234 = arith.mulf %233, %233 : vector<98x64xf32>
    %235 = arith.mulf %233, %234 : vector<98x64xf32>
    %cst_159 = arith.constant 4.471500e-02 : f32
    %236 = vector.broadcast %cst_159 : f32 to vector<98x64xf32>
    %237 = arith.mulf %236, %235 : vector<98x64xf32>
    %238 = arith.addf %233, %237 : vector<98x64xf32>
    %cst_160 = arith.constant 0.797884583 : f32
    %239 = vector.broadcast %cst_160 : f32 to vector<98x64xf32>
    %240 = arith.mulf %239, %238 : vector<98x64xf32>
    %241 = math.tanh %240 : vector<98x64xf32>
    %cst_161 = arith.constant 1.000000e+00 : f32
    %242 = vector.broadcast %cst_161 : f32 to vector<98x64xf32>
    %243 = arith.addf %242, %241 : vector<98x64xf32>
    %cst_162 = arith.constant 5.000000e-01 : f32
    %244 = vector.broadcast %cst_162 : f32 to vector<98x64xf32>
    %245 = arith.mulf %244, %243 : vector<98x64xf32>
    %246 = arith.mulf %233, %245 : vector<98x64xf32>
    %c0_163 = arith.constant 0 : index
    %c0_164 = arith.constant 0 : index
    %247 = vector.load %arg20[%c0_163, %c0_164] : memref<64x64xf32, #tpu.memory_space<vmem>>, vector<64x64xf32>
    %cst_165 = arith.constant dense<0.000000e+00> : vector<98x64xf32>
    %248 = tpu.matmul %246, %247, %cst_165 {dimension_numbers = #tpu.dot_dimension_numbers<[1], [0], [0], [1], [0, 0, 1, 1], [], []>} : vector<98x64xf32>, vector<64x64xf32>, vector<98x64xf32> -> vector<98x64xf32>
    %c0_166 = arith.constant 0 : index
    %c0_167 = arith.constant 0 : index
    %249 = vector.load %arg21[%c0_166, %c0_167] : memref<1x64xf32, #tpu.memory_space<vmem>>, vector<1x64xf32>
    %250 = vector.broadcast %249 : vector<1x64xf32> to vector<98x64xf32>
    %251 = arith.addf %248, %250 : vector<98x64xf32>
    %252 = arith.mulf %251, %251 : vector<98x64xf32>
    %253 = arith.mulf %251, %252 : vector<98x64xf32>
    %cst_168 = arith.constant 4.471500e-02 : f32
    %254 = vector.broadcast %cst_168 : f32 to vector<98x64xf32>
    %255 = arith.mulf %254, %253 : vector<98x64xf32>
    %256 = arith.addf %251, %255 : vector<98x64xf32>
    %cst_169 = arith.constant 0.797884583 : f32
    %257 = vector.broadcast %cst_169 : f32 to vector<98x64xf32>
    %258 = arith.mulf %257, %256 : vector<98x64xf32>
    %259 = math.tanh %258 : vector<98x64xf32>
    %cst_170 = arith.constant 1.000000e+00 : f32
    %260 = vector.broadcast %cst_170 : f32 to vector<98x64xf32>
    %261 = arith.addf %260, %259 : vector<98x64xf32>
    %cst_171 = arith.constant 5.000000e-01 : f32
    %262 = vector.broadcast %cst_171 : f32 to vector<98x64xf32>
    %263 = arith.mulf %262, %261 : vector<98x64xf32>
    %264 = arith.mulf %251, %263 : vector<98x64xf32>
    %c0_172 = arith.constant 0 : index
    %c0_173 = arith.constant 0 : index
    %265 = vector.load %arg22[%c0_172, %c0_173] : memref<64x22xf32, #tpu.memory_space<vmem>>, vector<64x22xf32>
    %cst_174 = arith.constant dense<0.000000e+00> : vector<98x22xf32>
    %266 = tpu.matmul %264, %265, %cst_174 {dimension_numbers = #tpu.dot_dimension_numbers<[1], [0], [0], [1], [0, 0, 1, 1], [], []>} : vector<98x64xf32>, vector<64x22xf32>, vector<98x22xf32> -> vector<98x22xf32>
    %c0_175 = arith.constant 0 : index
    %c0_176 = arith.constant 0 : index
    %267 = vector.load %arg23[%c0_175, %c0_176] : memref<1x22xf32, #tpu.memory_space<vmem>>, vector<1x22xf32>
    %268 = vector.broadcast %267 : vector<1x22xf32> to vector<98x22xf32>
    %269 = arith.addf %266, %268 : vector<98x22xf32>
    %c0_177 = arith.constant 0 : index
    %c0_178 = arith.constant 0 : index
    %270 = vector.load %arg24[%c0_177, %c0_178] : memref<98x26xf32, #tpu.memory_space<vmem>>, vector<98x22xf32>
    tpu.vector_store %arg24[%c0_177, %c0_178], %269 {strides = array<i32>} : memref<98x26xf32, #tpu.memory_space<vmem>>, vector<98x22xf32>,
    %c0_179 = arith.constant 0 : index
    %c22 = arith.constant 22 : index
    %271 = vector.load %arg24[%c0_179, %c22] : memref<98x26xf32, #tpu.memory_space<vmem>>, vector<98x2xf32>
    tpu.vector_store %arg24[%c0_179, %c22], %64 {strides = array<i32>} : memref<98x26xf32, #tpu.memory_space<vmem>>, vector<98x2xf32>,
    %c0_180 = arith.constant 0 : index
    %c24 = arith.constant 24 : index
    %272 = vector.load %arg24[%c0_180, %c24] : memref<98x26xf32, #tpu.memory_space<vmem>>, vector<98x2xf32>
    tpu.vector_store %arg24[%c0_180, %c24], %169 {strides = array<i32>} : memref<98x26xf32, #tpu.memory_space<vmem>>, vector<98x2xf32>,
    return
  }
}

</mosaic_0001>

<llo_original>
// kernel: _forward_impl.1
$region0: #{_forward_impl.1}
  #allocation0 [shape = 'u32[]', space=smem, size = 0x4, offset = 0x4, fixed_abs, tag = 'smem constant byte address 0x4 - core index']
  #allocation1 [shape = 'u32[144,128]{1,0:T(1,128)}', space=vmem, size = 0x12000, scoped, tag = 'internal scratch']
  %s0 = inlined_call_operand.vmem [shape: f32[14,64], index: 0, kind: input, shape index: {}]
  %s1 = inlined_call_operand.vmem [shape: f32[98,8], index: 1, kind: input, shape index: {}]
  %s2 = inlined_call_operand.vmem [shape: f32[98,14], index: 2, kind: input, shape index: {}]
  %s3 = inlined_call_operand.vmem [shape: f32[98,14], index: 3, kind: input, shape index: {}]
  %s4 = inlined_call_operand.vmem [shape: f32[14,98], index: 4, kind: input, shape index: {}]
  %s5 = inlined_call_operand.vmem [shape: f32[64,64], index: 5, kind: input, shape index: {}]
  %s6 = inlined_call_operand.vmem [shape: f32[64,2], index: 6, kind: input, shape index: {}]
  %s7 = inlined_call_operand.vmem [shape: f32[3,64,64], index: 7, kind: input, shape index: {}]
  %s8 = inlined_call_operand.vmem [shape: f32[3,64,64], index: 8, kind: input, shape index: {}]
  %s9 = inlined_call_operand.vmem [shape: f32[3,8,64], index: 9, kind: input, shape index: {}]
  %s10 = inlined_call_operand.vmem [shape: f32[3,1,64], index: 10, kind: input, shape index: {}]
  %s11 = inlined_call_operand.vmem [shape: f32[2,64,32], index: 11, kind: input, shape index: {}]
  %s12 = inlined_call_operand.vmem [shape: f32[2,1,32], index: 12, kind: input, shape index: {}]
  %s13 = inlined_call_operand.vmem [shape: f32[2,32,64], index: 13, kind: input, shape index: {}]
  %s14 = inlined_call_operand.vmem [shape: f32[2,1,64], index: 14, kind: input, shape index: {}]
  %s15 = inlined_call_operand.vmem [shape: f32[2,1,64], index: 15, kind: input, shape index: {}]
  %s16 = inlined_call_operand.vmem [shape: f32[2,1,64], index: 16, kind: input, shape index: {}]
  %s17 = inlined_call_operand.vmem [shape: f32[2,64,64], index: 17, kind: input, shape index: {}]
  %s18 = inlined_call_operand.vmem [shape: f32[2,64,64], index: 18, kind: input, shape index: {}]
  %s19 = inlined_call_operand.vmem [shape: f32[2,1,64], index: 19, kind: input, shape index: {}]
  %s20 = inlined_call_operand.vmem [shape: f32[64,64], index: 20, kind: input, shape index: {}]
  %s21 = inlined_call_operand.vmem [shape: f32[1,64], index: 21, kind: input, shape index: {}]
  %s22 = inlined_call_operand.vmem [shape: f32[64,22], index: 22, kind: input, shape index: {}]
  %s23 = inlined_call_operand.vmem [shape: f32[1,22], index: 23, kind: input, shape index: {}]
  %s24 = inlined_call_operand.vmem [shape: f32[98,26], index: 24, kind: output, shape index: {}]
  %s25 = sld [smem:[#allocation0]]
  $region106: #{_forward_impl.1} parent=0
    _
  %s27 = ssub.s32 1, %s25
  %s28 = scalar_select 0, %s27, %s25
  // Predicated region
  $region2: #{_forward_impl.1} parent=0 // pred_check
    _
  $region3: #{_forward_impl.1} parent=0 // pred_check_branch
    %30 = sbr.rel (0) target = $region5
  $region4: #{_forward_impl.1} parent=0 // pred_region
    _
  $region5: #{_forward_impl.1} parent=0 // pred_fallthru
    _
  // Predicated region
  $region6: #{_forward_impl.1} parent=0 // pred_check
    _
  $region7: #{_forward_impl.1} parent=0 // pred_check_branch
    %32 = sbr.rel (0) target = $region9
  $region8: #{_forward_impl.1} parent=0 // pred_region
    _
  $region9: #{_forward_impl.1} parent=0 // pred_fallthru
    _
  // Predicated region
  $region10: #{_forward_impl.1} parent=0 // pred_check
    _
  $region11: #{_forward_impl.1} parent=0 // pred_check_branch
    %34 = sbr.rel (0) target = $region13
  $region12: #{_forward_impl.1} parent=0 // pred_region
    _
  $region13: #{_forward_impl.1} parent=0 // pred_fallthru
    _
  // Predicated region
  $region14: #{_forward_impl.1} parent=0 // pred_check
    _
  $region15: #{_forward_impl.1} parent=0 // pred_check_branch
    %36 = sbr.rel (0) target = $region17
  $region16: #{_forward_impl.1} parent=0 // pred_region
    _
  $region17: #{_forward_impl.1} parent=0 // pred_fallthru
    _
  // Predicated region
  $region18: #{_forward_impl.1} parent=0 // pred_check
    _
  $region19: #{_forward_impl.1} parent=0 // pred_check_branch
    %38 = sbr.rel (0) target = $region21
  $region20: #{_forward_impl.1} parent=0 // pred_region
    _
  $region21: #{_forward_impl.1} parent=0 // pred_fallthru
    _
  // Predicated region
  $region22: #{_forward_impl.1} parent=0 // pred_check
    _
  $region23: #{_forward_impl.1} parent=0 // pred_check_branch
    %40 = sbr.rel (0) target = $region25
  $region24: #{_forward_impl.1} parent=0 // pred_region
    _
  $region25: #{_forward_impl.1} parent=0 // pred_fallthru
    _
  // Predicated region
  $region26: #{_forward_impl.1} parent=0 // pred_check
    _
  $region27: #{_forward_impl.1} parent=0 // pred_check_branch
    %42 = sbr.rel (0) target = $region29
  $region28: #{_forward_impl.1} parent=0 // pred_region
    _
  $region29: #{_forward_impl.1} parent=0 // pred_fallthru
    _
  // Predicated region
  $region30: #{_forward_impl.1} parent=0 // pred_check
    _
  $region31: #{_forward_impl.1} parent=0 // pred_check_branch
    %44 = sbr.rel (0) target = $region33
  $region32: #{_forward_impl.1} parent=0 // pred_region
    _
  $region33: #{_forward_impl.1} parent=0 // pred_fallthru
    _
  // Predicated region
  $region34: #{_forward_impl.1} parent=0 // pred_check
    _
  $region35: #{_forward_impl.1} parent=0 // pred_check_branch
    %46 = sbr.rel (0) target = $region37
  $region36: #{_forward_impl.1} parent=0 // pred_region
    _
  $region37: #{_forward_impl.1} parent=0 // pred_fallthru
    _
  // Predicated region
  $region38: #{_forward_impl.1} parent=0 // pred_check
    _
  $region39: #{_forward_impl.1} parent=0 // pred_check_branch
    %48 = sbr.rel (0) target = $region41
  $region40: #{_forward_impl.1} parent=0 // pred_region
    _
  $region41: #{_forward_impl.1} parent=0 // pred_fallthru
    _
  // Predicated region
  $region42: #{_forward_impl.1} parent=0 // pred_check
    _
  $region43: #{_forward_impl.1} parent=0 // pred_check_branch
    %50 = sbr.rel (0) target = $region45
  $region44: #{_forward_impl.1} parent=0 // pred_region
    _
  $region45: #{_forward_impl.1} parent=0 // pred_fallthru
    _
  // Predicated region
  $region46: #{_forward_impl.1} parent=0 // pred_check
    _
  $region47: #{_forward_impl.1} parent=0 // pred_check_branch
    %52 = sbr.rel (0) target = $region49
  $region48: #{_forward_impl.1} parent=0 // pred_region
    _
  $region49: #{_forward_impl.1} parent=0 // pred_fallthru
    _
  // Predicated region
  $region50: #{_forward_impl.1} parent=0 // pred_check
    _
  $region51: #{_forward_impl.1} parent=0 // pred_check_branch
    %54 = sbr.rel (0) target = $region53
  $region52: #{_forward_impl.1} parent=0 // pred_region
    _
  $region53: #{_forward_impl.1} parent=0 // pred_fallthru
    _
  // Predicated region
  $region54: #{_forward_impl.1} parent=0 // pred_check
    _
  $region55: #{_forward_impl.1} parent=0 // pred_check_branch
    %56 = sbr.rel (0) target = $region57
  $region56: #{_forward_impl.1} parent=0 // pred_region
    _
  $region57: #{_forward_impl.1} parent=0 // pred_fallthru
    _
  // Predicated region
  $region58: #{_forward_impl.1} parent=0 // pred_check
    _
  $region59: #{_forward_impl.1} parent=0 // pred_check_branch
    %58 = sbr.rel (0) target = $region61
  $region60: #{_forward_impl.1} parent=0 // pred_region
    _
  $region61: #{_forward_impl.1} parent=0 // pred_fallthru
    _
  // Predicated region
  $region62: #{_forward_impl.1} parent=0 // pred_check
    _
  $region63: #{_forward_impl.1} parent=0 // pred_check_branch
    %60 = sbr.rel (0) target = $region65
  $region64: #{_forward_impl.1} parent=0 // pred_region
    _
  $region65: #{_forward_impl.1} parent=0 // pred_fallthru
    _
  // Predicated region
  $region66: #{_forward_impl.1} parent=0 // pred_check
    _
  $region67: #{_forward_impl.1} parent=0 // pred_check_branch
    %62 = sbr.rel (0) target = $region69
  $region68: #{_forward_impl.1} parent=0 // pred_region
    _
  $region69: #{_forward_impl.1} parent=0 // pred_fallthru
    _
  // Predicated region
  $region70: #{_forward_impl.1} parent=0 // pred_check
    _
  $region71: #{_forward_impl.1} parent=0 // pred_check_branch
    %64 = sbr.rel (0) target = $region73
  $region72: #{_forward_impl.1} parent=0 // pred_region
    _
  $region73: #{_forward_impl.1} parent=0 // pred_fallthru
    _
  // Predicated region
  $region74: #{_forward_impl.1} parent=0 // pred_check
    _
  $region75: #{_forward_impl.1} parent=0 // pred_check_branch
    %66 = sbr.rel (0) target = $region77
  $region76: #{_forward_impl.1} parent=0 // pred_region
    _
  $region77: #{_forward_impl.1} parent=0 // pred_fallthru
    _
  // Predicated region
  $region78: #{_forward_impl.1} parent=0 // pred_check
    _
  $region79: #{_forward_impl.1} parent=0 // pred_check_branch
    %68 = sbr.rel (0) target = $region81
  $region80: #{_forward_impl.1} parent=0 // pred_region
    _
  $region81: #{_forward_impl.1} parent=0 // pred_fallthru
    _
  // Predicated region
  $region82: #{_forward_impl.1} parent=0 // pred_check
    _
  $region83: #{_forward_impl.1} parent=0 // pred_check_branch
    %70 = sbr.rel (0) target = $region85
  $region84: #{_forward_impl.1} parent=0 // pred_region
    _
  $region85: #{_forward_impl.1} parent=0 // pred_fallthru
    _
  // Predicated region
  $region86: #{_forward_impl.1} parent=0 // pred_check
    _
  $region87: #{_forward_impl.1} parent=0 // pred_check_branch
    %72 = sbr.rel (0) target = $region89
  $region88: #{_forward_impl.1} parent=0 // pred_region
    _
  $region89: #{_forward_impl.1} parent=0 // pred_fallthru
    _
  // Predicated region
  $region90: #{_forward_impl.1} parent=0 // pred_check
    _
  $region91: #{_forward_impl.1} parent=0 // pred_check_branch
    %74 = sbr.rel (0) target = $region93
  $region92: #{_forward_impl.1} parent=0 // pred_region
    _
  $region93: #{_forward_impl.1} parent=0 // pred_fallthru
    _
  // Predicated region
  $region94: #{_forward_impl.1} parent=0 // pred_check
    _
  $region95: #{_forward_impl.1} parent=0 // pred_check_branch
    %76 = sbr.rel (0) target = $region97
  $region96: #{_forward_impl.1} parent=0 // pred_region
    _
  $region97: #{_forward_impl.1} parent=0 // pred_fallthru
    _
  %v77 = vld [vmem:[%s0] sm:$0xff]
  %v78 = vld [vmem:[%s0 + $0x8] sm:$0x3f]
  %v79 = vld [vmem:[%s1] sm:$0xff]
  %v80 = vld [vmem:[%s1 + $0x8] sm:$0xff]
  %v81 = vld [vmem:[%s1 + $0x10] sm:$0xff]
  %v82 = vld [vmem:[%s1 + $0x18] sm:$0xff]
  %v83 = vld [vmem:[%s1 + $0x20] sm:$0xff]
  %v84 = vld [vmem:[%s1 + $0x28] sm:$0xff]
  %v85 = vld [vmem:[%s1 + $0x30] sm:$0xff]
  %v86 = vld [vmem:[%s1 + $0x38] sm:$0xff]
  %v87 = vld [vmem:[%s1 + $0x40] sm:$0xff]
  %v88 = vld [vmem:[%s1 + $0x48] sm:$0xff]
  %v89 = vld [vmem:[%s1 + $0x50] sm:$0xff]
  %v90 = vld [vmem:[%s1 + $0x58] sm:$0xff]
  %v91 = vld [vmem:[%s1 + $0x60] sm:$0x3]
  %v92 = vld [vmem:[%s2] sm:$0xff]
  %v93 = vld [vmem:[%s2 + $0x8] sm:$0xff]
  %v94 = vld [vmem:[%s2 + $0x10] sm:$0xff]
  %v95 = vld [vmem:[%s2 + $0x18] sm:$0xff]
  %v96 = vld [vmem:[%s2 + $0x20] sm:$0xff]
  %v97 = vld [vmem:[%s2 + $0x28] sm:$0xff]
  %v98 = vld [vmem:[%s2 + $0x30] sm:$0xff]
  %v99 = vld [vmem:[%s2 + $0x38] sm:$0xff]
  %v100 = vld [vmem:[%s2 + $0x40] sm:$0xff]
  %v101 = vld [vmem:[%s2 + $0x48] sm:$0xff]
  %v102 = vld [vmem:[%s2 + $0x50] sm:$0xff]
  %v103 = vld [vmem:[%s2 + $0x58] sm:$0xff]
  %v104 = vld [vmem:[%s2 + $0x60] sm:$0x3]
  %v105 = vld [vmem:[%s3] sm:$0xff]
  %v106 = vld [vmem:[%s3 + $0x8] sm:$0xff]
  %v107 = vld [vmem:[%s3 + $0x10] sm:$0xff]
  %v108 = vld [vmem:[%s3 + $0x18] sm:$0xff]
  %v109 = vld [vmem:[%s3 + $0x20] sm:$0xff]
  %v110 = vld [vmem:[%s3 + $0x28] sm:$0xff]
  %v111 = vld [vmem:[%s3 + $0x30] sm:$0xff]
  %v112 = vld [vmem:[%s3 + $0x38] sm:$0xff]
  %v113 = vld [vmem:[%s3 + $0x40] sm:$0xff]
  %v114 = vld [vmem:[%s3 + $0x48] sm:$0xff]
  %v115 = vld [vmem:[%s3 + $0x50] sm:$0xff]
  %v116 = vld [vmem:[%s3 + $0x58] sm:$0xff]
  %v117 = vld [vmem:[%s3 + $0x60] sm:$0x3]
  %v118 = vld [vmem:[%s4] sm:$0xff]
  %v119 = vld [vmem:[%s4 + $0x8] sm:$0x3f]
  %v120 = vld [vmem:[%s5] sm:$0xff]
  %v121 = vld [vmem:[%s5 + $0x8] sm:$0xff]
  %v122 = vld [vmem:[%s5 + $0x10] sm:$0xff]
  %v123 = vld [vmem:[%s5 + $0x18] sm:$0xff]
  %v124 = vld [vmem:[%s5 + $0x20] sm:$0xff]
  %v125 = vld [vmem:[%s5 + $0x28] sm:$0xff]
  %v126 = vld [vmem:[%s5 + $0x30] sm:$0xff]
  %v127 = vld [vmem:[%s5 + $0x38] sm:$0xff]
  %v128 = vld [vmem:[%s6] sm:$0xff]
  %v129 = vld [vmem:[%s6 + $0x8] sm:$0xff]
  %v130 = vld [vmem:[%s6 + $0x10] sm:$0xff]
  %v131 = vld [vmem:[%s6 + $0x18] sm:$0xff]
  %v132 = vld [vmem:[%s6 + $0x20] sm:$0xff]
  %v133 = vld [vmem:[%s6 + $0x28] sm:$0xff]
  %v134 = vld [vmem:[%s6 + $0x30] sm:$0xff]
  %v135 = vld [vmem:[%s6 + $0x38] sm:$0xff]
  %v136 = vld [vmem:[%s7] sm:$0xff]
  %v137 = vld [vmem:[%s7 + $0x8] sm:$0xff]
  %v138 = vld [vmem:[%s7 + $0x10] sm:$0xff]
  %v139 = vld [vmem:[%s7 + $0x18] sm:$0xff]
  %v140 = vld [vmem:[%s7 + $0x20] sm:$0xff]
  %v141 = vld [vmem:[%s7 + $0x28] sm:$0xff]
  %v142 = vld [vmem:[%s7 + $0x30] sm:$0xff]
  %v143 = vld [vmem:[%s7 + $0x38] sm:$0xff]
  %vm144 = vcmask 523264
  %v146 = vsel %vm144, %v77, 0
  %v149 = vsel %vm144, %v78, 0
  %151 = vmatprep.subr.mxu0 0.0
  %152 = vmatpush1.msra.mxu0 %v136
  %153 = vmatprep.subr.mxu0 0.0
  %154 = vmatpush1.msra.mxu0 %v137
  %155 = vmatprep.subr.mxu0 0.0
  %156 = vmatpush1.msra.mxu0 %v138
  %157 = vmatprep.subr.mxu0 0.0
  %158 = vmatpush1.msra.mxu0 %v139
  %159 = vmatprep.subr.mxu0 0.0
  %160 = vmatpush1.msra.mxu0 %v140
  %161 = vmatprep.subr.mxu0 0.0
  %162 = vmatpush1.msra.mxu0 %v141
  %163 = vmatprep.subr.mxu0 0.0
  %164 = vmatpush1.msra.mxu0 %v142
  %165 = vmatprep.subr.mxu0 0.0
  %166 = vmatpush1.msra.mxu0 %v143
  %167 = vmatprep.subr.mxu0 0.0
  %168 = vmatpush1.msra.mxu0 0.0
  %169 = vmatprep.subr.mxu0 0.0
  %170 = vmatpush1.msra.mxu0 0.0
  %171 = vmatprep.subr.mxu0 0.0
  %172 = vmatpush1.msra.mxu0 0.0
  %173 = vmatprep.subr.mxu0 0.0
  %174 = vmatpush1.msra.mxu0 0.0
  %175 = vmatprep.subr.mxu0 0.0
  %176 = vmatpush1.msra.mxu0 0.0
  %177 = vmatprep.subr.mxu0 0.0
  %178 = vmatpush1.msra.mxu0 0.0
  %179 = vmatprep.subr.mxu0 0.0
  %180 = vmatpush1.msra.mxu0 0.0
  %181 = vmatprep.subr.mxu0 0.0
  %182 = vmatpush1.msra.mxu0 0.0
  %183 = vmatprep.subr.mxu0 0.0
  %184 = vmatpush1.msra.mxu0 0.0
  %185 = vmatprep.subr.mxu0 0.0
  %186 = vmatpush1.msra.mxu0 0.0
  %187 = vmatprep.subr.mxu0 0.0
  %188 = vmatpush1.msra.mxu0 0.0
  %189 = vmatprep.subr.mxu0 0.0
  %190 = vmatpush1.msra.mxu0 0.0
  %191 = vmatprep.subr.mxu0 0.0
  %192 = vmatpush1.msra.mxu0 0.0
  %193 = vmatprep.subr.mxu0 0.0
  %194 = vmatpush1.msra.mxu0 0.0
  %195 = vmatprep.subr.mxu0 0.0
  %196 = vmatpush1.msra.mxu0 0.0
  %197 = vmatprep.subr.mxu0 0.0
  %198 = vmatpush1.msra.mxu0 0.0
  %199 = vmatprep.subr.mxu0 0.0
  %200 = vmatpush1.msra.mxu0 0.0
  %201 = vmatprep.subr.mxu0 0.0
  %202 = vmatpush1.msra.mxu0 0.0
  %203 = vmatprep.subr.mxu0 0.0
  %204 = vmatpush1.msra.mxu0 0.0
  %205 = vmatprep.subr.mxu0 0.0
  %206 = vmatpush1.msra.mxu0 0.0
  %207 = vmatprep.subr.mxu0 0.0
  %208 = vmatpush1.msra.mxu0 0.0
  %209 = vmatprep.subr.mxu0 0.0
  %210 = vmatpush1.msra.mxu0 0.0
  %211 = vmatprep.subr.mxu0 0.0
  %212 = vmatpush1.msra.mxu0 0.0
  %213 = vmatprep.subr.mxu0 0.0
  %214 = vmatpush1.msra.mxu0 0.0
  %215 = vmatprep.mubr.f32.mxu0 0.0
  %216 = vmatmul.mubr.f32.gmra.mrb[0].mxu0 %v146
  %v217 = vpop.f32.mrb[0].mxu0
  %v218 = vadd.f32 0.0, %v217
  %v219 = vpop.f32.mrb[0].mxu0
  %220 = vmatprep.mubr.f32.mxu0 0.0
  %221 = vmatmul.mubr.f32.gmra.mrb[0].mxu0 %v149
  %v222 = vpop.f32.mrb[0].mxu0
  %v223 = vadd.f32 0.0, %v222
  %v224 = vpop.f32.mrb[0].mxu0
  %225 = vdwg.mxu0
  %v226 = vld [vmem:[%s8] sm:$0xff]
  %v227 = vld [vmem:[%s8 + $0x8] sm:$0xff]
  %v228 = vld [vmem:[%s8 + $0x10] sm:$0xff]
  %v229 = vld [vmem:[%s8 + $0x18] sm:$0xff]
  %v230 = vld [vmem:[%s8 + $0x20] sm:$0xff]
  %v231 = vld [vmem:[%s8 + $0x28] sm:$0xff]
  %v232 = vld [vmem:[%s8 + $0x30] sm:$0xff]
  %v233 = vld [vmem:[%s8 + $0x38] sm:$0xff]
  %234 = vmatprep.subr.mxu0 0.0
  %235 = vmatpush1.msra.mxu0 %v226
  %236 = vmatprep.subr.mxu0 0.0
  %237 = vmatpush1.msra.mxu0 %v227
  %238 = vmatprep.subr.mxu0 0.0
  %239 = vmatpush1.msra.mxu0 %v228
  %240 = vmatprep.subr.mxu0 0.0
  %241 = vmatpush1.msra.mxu0 %v229
  %242 = vmatprep.subr.mxu0 0.0
  %243 = vmatpush1.msra.mxu0 %v230
  %244 = vmatprep.subr.mxu0 0.0
  %245 = vmatpush1.msra.mxu0 %v231
  %246 = vmatprep.subr.mxu0 0.0
  %247 = vmatpush1.msra.mxu0 %v232
  %248 = vmatprep.subr.mxu0 0.0
  %249 = vmatpush1.msra.mxu0 %v233
  %250 = vmatprep.subr.mxu0 0.0
  %251 = vmatpush1.msra.mxu0 0.0
  %252 = vmatprep.subr.mxu0 0.0
  %253 = vmatpush1.msra.mxu0 0.0
  %254 = vmatprep.subr.mxu0 0.0
  %255 = vmatpush1.msra.mxu0 0.0
  %256 = vmatprep.subr.mxu0 0.0
  %257 = vmatpush1.msra.mxu0 0.0
  %258 = vmatprep.subr.mxu0 0.0
  %259 = vmatpush1.msra.mxu0 0.0
  %260 = vmatprep.subr.mxu0 0.0
  %261 = vmatpush1.msra.mxu0 0.0
  %262 = vmatprep.subr.mxu0 0.0
  %263 = vmatpush1.msra.mxu0 0.0
  %264 = vmatprep.subr.mxu0 0.0
  %265 = vmatpush1.msra.mxu0 0.0
  %266 = vmatprep.subr.mxu0 0.0
  %267 = vmatpush1.msra.mxu0 0.0
  %268 = vmatprep.subr.mxu0 0.0
  %269 = vmatpush1.msra.mxu0 0.0
  %270 = vmatprep.subr.mxu0 0.0
  %271 = vmatpush1.msra.mxu0 0.0
  %272 = vmatprep.subr.mxu0 0.0
  %273 = vmatpush1.msra.mxu0 0.0
  %274 = vmatprep.subr.mxu0 0.0
  %275 = vmatpush1.msra.mxu0 0.0
  %276 = vmatprep.subr.mxu0 0.0
  %277 = vmatpush1.msra.mxu0 0.0
  %278 = vmatprep.subr.mxu0 0.0
  %279 = vmatpush1.msra.mxu0 0.0
  %280 = vmatprep.subr.mxu0 0.0
  %281 = vmatpush1.msra.mxu0 0.0
  %282 = vmatprep.subr.mxu0 0.0
  %283 = vmatpush1.msra.mxu0 0.0
  %284 = vmatprep.subr.mxu0 0.0
  %285 = vmatpush1.msra.mxu0 0.0
  %286 = vmatprep.subr.mxu0 0.0
  %287 = vmatpush1.msra.mxu0 0.0
  %288 = vmatprep.subr.mxu0 0.0
  %289 = vmatpush1.msra.mxu0 0.0
  %290 = vmatprep.subr.mxu0 0.0
  %291 = vmatpush1.msra.mxu0 0.0
  %292 = vmatprep.subr.mxu0 0.0
  %293 = vmatpush1.msra.mxu0 0.0
  %294 = vmatprep.subr.mxu0 0.0
  %295 = vmatpush1.msra.mxu0 0.0
  %296 = vmatprep.subr.mxu0 0.0
  %297 = vmatpush1.msra.mxu0 0.0
  %298 = vmatprep.mubr.f32.mxu0 0.0
  %299 = vmatmul.mubr.f32.gmra.mrb[0].mxu0 %v146
  %v300 = vpop.f32.mrb[0].mxu0
  %v301 = vadd.f32 0.0, %v300
  %v302 = vpop.f32.mrb[0].mxu0
  %303 = vmatprep.mubr.f32.mxu0 0.0
  %304 = vmatmul.mubr.f32.gmra.mrb[0].mxu0 %v149
  %v305 = vpop.f32.mrb[0].mxu0
  %v306 = vadd.f32 0.0, %v305
  %v307 = vpop.f32.mrb[0].mxu0
  %308 = vdwg.mxu0
  %v309 = vld [vmem:[%s9] sm:$0xff]
  %vm310 = vcmask 113664
  %v312 = vsel %vm310, %v105, 0
  %v315 = vsel %vm310, %v106, 0
  %v318 = vsel %vm310, %v107, 0
  %v321 = vsel %vm310, %v108, 0
  %v324 = vsel %vm310, %v109, 0
  %v327 = vsel %vm310, %v110, 0
  %v330 = vsel %vm310, %v111, 0
  %v333 = vsel %vm310, %v112, 0
  %v336 = vsel %vm310, %v113, 0
  %v339 = vsel %vm310, %v114, 0
  %v342 = vsel %vm310, %v115, 0
  %v345 = vsel %vm310, %v116, 0
  %v348 = vsel %vm310, %v117, 0
  %vm350 = vcmask 1045504
  %v352 = vsel %vm350, %v306, 0
  %354 = vmatprep.subr.mxu0 0.0
  %355 = vmatpush1.msra.mxu0 %v301
  %356 = vmatprep.subr.mxu0 0.0
  %357 = vmatpush1.msra.mxu0 %v352
  %358 = vmatprep.subr.mxu0 0.0
  %359 = vmatpush1.msra.mxu0 0.0
  %360 = vmatprep.subr.mxu0 0.0
  %361 = vmatpush1.msra.mxu0 0.0
  %362 = vmatprep.subr.mxu0 0.0
  %363 = vmatpush1.msra.mxu0 0.0
  %364 = vmatprep.subr.mxu0 0.0
  %365 = vmatpush1.msra.mxu0 0.0
  %366 = vmatprep.subr.mxu0 0.0
  %367 = vmatpush1.msra.mxu0 0.0
  %368 = vmatprep.subr.mxu0 0.0
  %369 = vmatpush1.msra.mxu0 0.0
  %370 = vmatprep.subr.mxu0 0.0
  %371 = vmatpush1.msra.mxu0 0.0
  %372 = vmatprep.subr.mxu0 0.0
  %373 = vmatpush1.msra.mxu0 0.0
  %374 = vmatprep.subr.mxu0 0.0
  %375 = vmatpush1.msra.mxu0 0.0
  %376 = vmatprep.subr.mxu0 0.0
  %377 = vmatpush1.msra.mxu0 0.0
  %378 = vmatprep.subr.mxu0 0.0
  %379 = vmatpush1.msra.mxu0 0.0
  %380 = vmatprep.subr.mxu0 0.0
  %381 = vmatpush1.msra.mxu0 0.0
  %382 = vmatprep.subr.mxu0 0.0
  %383 = vmatpush1.msra.mxu0 0.0
  %384 = vmatprep.subr.mxu0 0.0
  %385 = vmatpush1.msra.mxu0 0.0
  %386 = vmatprep.subr.mxu0 0.0
  %387 = vmatpush1.msra.mxu0 0.0
  %388 = vmatprep.subr.mxu0 0.0
  %389 = vmatpush1.msra.mxu0 0.0
  %390 = vmatprep.subr.mxu0 0.0
  %391 = vmatpush1.msra.mxu0 0.0
  %392 = vmatprep.subr.mxu0 0.0
  %393 = vmatpush1.msra.mxu0 0.0
  %394 = vmatprep.subr.mxu0 0.0
  %395 = vmatpush1.msra.mxu0 0.0
  %396 = vmatprep.subr.mxu0 0.0
  %397 = vmatpush1.msra.mxu0 0.0
  %398 = vmatprep.subr.mxu0 0.0
  %399 = vmatpush1.msra.mxu0 0.0
  %400 = vmatprep.subr.mxu0 0.0
  %401 = vmatpush1.msra.mxu0 0.0
  %402 = vmatprep.subr.mxu0 0.0
  %403 = vmatpush1.msra.mxu0 0.0
  %404 = vmatprep.subr.mxu0 0.0
  %405 = vmatpush1.msra.mxu0 0.0
  %406 = vmatprep.subr.mxu0 0.0
  %407 = vmatpush1.msra.mxu0 0.0
  %408 = vmatprep.subr.mxu0 0.0
  %409 = vmatpush1.msra.mxu0 0.0
  %410 = vmatprep.subr.mxu0 0.0
  %411 = vmatpush1.msra.mxu0 0.0
  %412 = vmatprep.subr.mxu0 0.0
  %413 = vmatpush1.msra.mxu0 0.0
  %414 = vmatprep.subr.mxu0 0.0
  %415 = vmatpush1.msra.mxu0 0.0
  %416 = vmatprep.subr.mxu0 0.0
  %417 = vmatpush1.msra.mxu0 0.0
  %418 = vmatprep.mubr.f32.mxu0 0.0
  %419 = vmatmul.mubr.f32.gmra.mrb[0].mxu0 %v312
  %v420 = vpop.f32.mrb[0].mxu0
  %v421 = vadd.f32 0.0, %v420
  %v422 = vpop.f32.mrb[0].mxu0
  %423 = vmatprep.mubr.f32.mxu0 0.0
  %424 = vmatmul.mubr.f32.gmra.mrb[0].mxu0 %v315
  %v425 = vpop.f32.mrb[0].mxu0
  %v426 = vadd.f32 0.0, %v425
  %v427 = vpop.f32.mrb[0].mxu0
  %428 = vmatprep.mubr.f32.mxu0 0.0
  %429 = vmatmul.mubr.f32.gmra.mrb[0].mxu0 %v318
  %v430 = vpop.f32.mrb[0].mxu0
  %v431 = vadd.f32 0.0, %v430
  %v432 = vpop.f32.mrb[0].mxu0
  %433 = vmatprep.mubr.f32.mxu0 0.0
  %434 = vmatmul.mubr.f32.gmra.mrb[0].mxu0 %v321
  %v435 = vpop.f32.mrb[0].mxu0
  %v436 = vadd.f32 0.0, %v435
  %v437 = vpop.f32.mrb[0].mxu0
  %438 = vmatprep.mubr.f32.mxu0 0.0
  %439 = vmatmul.mubr.f32.gmra.mrb[0].mxu0 %v324
  %v440 = vpop.f32.mrb[0].mxu0
  %v441 = vadd.f32 0.0, %v440
  %v442 = vpop.f32.mrb[0].mxu0
  %443 = vmatprep.mubr.f32.mxu0 0.0
  %444 = vmatmul.mubr.f32.gmra.mrb[0].mxu0 %v327
  %v445 = vpop.f32.mrb[0].mxu0
  %v446 = vadd.f32 0.0, %v445
  %v447 = vpop.f32.mrb[0].mxu0
  %448 = vmatprep.mubr.f32.mxu0 0.0
  %449 = vmatmul.mubr.f32.gmra.mrb[0].mxu0 %v330
  %v450 = vpop.f32.mrb[0].mxu0
  %v451 = vadd.f32 0.0, %v450
  %v452 = vpop.f32.mrb[0].mxu0
  %453 = vmatprep.mubr.f32.mxu0 0.0
  %454 = vmatmul.mubr.f32.gmra.mrb[0].mxu0 %v333
  %v455 = vpop.f32.mrb[0].mxu0
  %v456 = vadd.f32 0.0, %v455
  %v457 = vpop.f32.mrb[0].mxu0
  %458 = vmatprep.mubr.f32.mxu0 0.0
  %459 = vmatmul.mubr.f32.gmra.mrb[0].mxu0 %v336
  %v460 = vpop.f32.mrb[0].mxu0
  %v461 = vadd.f32 0.0, %v460
  %v462 = vpop.f32.mrb[0].mxu0
  %463 = vmatprep.mubr.f32.mxu0 0.0
  %464 = vmatmul.mubr.f32.gmra.mrb[0].mxu0 %v339
  %v465 = vpop.f32.mrb[0].mxu0
  %v466 = vadd.f32 0.0, %v465
  %v467 = vpop.f32.mrb[0].mxu0
  %468 = vmatprep.mubr.f32.mxu0 0.0
  %469 = vmatmul.mubr.f32.gmra.mrb[0].mxu0 %v342
  %v470 = vpop.f32.mrb[0].mxu0
  %v471 = vadd.f32 0.0, %v470
  %v472 = vpop.f32.mrb[0].mxu0
  %473 = vmatprep.mubr.f32.mxu0 0.0
  %474 = vmatmul.mubr.f32.gmra.mrb[0].mxu0 %v345
  %v475 = vpop.f32.mrb[0].mxu0
  %v476 = vadd.f32 0.0, %v475
  %v477 = vpop.f32.mrb[0].mxu0
  %478 = vmatprep.mubr.f32.mxu0 0.0
  %479 = vmatmul.mubr.f32.gmra.mrb[0].mxu0 %v348
  %v480 = vpop.f32.mrb[0].mxu0
  %v481 = vadd.f32 0.0, %v480
  %v482 = vpop.f32.mrb[0].mxu0
  %483 = vdwg.mxu0
  %v485 = vsel %vm310, %v92, 0
  %v488 = vsel %vm310, %v93, 0
  %v491 = vsel %vm310, %v94, 0
  %v494 = vsel %vm310, %v95, 0
  %v497 = vsel %vm310, %v96, 0
  %v500 = vsel %vm310, %v97, 0
  %v503 = vsel %vm310, %v98, 0
  %v506 = vsel %vm310, %v99, 0
  %v509 = vsel %vm310, %v100, 0
  %v512 = vsel %vm310, %v101, 0
  %v515 = vsel %vm310, %v102, 0
  %v518 = vsel %vm310, %v103, 0
  %v521 = vsel %vm310, %v104, 0
  %v524 = vsel %vm350, %v223, 0
  %526 = vmatprep.subr.mxu0 0.0
  %527 = vmatpush1.msra.mxu0 %v218
  %528 = vmatprep.subr.mxu0 0.0
  %529 = vmatpush1.msra.mxu0 %v524
  %530 = vmatprep.subr.mxu0 0.0
  %531 = vmatpush1.msra.mxu0 0.0
  %532 = vmatprep.subr.mxu0 0.0
  %533 = vmatpush1.msra.mxu0 0.0
  %534 = vmatprep.subr.mxu0 0.0
  %535 = vmatpush1.msra.mxu0 0.0
  %536 = vmatprep.subr.mxu0 0.0
  %537 = vmatpush1.msra.mxu0 0.0
  %538 = vmatprep.subr.mxu0 0.0
  %539 = vmatpush1.msra.mxu0 0.0
  %540 = vmatprep.subr.mxu0 0.0
  %541 = vmatpush1.msra.mxu0 0.0
  %542 = vmatprep.subr.mxu0 0.0
  %543 = vmatpush1.msra.mxu0 0.0
  %544 = vmatprep.subr.mxu0 0.0
  %545 = vmatpush1.msra.mxu0 0.0
  %546 = vmatprep.subr.mxu0 0.0
  %547 = vmatpush1.msra.mxu0 0.0
  %548 = vmatprep.subr.mxu0 0.0
  %549 = vmatpush1.msra.mxu0 0.0
  %550 = vmatprep.subr.mxu0 0.0
  %551 = vmatpush1.msra.mxu0 0.0
  %552 = vmatprep.subr.mxu0 0.0
  %553 = vmatpush1.msra.mxu0 0.0
  %554 = vmatprep.subr.mxu0 0.0
  %555 = vmatpush1.msra.mxu0 0.0
  %556 = vmatprep.subr.mxu0 0.0
  %557 = vmatpush1.msra.mxu0 0.0
  %558 = vmatprep.subr.mxu0 0.0
  %559 = vmatpush1.msra.mxu0 0.0
  %560 = vmatprep.subr.mxu0 0.0
  %561 = vmatpush1.msra.mxu0 0.0
  %562 = vmatprep.subr.mxu0 0.0
  %563 = vmatpush1.msra.mxu0 0.0
  %564 = vmatprep.subr.mxu0 0.0
  %565 = vmatpush1.msra.mxu0 0.0
  %566 = vmatprep.subr.mxu0 0.0
  %567 = vmatpush1.msra.mxu0 0.0
  %568 = vmatprep.subr.mxu0 0.0
  %569 = vmatpush1.msra.mxu0 0.0
  %570 = vmatprep.subr.mxu0 0.0
  %571 = vmatpush1.msra.mxu0 0.0
  %572 = vmatprep.subr.mxu0 0.0
  %573 = vmatpush1.msra.mxu0 0.0
  %574 = vmatprep.subr.mxu0 0.0
  %575 = vmatpush1.msra.mxu0 0.0
  %576 = vmatprep.subr.mxu0 0.0
  %577 = vmatpush1.msra.mxu0 0.0
  %578 = vmatprep.subr.mxu0 0.0
  %579 = vmatpush1.msra.mxu0 0.0
  %580 = vmatprep.subr.mxu0 0.0
  %581 = vmatpush1.msra.mxu0 0.0
  %582 = vmatprep.subr.mxu0 0.0
  %583 = vmatpush1.msra.mxu0 0.0
  %584 = vmatprep.subr.mxu0 0.0
  %585 = vmatpush1.msra.mxu0 0.0
  %586 = vmatprep.subr.mxu0 0.0
  %587 = vmatpush1.msra.mxu0 0.0
  %588 = vmatprep.subr.mxu0 0.0
  %589 = vmatpush1.msra.mxu0 0.0
  %590 = vmatprep.mubr.f32.mxu0 0.0
  %591 = vmatmul.mubr.f32.gmra.mrb[0].mxu0 %v485
  %v592 = vpop.f32.mrb[0].mxu0
  %v593 = vadd.f32 %v421, %v592
  %v594 = vpop.f32.mrb[0].mxu0
  %595 = vmatprep.mubr.f32.mxu0 0.0
  %596 = vmatmul.mubr.f32.gmra.mrb[0].mxu0 %v488
  %v597 = vpop.f32.mrb[0].mxu0
  %v598 = vadd.f32 %v426, %v597
  %v599 = vpop.f32.mrb[0].mxu0
  %600 = vmatprep.mubr.f32.mxu0 0.0
  %601 = vmatmul.mubr.f32.gmra.mrb[0].mxu0 %v491
  %v602 = vpop.f32.mrb[0].mxu0
  %v603 = vadd.f32 %v431, %v602
  %v604 = vpop.f32.mrb[0].mxu0
  %605 = vmatprep.mubr.f32.mxu0 0.0
  %606 = vmatmul.mubr.f32.gmra.mrb[0].mxu0 %v494
  %v607 = vpop.f32.mrb[0].mxu0
  %v608 = vadd.f32 %v436, %v607
  %v609 = vpop.f32.mrb[0].mxu0
  %610 = vmatprep.mubr.f32.mxu0 0.0
  %611 = vmatmul.mubr.f32.gmra.mrb[0].mxu0 %v497
  %v612 = vpop.f32.mrb[0].mxu0
  %v613 = vadd.f32 %v441, %v612
  %v614 = vpop.f32.mrb[0].mxu0
  %615 = vmatprep.mubr.f32.mxu0 0.0
  %616 = vmatmul.mubr.f32.gmra.mrb[0].mxu0 %v500
  %v617 = vpop.f32.mrb[0].mxu0
  %v618 = vadd.f32 %v446, %v617
  %v619 = vpop.f32.mrb[0].mxu0
  %620 = vmatprep.mubr.f32.mxu0 0.0
  %621 = vmatmul.mubr.f32.gmra.mrb[0].mxu0 %v503
  %v622 = vpop.f32.mrb[0].mxu0
  %v623 = vadd.f32 %v451, %v622
  %v624 = vpop.f32.mrb[0].mxu0
  %625 = vmatprep.mubr.f32.mxu0 0.0
  %626 = vmatmul.mubr.f32.gmra.mrb[0].mxu0 %v506
  %v627 = vpop.f32.mrb[0].mxu0
  %v628 = vadd.f32 %v456, %v627
  %v629 = vpop.f32.mrb[0].mxu0
  %630 = vmatprep.mubr.f32.mxu0 0.0
  %631 = vmatmul.mubr.f32.gmra.mrb[0].mxu0 %v509
  %v632 = vpop.f32.mrb[0].mxu0
  %v633 = vadd.f32 %v461, %v632
  %v634 = vpop.f32.mrb[0].mxu0
  %635 = vmatprep.mubr.f32.mxu0 0.0
  %636 = vmatmul.mubr.f32.gmra.mrb[0].mxu0 %v512
  %v637 = vpop.f32.mrb[0].mxu0
  %v638 = vadd.f32 %v466, %v637
  %v639 = vpop.f32.mrb[0].mxu0
  %640 = vmatprep.mubr.f32.mxu0 0.0
  %641 = vmatmul.mubr.f32.gmra.mrb[0].mxu0 %v515
  %v642 = vpop.f32.mrb[0].mxu0
  %v643 = vadd.f32 %v471, %v642
  %v644 = vpop.f32.mrb[0].mxu0
  %645 = vmatprep.mubr.f32.mxu0 0.0
  %646 = vmatmul.mubr.f32.gmra.mrb[0].mxu0 %v518
  %v647 = vpop.f32.mrb[0].mxu0
  %v648 = vadd.f32 %v476, %v647
  %v649 = vpop.f32.mrb[0].mxu0
  %650 = vmatprep.mubr.f32.mxu0 0.0
  %651 = vmatmul.mubr.f32.gmra.mrb[0].mxu0 %v521
  %v652 = vpop.f32.mrb[0].mxu0
  %v653 = vadd.f32 %v481, %v652
  %v654 = vpop.f32.mrb[0].mxu0
  %655 = vdwg.mxu0
  %vm656 = vcmask 64512
  %v658 = vsel %vm656, %v79, 0
  %v661 = vsel %vm656, %v80, 0
  %v664 = vsel %vm656, %v81, 0
  %v667 = vsel %vm656, %v82, 0
  %v670 = vsel %vm656, %v83, 0
  %v673 = vsel %vm656, %v84, 0
  %v676 = vsel %vm656, %v85, 0
  %v679 = vsel %vm656, %v86, 0
  %v682 = vsel %vm656, %v87, 0
  %v685 = vsel %vm656, %v88, 0
  %v688 = vsel %vm656, %v89, 0
  %v691 = vsel %vm656, %v90, 0
  %v694 = vsel %vm656, %v91, 0
  %696 = vmatprep.subr.mxu0 0.0
  %697 = vmatpush1.msra.mxu0 %v309
  %698 = vmatprep.subr.mxu0 0.0
  %699 = vmatpush1.msra.mxu0 0.0
  %700 = vmatprep.subr.mxu0 0.0
  %701 = vmatpush1.msra.mxu0 0.0
  %702 = vmatprep.subr.mxu0 0.0
  %703 = vmatpush1.msra.mxu0 0.0
  %704 = vmatprep.subr.mxu0 0.0
  %705 = vmatpush1.msra.mxu0 0.0
  %706 = vmatprep.subr.mxu0 0.0
  %707 = vmatpush1.msra.mxu0 0.0
  %708 = vmatprep.subr.mxu0 0.0
  %709 = vmatpush1.msra.mxu0 0.0
  %710 = vmatprep.subr.mxu0 0.0
  %711 = vmatpush1.msra.mxu0 0.0
  %712 = vmatprep.subr.mxu0 0.0
  %713 = vmatpush1.msra.mxu0 0.0
  %714 = vmatprep.subr.mxu0 0.0
  %715 = vmatpush1.msra.mxu0 0.0
  %716 = vmatprep.subr.mxu0 0.0
  %717 = vmatpush1.msra.mxu0 0.0
  %718 = vmatprep.subr.mxu0 0.0
  %719 = vmatpush1.msra.mxu0 0.0
  %720 = vmatprep.subr.mxu0 0.0
  %721 = vmatpush1.msra.mxu0 0.0
  %722 = vmatprep.subr.mxu0 0.0
  %723 = vmatpush1.msra.mxu0 0.0
  %724 = vmatprep.subr.mxu0 0.0
  %725 = vmatpush1.msra.mxu0 0.0
  %726 = vmatprep.subr.mxu0 0.0
  %727 = vmatpush1.msra.mxu0 0.0
  %728 = vmatprep.subr.mxu0 0.0
  %729 = vmatpush1.msra.mxu0 0.0
  %730 = vmatprep.subr.mxu0 0.0
  %731 = vmatpush1.msra.mxu0 0.0
  %732 = vmatprep.subr.mxu0 0.0
  %733 = vmatpush1.msra.mxu0 0.0
  %734 = vmatprep.subr.mxu0 0.0
  %735 = vmatpush1.msra.mxu0 0.0
  %736 = vmatprep.subr.mxu0 0.0
  %737 = vmatpush1.msra.mxu0 0.0
  %738 = vmatprep.subr.mxu0 0.0
  %739 = vmatpush1.msra.mxu0 0.0
  %740 = vmatprep.subr.mxu0 0.0
  %741 = vmatpush1.msra.mxu0 0.0
  %742 = vmatprep.subr.mxu0 0.0
  %743 = vmatpush1.msra.mxu0 0.0
  %744 = vmatprep.subr.mxu0 0.0
  %745 = vmatpush1.msra.mxu0 0.0
  %746 = vmatprep.subr.mxu0 0.0
  %747 = vmatpush1.msra.mxu0 0.0
  %748 = vmatprep.subr.mxu0 0.0
  %749 = vmatpush1.msra.mxu0 0.0
  %750 = vmatprep.subr.mxu0 0.0
  %751 = vmatpush1.msra.mxu0 0.0
  %752 = vmatprep.subr.mxu0 0.0
  %753 = vmatpush1.msra.mxu0 0.0
  %754 = vmatprep.subr.mxu0 0.0
  %755 = vmatpush1.msra.mxu0 0.0
  %756 = vmatprep.subr.mxu0 0.0
  %757 = vmatpush1.msra.mxu0 0.0
  %758 = vmatprep.subr.mxu0 0.0
  %759 = vmatpush1.msra.mxu0 0.0
  %760 = vmatprep.mubr.f32.mxu0 0.0
  %761 = vmatmul.mubr.f32.gmra.mrb[0].mxu0 %v658
  %v762 = vpop.f32.mrb[0].mxu0
  %v763 = vadd.f32 %v593, %v762
  %v764 = vpop.f32.mrb[0].mxu0
  %765 = vmatprep.mubr.f32.mxu0 0.0
  %766 = vmatmul.mubr.f32.gmra.mrb[0].mxu0 %v661
  %v767 = vpop.f32.mrb[0].mxu0
  %v768 = vadd.f32 %v598, %v767
  %v769 = vpop.f32.mrb[0].mxu0
  %770 = vmatprep.mubr.f32.mxu0 0.0
  %771 = vmatmul.mubr.f32.gmra.mrb[0].mxu0 %v664
  %v772 = vpop.f32.mrb[0].mxu0
  %v773 = vadd.f32 %v603, %v772
  %v774 = vpop.f32.mrb[0].mxu0
  %775 = vmatprep.mubr.f32.mxu0 0.0
  %776 = vmatmul.mubr.f32.gmra.mrb[0].mxu0 %v667
  %v777 = vpop.f32.mrb[0].mxu0
  %v778 = vadd.f32 %v608, %v777
  %v779 = vpop.f32.mrb[0].mxu0
  %780 = vmatprep.mubr.f32.mxu0 0.0
  %781 = vmatmul.mubr.f32.gmra.mrb[0].mxu0 %v670
  %v782 = vpop.f32.mrb[0].mxu0
  %v783 = vadd.f32 %v613, %v782
  %v784 = vpop.f32.mrb[0].mxu0
  %785 = vmatprep.mubr.f32.mxu0 0.0
  %786 = vmatmul.mubr.f32.gmra.mrb[0].mxu0 %v673
  %v787 = vpop.f32.mrb[0].mxu0
  %v788 = vadd.f32 %v618, %v787
  %v789 = vpop.f32.mrb[0].mxu0
  %790 = vmatprep.mubr.f32.mxu0 0.0
  %791 = vmatmul.mubr.f32.gmra.mrb[0].mxu0 %v676
  %v792 = vpop.f32.mrb[0].mxu0
  %v793 = vadd.f32 %v623, %v792
  %v794 = vpop.f32.mrb[0].mxu0
  %795 = vmatprep.mubr.f32.mxu0 0.0
  %796 = vmatmul.mubr.f32.gmra.mrb[0].mxu0 %v679
  %v797 = vpop.f32.mrb[0].mxu0
  %v798 = vadd.f32 %v628, %v797
  %v799 = vpop.f32.mrb[0].mxu0
  %800 = vmatprep.mubr.f32.mxu0 0.0
  %801 = vmatmul.mubr.f32.gmra.mrb[0].mxu0 %v682
  %v802 = vpop.f32.mrb[0].mxu0
  %v803 = vadd.f32 %v633, %v802
  %v804 = vpop.f32.mrb[0].mxu0
  %805 = vmatprep.mubr.f32.mxu0 0.0
  %806 = vmatmul.mubr.f32.gmra.mrb[0].mxu0 %v685
  %v807 = vpop.f32.mrb[0].mxu0
  %v808 = vadd.f32 %v638, %v807
  %v809 = vpop.f32.mrb[0].mxu0
  %810 = vmatprep.mubr.f32.mxu0 0.0
  %811 = vmatmul.mubr.f32.gmra.mrb[0].mxu0 %v688
  %v812 = vpop.f32.mrb[0].mxu0
  %v813 = vadd.f32 %v643, %v812
  %v814 = vpop.f32.mrb[0].mxu0
  %815 = vmatprep.mubr.f32.mxu0 0.0
  %816 = vmatmul.mubr.f32.gmra.mrb[0].mxu0 %v691
  %v817 = vpop.f32.mrb[0].mxu0
  %v818 = vadd.f32 %v648, %v817
  %v819 = vpop.f32.mrb[0].mxu0
  %820 = vmatprep.mubr.f32.mxu0 0.0
  %821 = vmatmul.mubr.f32.gmra.mrb[0].mxu0 %v694
  %v822 = vpop.f32.mrb[0].mxu0
  %v823 = vadd.f32 %v653, %v822
  %v824 = vpop.f32.mrb[0].mxu0
  %825 = vdwg.mxu0
  %v826 = vld [vmem:[%s10] sm:$0x1]
  %v828 = vlaneseq
  %v829 = vshrl.u32 %v828, 7
  %v830 = vsub.s32 0, %v829
  %v831 = vrot.slane %v826, %v830
  %v833 = vadd.f32 %v763, %v831
  %v834 = vadd.f32 %v768, %v831
  %v835 = vadd.f32 %v773, %v831
  %v836 = vadd.f32 %v778, %v831
  %v837 = vadd.f32 %v783, %v831
  %v838 = vadd.f32 %v788, %v831
  %v839 = vadd.f32 %v793, %v831
  %v840 = vadd.f32 %v798, %v831
  %v841 = vadd.f32 %v803, %v831
  %v842 = vadd.f32 %v808, %v831
  %v843 = vadd.f32 %v813, %v831
  %v844 = vadd.f32 %v818, %v831
  %v845 = vadd.f32 %v823, %v831
  %v846 = vmul.f32 %v833, %v833
  %v847 = vmul.f32 %v834, %v834
  %v848 = vmul.f32 %v835, %v835
  %v849 = vmul.f32 %v836, %v836
  %v850 = vmul.f32 %v837, %v837
  %v851 = vmul.f32 %v838, %v838
  %v852 = vmul.f32 %v839, %v839
  %v853 = vmul.f32 %v840, %v840
  %v854 = vmul.f32 %v841, %v841
  %v855 = vmul.f32 %v842, %v842
  %v856 = vmul.f32 %v843, %v843
  %v857 = vmul.f32 %v844, %v844
  %v858 = vmul.f32 %v845, %v845
  %v859 = vmul.f32 %v833, %v846
  %v860 = vmul.f32 %v834, %v847
  %v861 = vmul.f32 %v835, %v848
  %v862 = vmul.f32 %v836, %v849
  %v863 = vmul.f32 %v837, %v850
  %v864 = vmul.f32 %v838, %v851
  %v865 = vmul.f32 %v839, %v852
  %v866 = vmul.f32 %v840, %v853
  %v867 = vmul.f32 %v841, %v854
  %v868 = vmul.f32 %v842, %v855
  %v869 = vmul.f32 %v843, %v856
  %v870 = vmul.f32 %v844, %v857
  %v871 = vmul.f32 %v845, %v858
  %v872 = vmul.f32 %v859, 0.044715
  %v873 = vmul.f32 %v860, 0.044715
  %v874 = vmul.f32 %v861, 0.044715
  %v875 = vmul.f32 %v862, 0.044715
  %v876 = vmul.f32 %v863, 0.044715
  %v877 = vmul.f32 %v864, 0.044715
  %v878 = vmul.f32 %v865, 0.044715
  %v879 = vmul.f32 %v866, 0.044715
  %v880 = vmul.f32 %v867, 0.044715
  %v881 = vmul.f32 %v868, 0.044715
  %v882 = vmul.f32 %v869, 0.044715
  %v883 = vmul.f32 %v870, 0.044715
  %v884 = vmul.f32 %v871, 0.044715
  %v885 = vadd.f32 %v833, %v872
  %v886 = vadd.f32 %v834, %v873
  %v887 = vadd.f32 %v835, %v874
  %v888 = vadd.f32 %v836, %v875
  %v889 = vadd.f32 %v837, %v876
  %v890 = vadd.f32 %v838, %v877
  %v891 = vadd.f32 %v839, %v878
  %v892 = vadd.f32 %v840, %v879
  %v893 = vadd.f32 %v841, %v880
  %v894 = vadd.f32 %v842, %v881
  %v895 = vadd.f32 %v843, %v882
  %v896 = vadd.f32 %v844, %v883
  %v897 = vadd.f32 %v845, %v884
  %v898 = vmul.f32 %v885, 0.7978846
  %v899 = vmul.f32 %v886, 0.7978846
  %v900 = vmul.f32 %v887, 0.7978846
  %v901 = vmul.f32 %v888, 0.7978846
  %v902 = vmul.f32 %v889, 0.7978846
  %v903 = vmul.f32 %v890, 0.7978846
  %v904 = vmul.f32 %v891, 0.7978846
  %v905 = vmul.f32 %v892, 0.7978846
  %v906 = vmul.f32 %v893, 0.7978846
  %v907 = vmul.f32 %v894, 0.7978846
  %v908 = vmul.f32 %v895, 0.7978846
  %v909 = vmul.f32 %v896, 0.7978846
  %v910 = vmul.f32 %v897, 0.7978846
  %v911 = vtanh.pop %v898
  %v912 = vtanh.pop %v899
  %v913 = vtanh.pop %v900
  %v914 = vtanh.pop %v901
  %v915 = vtanh.pop %v902
  %v916 = vtanh.pop %v903
  %v917 = vtanh.pop %v904
  %v918 = vtanh.pop %v905
  %v919 = vtanh.pop %v906
  %v920 = vtanh.pop %v907
  %v921 = vtanh.pop %v908
  %v922 = vtanh.pop %v909
  %v923 = vtanh.pop %v910
  %v924 = vadd.f32 %v911, 1.0
  %v925 = vadd.f32 %v912, 1.0
  %v926 = vadd.f32 %v913, 1.0
  %v927 = vadd.f32 %v914, 1.0
  %v928 = vadd.f32 %v915, 1.0
  %v929 = vadd.f32 %v916, 1.0
  %v930 = vadd.f32 %v917, 1.0
  %v931 = vadd.f32 %v918, 1.0
  %v932 = vadd.f32 %v919, 1.0
  %v933 = vadd.f32 %v920, 1.0
  %v934 = vadd.f32 %v921, 1.0
  %v935 = vadd.f32 %v922, 1.0
  %v936 = vadd.f32 %v923, 1.0
  %v937 = vmul.f32 %v924, 0.5
  %v938 = vmul.f32 %v925, 0.5
  %v939 = vmul.f32 %v926, 0.5
  %v940 = vmul.f32 %v927, 0.5
  %v941 = vmul.f32 %v928, 0.5
  %v942 = vmul.f32 %v929, 0.5
  %v943 = vmul.f32 %v930, 0.5
  %v944 = vmul.f32 %v931, 0.5
  %v945 = vmul.f32 %v932, 0.5
  %v946 = vmul.f32 %v933, 0.5
  %v947 = vmul.f32 %v934, 0.5
  %v948 = vmul.f32 %v935, 0.5
  %v949 = vmul.f32 %v936, 0.5
  %v950 = vmul.f32 %v833, %v937
  %v951 = vmul.f32 %v834, %v938
  %v952 = vmul.f32 %v835, %v939
  %v953 = vmul.f32 %v836, %v940
  %v954 = vmul.f32 %v837, %v941
  %v955 = vmul.f32 %v838, %v942
  %v956 = vmul.f32 %v839, %v943
  %v957 = vmul.f32 %v840, %v944
  %v958 = vmul.f32 %v841, %v945
  %v959 = vmul.f32 %v842, %v946
  %v960 = vmul.f32 %v843, %v947
  %v961 = vmul.f32 %v844, %v948
  %v962 = vmul.f32 %v845, %v949
  %v963 = vld [vmem:[%s11] sm:$0xff]
  %v964 = vld [vmem:[%s11 + $0x8] sm:$0xff]
  %v965 = vld [vmem:[%s11 + $0x10] sm:$0xff]
  %v966 = vld [vmem:[%s11 + $0x18] sm:$0xff]
  %v967 = vld [vmem:[%s11 + $0x20] sm:$0xff]
  %v968 = vld [vmem:[%s11 + $0x28] sm:$0xff]
  %v969 = vld [vmem:[%s11 + $0x30] sm:$0xff]
  %v970 = vld [vmem:[%s11 + $0x38] sm:$0xff]
  %v971 = vld [vmem:[%s12] sm:$0x1]
  %v973 = vlaneseq
  %v974 = vshrl.u32 %v973, 7
  %v975 = vsub.s32 0, %v974
  %v976 = vrot.slane %v971, %v975
  %v979 = vsel %vm144, %v950, 0
  %v982 = vsel %vm144, %v951, 0
  %v985 = vsel %vm144, %v952, 0
  %v988 = vsel %vm144, %v953, 0
  %v991 = vsel %vm144, %v954, 0
  %v994 = vsel %vm144, %v955, 0
  %v997 = vsel %vm144, %v956, 0
  %v1000 = vsel %vm144, %v957, 0
  %v1003 = vsel %vm144, %v958, 0
  %v1006 = vsel %vm144, %v959, 0
  %v1009 = vsel %vm144, %v960, 0
  %v1012 = vsel %vm144, %v961, 0
  %v1015 = vsel %vm144, %v962, 0
  %1017 = vmatprep.subr.mxu0 0.0
  %1018 = vmatpush1.msra.mxu0 %v963
  %1019 = vmatprep.subr.mxu0 0.0
  %1020 = vmatpush1.msra.mxu0 %v964
  %1021 = vmatprep.subr.mxu0 0.0
  %1022 = vmatpush1.msra.mxu0 %v965
  %1023 = vmatprep.subr.mxu0 0.0
  %1024 = vmatpush1.msra.mxu0 %v966
  %1025 = vmatprep.subr.mxu0 0.0
  %1026 = vmatpush1.msra.mxu0 %v967
  %1027 = vmatprep.subr.mxu0 0.0
  %1028 = vmatpush1.msra.mxu0 %v968
  %1029 = vmatprep.subr.mxu0 0.0
  %1030 = vmatpush1.msra.mxu0 %v969
  %1031 = vmatprep.subr.mxu0 0.0
  %1032 = vmatpush1.msra.mxu0 %v970
  %1033 = vmatprep.subr.mxu0 0.0
  %1034 = vmatpush1.msra.mxu0 0.0
  %1035 = vmatprep.subr.mxu0 0.0
  %1036 = vmatpush1.msra.mxu0 0.0
  %1037 = vmatprep.subr.mxu0 0.0
  %1038 = vmatpush1.msra.mxu0 0.0
  %1039 = vmatprep.subr.mxu0 0.0
  %1040 = vmatpush1.msra.mxu0 0.0
  %1041 = vmatprep.subr.mxu0 0.0
  %1042 = vmatpush1.msra.mxu0 0.0
  %1043 = vmatprep.subr.mxu0 0.0
  %1044 = vmatpush1.msra.mxu0 0.0
  %1045 = vmatprep.subr.mxu0 0.0
  %1046 = vmatpush1.msra.mxu0 0.0
  %1047 = vmatprep.subr.mxu0 0.0
  %1048 = vmatpush1.msra.mxu0 0.0
  %1049 = vmatprep.subr.mxu0 0.0
  %1050 = vmatpush1.msra.mxu0 0.0
  %1051 = vmatprep.subr.mxu0 0.0
  %1052 = vmatpush1.msra.mxu0 0.0
  %1053 = vmatprep.subr.mxu0 0.0
  %1054 = vmatpush1.msra.mxu0 0.0
  %1055 = vmatprep.subr.mxu0 0.0
  %1056 = vmatpush1.msra.mxu0 0.0
  %1057 = vmatprep.subr.mxu0 0.0
  %1058 = vmatpush1.msra.mxu0 0.0
  %1059 = vmatprep.subr.mxu0 0.0
  %1060 = vmatpush1.msra.mxu0 0.0
  %1061 = vmatprep.subr.mxu0 0.0
  %1062 = vmatpush1.msra.mxu0 0.0
  %1063 = vmatprep.subr.mxu0 0.0
  %1064 = vmatpush1.msra.mxu0 0.0
  %1065 = vmatprep.subr.mxu0 0.0
  %1066 = vmatpush1.msra.mxu0 0.0
  %1067 = vmatprep.subr.mxu0 0.0
  %1068 = vmatpush1.msra.mxu0 0.0
  %1069 = vmatprep.subr.mxu0 0.0
  %1070 = vmatpush1.msra.mxu0 0.0
  %1071 = vmatprep.subr.mxu0 0.0
  %1072 = vmatpush1.msra.mxu0 0.0
  %1073 = vmatprep.subr.mxu0 0.0
  %1074 = vmatpush1.msra.mxu0 0.0
  %1075 = vmatprep.subr.mxu0 0.0
  %1076 = vmatpush1.msra.mxu0 0.0
  %1077 = vmatprep.subr.mxu0 0.0
  %1078 = vmatpush1.msra.mxu0 0.0
  %1079 = vmatprep.subr.mxu0 0.0
  %1080 = vmatpush1.msra.mxu0 0.0
  %1081 = vmatprep.mubr.f32.mxu0 0.0
  %1082 = vmatmul.mubr.f32.gmra.mrb[0].mxu0 %v979
  %v1083 = vpop.f32.mrb[0].mxu0
  %v1084 = vadd.f32 %v976, %v1083
  %v1085 = vpop.f32.mrb[0].mxu0
  %1086 = vmatprep.mubr.f32.mxu0 0.0
  %1087 = vmatmul.mubr.f32.gmra.mrb[0].mxu0 %v982
  %v1088 = vpop.f32.mrb[0].mxu0
  %v1089 = vadd.f32 %v976, %v1088
  %v1090 = vpop.f32.mrb[0].mxu0
  %1091 = vmatprep.mubr.f32.mxu0 0.0
  %1092 = vmatmul.mubr.f32.gmra.mrb[0].mxu0 %v985
  %v1093 = vpop.f32.mrb[0].mxu0
  %v1094 = vadd.f32 %v976, %v1093
  %v1095 = vpop.f32.mrb[0].mxu0
  %1096 = vmatprep.mubr.f32.mxu0 0.0
  %1097 = vmatmul.mubr.f32.gmra.mrb[0].mxu0 %v988
  %v1098 = vpop.f32.mrb[0].mxu0
  %v1099 = vadd.f32 %v976, %v1098
  %v1100 = vpop.f32.mrb[0].mxu0
  %1101 = vmatprep.mubr.f32.mxu0 0.0
  %1102 = vmatmul.mubr.f32.gmra.mrb[0].mxu0 %v991
  %v1103 = vpop.f32.mrb[0].mxu0
  %v1104 = vadd.f32 %v976, %v1103
  %v1105 = vpop.f32.mrb[0].mxu0
  %1106 = vmatprep.mubr.f32.mxu0 0.0
  %1107 = vmatmul.mubr.f32.gmra.mrb[0].mxu0 %v994
  %v1108 = vpop.f32.mrb[0].mxu0
  %v1109 = vadd.f32 %v976, %v1108
  %v1110 = vpop.f32.mrb[0].mxu0
  %1111 = vmatprep.mubr.f32.mxu0 0.0
  %1112 = vmatmul.mubr.f32.gmra.mrb[0].mxu0 %v997
  %v1113 = vpop.f32.mrb[0].mxu0
  %v1114 = vadd.f32 %v976, %v1113
  %v1115 = vpop.f32.mrb[0].mxu0
  %1116 = vmatprep.mubr.f32.mxu0 0.0
  %1117 = vmatmul.mubr.f32.gmra.mrb[0].mxu0 %v1000
  %v1118 = vpop.f32.mrb[0].mxu0
  %v1119 = vadd.f32 %v976, %v1118
  %v1120 = vpop.f32.mrb[0].mxu0
  %1121 = vmatprep.mubr.f32.mxu0 0.0
  %1122 = vmatmul.mubr.f32.gmra.mrb[0].mxu0 %v1003
  %v1123 = vpop.f32.mrb[0].mxu0
  %v1124 = vadd.f32 %v976, %v1123
  %v1125 = vpop.f32.mrb[0].mxu0
  %1126 = vmatprep.mubr.f32.mxu0 0.0
  %1127 = vmatmul.mubr.f32.gmra.mrb[0].mxu0 %v1006
  %v1128 = vpop.f32.mrb[0].mxu0
  %v1129 = vadd.f32 %v976, %v1128
  %v1130 = vpop.f32.mrb[0].mxu0
  %1131 = vmatprep.mubr.f32.mxu0 0.0
  %1132 = vmatmul.mubr.f32.gmra.mrb[0].mxu0 %v1009
  %v1133 = vpop.f32.mrb[0].mxu0
  %v1134 = vadd.f32 %v976, %v1133
  %v1135 = vpop.f32.mrb[0].mxu0
  %1136 = vmatprep.mubr.f32.mxu0 0.0
  %1137 = vmatmul.mubr.f32.gmra.mrb[0].mxu0 %v1012
  %v1138 = vpop.f32.mrb[0].mxu0
  %v1139 = vadd.f32 %v976, %v1138
  %v1140 = vpop.f32.mrb[0].mxu0
  %1141 = vmatprep.mubr.f32.mxu0 0.0
  %1142 = vmatmul.mubr.f32.gmra.mrb[0].mxu0 %v1015
  %v1143 = vpop.f32.mrb[0].mxu0
  %v1144 = vadd.f32 %v976, %v1143
  %v1145 = vpop.f32.mrb[0].mxu0
  %1146 = vdwg.mxu0
  %v1147 = vmul.f32 %v1084, %v1084
  %v1148 = vmul.f32 %v1089, %v1089
  %v1149 = vmul.f32 %v1094, %v1094
  %v1150 = vmul.f32 %v1099, %v1099
  %v1151 = vmul.f32 %v1104, %v1104
  %v1152 = vmul.f32 %v1109, %v1109
  %v1153 = vmul.f32 %v1114, %v1114
  %v1154 = vmul.f32 %v1119, %v1119
  %v1155 = vmul.f32 %v1124, %v1124
  %v1156 = vmul.f32 %v1129, %v1129
  %v1157 = vmul.f32 %v1134, %v1134
  %v1158 = vmul.f32 %v1139, %v1139
  %v1159 = vmul.f32 %v1144, %v1144
  %v1160 = vmul.f32 %v1084, %v1147
  %v1161 = vmul.f32 %v1089, %v1148
  %v1162 = vmul.f32 %v1094, %v1149
  %v1163 = vmul.f32 %v1099, %v1150
  %v1164 = vmul.f32 %v1104, %v1151
  %v1165 = vmul.f32 %v1109, %v1152
  %v1166 = vmul.f32 %v1114, %v1153
  %v1167 = vmul.f32 %v1119, %v1154
  %v1168 = vmul.f32 %v1124, %v1155
  %v1169 = vmul.f32 %v1129, %v1156
  %v1170 = vmul.f32 %v1134, %v1157
  %v1171 = vmul.f32 %v1139, %v1158
  %v1172 = vmul.f32 %v1144, %v1159
  %v1173 = vmul.f32 %v1160, 0.044715
  %v1174 = vmul.f32 %v1161, 0.044715
  %v1175 = vmul.f32 %v1162, 0.044715
  %v1176 = vmul.f32 %v1163, 0.044715
  %v1177 = vmul.f32 %v1164, 0.044715
  %v1178 = vmul.f32 %v1165, 0.044715
  %v1179 = vmul.f32 %v1166, 0.044715
  %v1180 = vmul.f32 %v1167, 0.044715
  %v1181 = vmul.f32 %v1168, 0.044715
  %v1182 = vmul.f32 %v1169, 0.044715
  %v1183 = vmul.f32 %v1170, 0.044715
  %v1184 = vmul.f32 %v1171, 0.044715
  %v1185 = vmul.f32 %v1172, 0.044715
  %v1186 = vadd.f32 %v1084, %v1173
  %v1187 = vadd.f32 %v1089, %v1174
  %v1188 = vadd.f32 %v1094, %v1175
  %v1189 = vadd.f32 %v1099, %v1176
  %v1190 = vadd.f32 %v1104, %v1177
  %v1191 = vadd.f32 %v1109, %v1178
  %v1192 = vadd.f32 %v1114, %v1179
  %v1193 = vadd.f32 %v1119, %v1180
  %v1194 = vadd.f32 %v1124, %v1181
  %v1195 = vadd.f32 %v1129, %v1182
  %v1196 = vadd.f32 %v1134, %v1183
  %v1197 = vadd.f32 %v1139, %v1184
  %v1198 = vadd.f32 %v1144, %v1185
  %v1199 = vmul.f32 %v1186, 0.7978846
  %v1200 = vmul.f32 %v1187, 0.7978846
  %v1201 = vmul.f32 %v1188, 0.7978846
  %v1202 = vmul.f32 %v1189, 0.7978846
  %v1203 = vmul.f32 %v1190, 0.7978846
  %v1204 = vmul.f32 %v1191, 0.7978846
  %v1205 = vmul.f32 %v1192, 0.7978846
  %v1206 = vmul.f32 %v1193, 0.7978846
  %v1207 = vmul.f32 %v1194, 0.7978846
  %v1208 = vmul.f32 %v1195, 0.7978846
  %v1209 = vmul.f32 %v1196, 0.7978846
  %v1210 = vmul.f32 %v1197, 0.7978846
  %v1211 = vmul.f32 %v1198, 0.7978846
  %v1212 = vtanh.pop %v1199
  %v1213 = vtanh.pop %v1200
  %v1214 = vtanh.pop %v1201
  %v1215 = vtanh.pop %v1202
  %v1216 = vtanh.pop %v1203
  %v1217 = vtanh.pop %v1204
  %v1218 = vtanh.pop %v1205
  %v1219 = vtanh.pop %v1206
  %v1220 = vtanh.pop %v1207
  %v1221 = vtanh.pop %v1208
  %v1222 = vtanh.pop %v1209
  %v1223 = vtanh.pop %v1210
  %v1224 = vtanh.pop %v1211
  %v1225 = vadd.f32 %v1212, 1.0
  %v1226 = vadd.f32 %v1213, 1.0
  %v1227 = vadd.f32 %v1214, 1.0
  %v1228 = vadd.f32 %v1215, 1.0
  %v1229 = vadd.f32 %v1216, 1.0
  %v1230 = vadd.f32 %v1217, 1.0
  %v1231 = vadd.f32 %v1218, 1.0
  %v1232 = vadd.f32 %v1219, 1.0
  %v1233 = vadd.f32 %v1220, 1.0
  %v1234 = vadd.f32 %v1221, 1.0
  %v1235 = vadd.f32 %v1222, 1.0
  %v1236 = vadd.f32 %v1223, 1.0
  %v1237 = vadd.f32 %v1224, 1.0
  %v1238 = vmul.f32 %v1225, 0.5
  %v1239 = vmul.f32 %v1226, 0.5
  %v1240 = vmul.f32 %v1227, 0.5
  %v1241 = vmul.f32 %v1228, 0.5
  %v1242 = vmul.f32 %v1229, 0.5
  %v1243 = vmul.f32 %v1230, 0.5
  %v1244 = vmul.f32 %v1231, 0.5
  %v1245 = vmul.f32 %v1232, 0.5
  %v1246 = vmul.f32 %v1233, 0.5
  %v1247 = vmul.f32 %v1234, 0.5
  %v1248 = vmul.f32 %v1235, 0.5
  %v1249 = vmul.f32 %v1236, 0.5
  %v1250 = vmul.f32 %v1237, 0.5
  %v1251 = vmul.f32 %v1084, %v1238
  %v1252 = vmul.f32 %v1089, %v1239
  %v1253 = vmul.f32 %v1094, %v1240
  %v1254 = vmul.f32 %v1099, %v1241
  %v1255 = vmul.f32 %v1104, %v1242
  %v1256 = vmul.f32 %v1109, %v1243
  %v1257 = vmul.f32 %v1114, %v1244
  %v1258 = vmul.f32 %v1119, %v1245
  %v1259 = vmul.f32 %v1124, %v1246
  %v1260 = vmul.f32 %v1129, %v1247
  %v1261 = vmul.f32 %v1134, %v1248
  %v1262 = vmul.f32 %v1139, %v1249
  %v1263 = vmul.f32 %v1144, %v1250
  %v1264 = vld [vmem:[%s13] sm:$0xff]
  %v1265 = vld [vmem:[%s13 + $0x8] sm:$0xff]
  %v1266 = vld [vmem:[%s13 + $0x10] sm:$0xff]
  %v1267 = vld [vmem:[%s13 + $0x18] sm:$0xff]
  %v1268 = vld [vmem:[%s14] sm:$0x1]
  %v1270 = vlaneseq
  %v1271 = vshrl.u32 %v1270, 7
  %v1272 = vsub.s32 0, %v1271
  %v1273 = vrot.slane %v1268, %v1272
  %vm1275 = vcmask 261120
  %v1277 = vsel %vm1275, %v1251, 0
  %v1280 = vsel %vm1275, %v1252, 0
  %v1283 = vsel %vm1275, %v1253, 0
  %v1286 = vsel %vm1275, %v1254, 0
  %v1289 = vsel %vm1275, %v1255, 0
  %v1292 = vsel %vm1275, %v1256, 0
  %v1295 = vsel %vm1275, %v1257, 0
  %v1298 = vsel %vm1275, %v1258, 0
  %v1301 = vsel %vm1275, %v1259, 0
  %v1304 = vsel %vm1275, %v1260, 0
  %v1307 = vsel %vm1275, %v1261, 0
  %v1310 = vsel %vm1275, %v1262, 0
  %v1313 = vsel %vm1275, %v1263, 0
  %1315 = vmatprep.subr.mxu0 0.0
  %1316 = vmatpush1.msra.mxu0 %v1264
  %1317 = vmatprep.subr.mxu0 0.0
  %1318 = vmatpush1.msra.mxu0 %v1265
  %1319 = vmatprep.subr.mxu0 0.0
  %1320 = vmatpush1.msra.mxu0 %v1266
  %1321 = vmatprep.subr.mxu0 0.0
  %1322 = vmatpush1.msra.mxu0 %v1267
  %1323 = vmatprep.subr.mxu0 0.0
  %1324 = vmatpush1.msra.mxu0 0.0
  %1325 = vmatprep.subr.mxu0 0.0
  %1326 = vmatpush1.msra.mxu0 0.0
  %1327 = vmatprep.subr.mxu0 0.0
  %1328 = vmatpush1.msra.mxu0 0.0
  %1329 = vmatprep.subr.mxu0 0.0
  %1330 = vmatpush1.msra.mxu0 0.0
  %1331 = vmatprep.subr.mxu0 0.0
  %1332 = vmatpush1.msra.mxu0 0.0
  %1333 = vmatprep.subr.mxu0 0.0
  %1334 = vmatpush1.msra.mxu0 0.0
  %1335 = vmatprep.subr.mxu0 0.0
  %1336 = vmatpush1.msra.mxu0 0.0
  %1337 = vmatprep.subr.mxu0 0.0
  %1338 = vmatpush1.msra.mxu0 0.0
  %1339 = vmatprep.subr.mxu0 0.0
  %1340 = vmatpush1.msra.mxu0 0.0
  %1341 = vmatprep.subr.mxu0 0.0
  %1342 = vmatpush1.msra.mxu0 0.0
  %1343 = vmatprep.subr.mxu0 0.0
  %1344 = vmatpush1.msra.mxu0 0.0
  %1345 = vmatprep.subr.mxu0 0.0
  %1346 = vmatpush1.msra.mxu0 0.0
  %1347 = vmatprep.subr.mxu0 0.0
  %1348 = vmatpush1.msra.mxu0 0.0
  %1349 = vmatprep.subr.mxu0 0.0
  %1350 = vmatpush1.msra.mxu0 0.0
  %1351 = vmatprep.subr.mxu0 0.0
  %1352 = vmatpush1.msra.mxu0 0.0
  %1353 = vmatprep.subr.mxu0 0.0
  %1354 = vmatpush1.msra.mxu0 0.0
  %1355 = vmatprep.subr.mxu0 0.0
  %1356 = vmatpush1.msra.mxu0 0.0
  %1357 = vmatprep.subr.mxu0 0.0
  %1358 = vmatpush1.msra.mxu0 0.0
  %1359 = vmatprep.subr.mxu0 0.0
  %1360 = vmatpush1.msra.mxu0 0.0
  %1361 = vmatprep.subr.mxu0 0.0
  %1362 = vmatpush1.msra.mxu0 0.0
  %1363 = vmatprep.subr.mxu0 0.0
  %1364 = vmatpush1.msra.mxu0 0.0
  %1365 = vmatprep.subr.mxu0 0.0
  %1366 = vmatpush1.msra.mxu0 0.0
  %1367 = vmatprep.subr.mxu0 0.0
  %1368 = vmatpush1.msra.mxu0 0.0
  %1369 = vmatprep.subr.mxu0 0.0
  %1370 = vmatpush1.msra.mxu0 0.0
  %1371 = vmatprep.subr.mxu0 0.0
  %1372 = vmatpush1.msra.mxu0 0.0
  %1373 = vmatprep.subr.mxu0 0.0
  %1374 = vmatpush1.msra.mxu0 0.0
  %1375 = vmatprep.subr.mxu0 0.0
  %1376 = vmatpush1.msra.mxu0 0.0
  %1377 = vmatprep.subr.mxu0 0.0
  %1378 = vmatpush1.msra.mxu0 0.0
  %1379 = vmatprep.mubr.f32.mxu0 0.0
  %1380 = vmatmul.mubr.f32.gmra.mrb[0].mxu0 %v1277
  %v1381 = vpop.f32.mrb[0].mxu0
  %v1382 = vadd.f32 %v1273, %v1381
  %v1383 = vpop.f32.mrb[0].mxu0
  %1384 = vmatprep.mubr.f32.mxu0 0.0
  %1385 = vmatmul.mubr.f32.gmra.mrb[0].mxu0 %v1280
  %v1386 = vpop.f32.mrb[0].mxu0
  %v1387 = vadd.f32 %v1273, %v1386
  %v1388 = vpop.f32.mrb[0].mxu0
  %1389 = vmatprep.mubr.f32.mxu0 0.0
  %1390 = vmatmul.mubr.f32.gmra.mrb[0].mxu0 %v1283
  %v1391 = vpop.f32.mrb[0].mxu0
  %v1392 = vadd.f32 %v1273, %v1391
  %v1393 = vpop.f32.mrb[0].mxu0
  %1394 = vmatprep.mubr.f32.mxu0 0.0
  %1395 = vmatmul.mubr.f32.gmra.mrb[0].mxu0 %v1286
  %v1396 = vpop.f32.mrb[0].mxu0
  %v1397 = vadd.f32 %v1273, %v1396
  %v1398 = vpop.f32.mrb[0].mxu0
  %1399 = vmatprep.mubr.f32.mxu0 0.0
  %1400 = vmatmul.mubr.f32.gmra.mrb[0].mxu0 %v1289
  %v1401 = vpop.f32.mrb[0].mxu0
  %v1402 = vadd.f32 %v1273, %v1401
  %v1403 = vpop.f32.mrb[0].mxu0
  %1404 = vmatprep.mubr.f32.mxu0 0.0
  %1405 = vmatmul.mubr.f32.gmra.mrb[0].mxu0 %v1292
  %v1406 = vpop.f32.mrb[0].mxu0
  %v1407 = vadd.f32 %v1273, %v1406
  %v1408 = vpop.f32.mrb[0].mxu0
  %1409 = vmatprep.mubr.f32.mxu0 0.0
  %1410 = vmatmul.mubr.f32.gmra.mrb[0].mxu0 %v1295
  %v1411 = vpop.f32.mrb[0].mxu0
  %v1412 = vadd.f32 %v1273, %v1411
  %v1413 = vpop.f32.mrb[0].mxu0
  %1414 = vmatprep.mubr.f32.mxu0 0.0
  %1415 = vmatmul.mubr.f32.gmra.mrb[0].mxu0 %v1298
  %v1416 = vpop.f32.mrb[0].mxu0
  %v1417 = vadd.f32 %v1273, %v1416
  %v1418 = vpop.f32.mrb[0].mxu0
  %1419 = vmatprep.mubr.f32.mxu0 0.0
  %1420 = vmatmul.mubr.f32.gmra.mrb[0].mxu0 %v1301
  %v1421 = vpop.f32.mrb[0].mxu0
  %v1422 = vadd.f32 %v1273, %v1421
  %v1423 = vpop.f32.mrb[0].mxu0
  %1424 = vmatprep.mubr.f32.mxu0 0.0
  %1425 = vmatmul.mubr.f32.gmra.mrb[0].mxu0 %v1304
  %v1426 = vpop.f32.mrb[0].mxu0
  %v1427 = vadd.f32 %v1273, %v1426
  %v1428 = vpop.f32.mrb[0].mxu0
  %1429 = vmatprep.mubr.f32.mxu0 0.0
  %1430 = vmatmul.mubr.f32.gmra.mrb[0].mxu0 %v1307
  %v1431 = vpop.f32.mrb[0].mxu0
  %v1432 = vadd.f32 %v1273, %v1431
  %v1433 = vpop.f32.mrb[0].mxu0
  %1434 = vmatprep.mubr.f32.mxu0 0.0
  %1435 = vmatmul.mubr.f32.gmra.mrb[0].mxu0 %v1310
  %v1436 = vpop.f32.mrb[0].mxu0
  %v1437 = vadd.f32 %v1273, %v1436
  %v1438 = vpop.f32.mrb[0].mxu0
  %1439 = vmatprep.mubr.f32.mxu0 0.0
  %1440 = vmatmul.mubr.f32.gmra.mrb[0].mxu0 %v1313
  %v1441 = vpop.f32.mrb[0].mxu0
  %v1442 = vadd.f32 %v1273, %v1441
  %v1443 = vpop.f32.mrb[0].mxu0
  %1444 = vdwg.mxu0
  %v1446 = vsel %vm144, %v1382, 0
  %v1449 = vsel %vm144, %v1387, 0
  %v1452 = vsel %vm144, %v1392, 0
  %v1455 = vsel %vm144, %v1397, 0
  %v1458 = vsel %vm144, %v1402, 0
  %v1461 = vsel %vm144, %v1407, 0
  %v1464 = vsel %vm144, %v1412, 0
  %v1467 = vsel %vm144, %v1417, 0
  %v1470 = vsel %vm144, %v1422, 0
  %v1473 = vsel %vm144, %v1427, 0
  %v1476 = vsel %vm144, %v1432, 0
  %v1479 = vsel %vm144, %v1437, 0
  %v1482 = vsel %vm144, %v1442, 0
  %1484 = vmatprep.subr.mxu0 0.0
  %1485 = vmatpush1.msra.mxu0 %v128
  %1486 = vmatprep.subr.mxu0 0.0
  %1487 = vmatpush1.msra.mxu0 %v129
  %1488 = vmatprep.subr.mxu0 0.0
  %1489 = vmatpush1.msra.mxu0 %v130
  %1490 = vmatprep.subr.mxu0 0.0
  %1491 = vmatpush1.msra.mxu0 %v131
  %1492 = vmatprep.subr.mxu0 0.0
  %1493 = vmatpush1.msra.mxu0 %v132
  %1494 = vmatprep.subr.mxu0 0.0
  %1495 = vmatpush1.msra.mxu0 %v133
  %1496 = vmatprep.subr.mxu0 0.0
  %1497 = vmatpush1.msra.mxu0 %v134
  %1498 = vmatprep.subr.mxu0 0.0
  %1499 = vmatpush1.msra.mxu0 %v135
  %1500 = vmatprep.subr.mxu0 0.0
  %1501 = vmatpush1.msra.mxu0 0.0
  %1502 = vmatprep.subr.mxu0 0.0
  %1503 = vmatpush1.msra.mxu0 0.0
  %1504 = vmatprep.subr.mxu0 0.0
  %1505 = vmatpush1.msra.mxu0 0.0
  %1506 = vmatprep.subr.mxu0 0.0
  %1507 = vmatpush1.msra.mxu0 0.0
  %1508 = vmatprep.subr.mxu0 0.0
  %1509 = vmatpush1.msra.mxu0 0.0
  %1510 = vmatprep.subr.mxu0 0.0
  %1511 = vmatpush1.msra.mxu0 0.0
  %1512 = vmatprep.subr.mxu0 0.0
  %1513 = vmatpush1.msra.mxu0 0.0
  %1514 = vmatprep.subr.mxu0 0.0
  %1515 = vmatpush1.msra.mxu0 0.0
  %1516 = vmatprep.subr.mxu0 0.0
  %1517 = vmatpush1.msra.mxu0 0.0
  %1518 = vmatprep.subr.mxu0 0.0
  %1519 = vmatpush1.msra.mxu0 0.0
  %1520 = vmatprep.subr.mxu0 0.0
  %1521 = vmatpush1.msra.mxu0 0.0
  %1522 = vmatprep.subr.mxu0 0.0
  %1523 = vmatpush1.msra.mxu0 0.0
  %1524 = vmatprep.subr.mxu0 0.0
  %1525 = vmatpush1.msra.mxu0 0.0
  %1526 = vmatprep.subr.mxu0 0.0
  %1527 = vmatpush1.msra.mxu0 0.0
  %1528 = vmatprep.subr.mxu0 0.0
  %1529 = vmatpush1.msra.mxu0 0.0
  %1530 = vmatprep.subr.mxu0 0.0
  %1531 = vmatpush1.msra.mxu0 0.0
  %1532 = vmatprep.subr.mxu0 0.0
  %1533 = vmatpush1.msra.mxu0 0.0
  %1534 = vmatprep.subr.mxu0 0.0
  %1535 = vmatpush1.msra.mxu0 0.0
  %1536 = vmatprep.subr.mxu0 0.0
  %1537 = vmatpush1.msra.mxu0 0.0
  %1538 = vmatprep.subr.mxu0 0.0
  %1539 = vmatpush1.msra.mxu0 0.0
  %1540 = vmatprep.subr.mxu0 0.0
  %1541 = vmatpush1.msra.mxu0 0.0
  %1542 = vmatprep.subr.mxu0 0.0
  %1543 = vmatpush1.msra.mxu0 0.0
  %1544 = vmatprep.subr.mxu0 0.0
  %1545 = vmatpush1.msra.mxu0 0.0
  %1546 = vmatprep.subr.mxu0 0.0
  %1547 = vmatpush1.msra.mxu0 0.0
  %1548 = vmatprep.mubr.f32.mxu0 0.0
  %1549 = vmatmul.mubr.f32.gmra.mrb[0].mxu0 %v1446
  %v1550 = vpop.f32.mrb[0].mxu0
  %v1551 = vadd.f32 0.0, %v1550
  %v1552 = vpop.f32.mrb[0].mxu0
  %1553 = vmatprep.mubr.f32.mxu0 0.0
  %1554 = vmatmul.mubr.f32.gmra.mrb[0].mxu0 %v1449
  %v1555 = vpop.f32.mrb[0].mxu0
  %v1556 = vadd.f32 0.0, %v1555
  %v1557 = vpop.f32.mrb[0].mxu0
  %1558 = vmatprep.mubr.f32.mxu0 0.0
  %1559 = vmatmul.mubr.f32.gmra.mrb[0].mxu0 %v1452
  %v1560 = vpop.f32.mrb[0].mxu0
  %v1561 = vadd.f32 0.0, %v1560
  %v1562 = vpop.f32.mrb[0].mxu0
  %1563 = vmatprep.mubr.f32.mxu0 0.0
  %1564 = vmatmul.mubr.f32.gmra.mrb[0].mxu0 %v1455
  %v1565 = vpop.f32.mrb[0].mxu0
  %v1566 = vadd.f32 0.0, %v1565
  %v1567 = vpop.f32.mrb[0].mxu0
  %1568 = vmatprep.mubr.f32.mxu0 0.0
  %1569 = vmatmul.mubr.f32.gmra.mrb[0].mxu0 %v1458
  %v1570 = vpop.f32.mrb[0].mxu0
  %v1571 = vadd.f32 0.0, %v1570
  %v1572 = vpop.f32.mrb[0].mxu0
  %1573 = vmatprep.mubr.f32.mxu0 0.0
  %1574 = vmatmul.mubr.f32.gmra.mrb[0].mxu0 %v1461
  %v1575 = vpop.f32.mrb[0].mxu0
  %v1576 = vadd.f32 0.0, %v1575
  %v1577 = vpop.f32.mrb[0].mxu0
  %1578 = vmatprep.mubr.f32.mxu0 0.0
  %1579 = vmatmul.mubr.f32.gmra.mrb[0].mxu0 %v1464
  %v1580 = vpop.f32.mrb[0].mxu0
  %v1581 = vadd.f32 0.0, %v1580
  %v1582 = vpop.f32.mrb[0].mxu0
  %1583 = vmatprep.mubr.f32.mxu0 0.0
  %1584 = vmatmul.mubr.f32.gmra.mrb[0].mxu0 %v1467
  %v1585 = vpop.f32.mrb[0].mxu0
  %v1586 = vadd.f32 0.0, %v1585
  %v1587 = vpop.f32.mrb[0].mxu0
  %1588 = vmatprep.mubr.f32.mxu0 0.0
  %1589 = vmatmul.mubr.f32.gmra.mrb[0].mxu0 %v1470
  %v1590 = vpop.f32.mrb[0].mxu0
  %v1591 = vadd.f32 0.0, %v1590
  %v1592 = vpop.f32.mrb[0].mxu0
  %1593 = vmatprep.mubr.f32.mxu0 0.0
  %1594 = vmatmul.mubr.f32.gmra.mrb[0].mxu0 %v1473
  %v1595 = vpop.f32.mrb[0].mxu0
  %v1596 = vadd.f32 0.0, %v1595
  %v1597 = vpop.f32.mrb[0].mxu0
  %1598 = vmatprep.mubr.f32.mxu0 0.0
  %1599 = vmatmul.mubr.f32.gmra.mrb[0].mxu0 %v1476
  %v1600 = vpop.f32.mrb[0].mxu0
  %v1601 = vadd.f32 0.0, %v1600
  %v1602 = vpop.f32.mrb[0].mxu0
  %1603 = vmatprep.mubr.f32.mxu0 0.0
  %1604 = vmatmul.mubr.f32.gmra.mrb[0].mxu0 %v1479
  %v1605 = vpop.f32.mrb[0].mxu0
  %v1606 = vadd.f32 0.0, %v1605
  %v1607 = vpop.f32.mrb[0].mxu0
  %1608 = vmatprep.mubr.f32.mxu0 0.0
  %1609 = vmatmul.mubr.f32.gmra.mrb[0].mxu0 %v1482
  %v1610 = vpop.f32.mrb[0].mxu0
  %v1611 = vadd.f32 0.0, %v1610
  %v1612 = vpop.f32.mrb[0].mxu0
  %1613 = vdwg.mxu0
  %v1614 = vxor.u32 %v1382, 2147483648
  %v1615 = vxor.u32 %v1387, 2147483648
  %v1616 = vxor.u32 %v1392, 2147483648
  %v1617 = vxor.u32 %v1397, 2147483648
  %v1618 = vxor.u32 %v1402, 2147483648
  %v1619 = vxor.u32 %v1407, 2147483648
  %v1620 = vxor.u32 %v1412, 2147483648
  %v1621 = vxor.u32 %v1417, 2147483648
  %v1622 = vxor.u32 %v1422, 2147483648
  %v1623 = vxor.u32 %v1427, 2147483648
  %v1624 = vxor.u32 %v1432, 2147483648
  %v1625 = vxor.u32 %v1437, 2147483648
  %v1626 = vxor.u32 %v1442, 2147483648
  %v1627 = vmul.f32 %v1614, 1.442695
  %v1628 = vpow.pop %v1627
  %v1629 = vmul.f32 %v1615, 1.442695
  %v1630 = vpow.pop %v1629
  %v1631 = vmul.f32 %v1616, 1.442695
  %v1632 = vpow.pop %v1631
  %v1633 = vmul.f32 %v1617, 1.442695
  %v1634 = vpow.pop %v1633
  %v1635 = vmul.f32 %v1618, 1.442695
  %v1636 = vpow.pop %v1635
  %v1637 = vmul.f32 %v1619, 1.442695
  %v1638 = vpow.pop %v1637
  %v1639 = vmul.f32 %v1620, 1.442695
  %v1640 = vpow.pop %v1639
  %v1641 = vmul.f32 %v1621, 1.442695
  %v1642 = vpow.pop %v1641
  %v1643 = vmul.f32 %v1622, 1.442695
  %v1644 = vpow.pop %v1643
  %v1645 = vmul.f32 %v1623, 1.442695
  %v1646 = vpow.pop %v1645
  %v1647 = vmul.f32 %v1624, 1.442695
  %v1648 = vpow.pop %v1647
  %v1649 = vmul.f32 %v1625, 1.442695
  %v1650 = vpow.pop %v1649
  %v1651 = vmul.f32 %v1626, 1.442695
  %v1652 = vpow.pop %v1651
  %v1653 = vadd.f32 %v1628, 1.0
  %v1654 = vadd.f32 %v1630, 1.0
  %v1655 = vadd.f32 %v1632, 1.0
  %v1656 = vadd.f32 %v1634, 1.0
  %v1657 = vadd.f32 %v1636, 1.0
  %v1658 = vadd.f32 %v1638, 1.0
  %v1659 = vadd.f32 %v1640, 1.0
  %v1660 = vadd.f32 %v1642, 1.0
  %v1661 = vadd.f32 %v1644, 1.0
  %v1662 = vadd.f32 %v1646, 1.0
  %v1663 = vadd.f32 %v1648, 1.0
  %v1664 = vadd.f32 %v1650, 1.0
  %v1665 = vadd.f32 %v1652, 1.0
  %v1666 = vrcp.pop %v1653
  %v1667 = vmul.f32 1.0, %v1666
  %v1668 = vrcp.pop %v1654
  %v1669 = vmul.f32 1.0, %v1668
  %v1670 = vrcp.pop %v1655
  %v1671 = vmul.f32 1.0, %v1670
  %v1672 = vrcp.pop %v1656
  %v1673 = vmul.f32 1.0, %v1672
  %v1674 = vrcp.pop %v1657
  %v1675 = vmul.f32 1.0, %v1674
  %v1676 = vrcp.pop %v1658
  %v1677 = vmul.f32 1.0, %v1676
  %v1678 = vrcp.pop %v1659
  %v1679 = vmul.f32 1.0, %v1678
  %v1680 = vrcp.pop %v1660
  %v1681 = vmul.f32 1.0, %v1680
  %v1682 = vrcp.pop %v1661
  %v1683 = vmul.f32 1.0, %v1682
  %v1684 = vrcp.pop %v1662
  %v1685 = vmul.f32 1.0, %v1684
  %v1686 = vrcp.pop %v1663
  %v1687 = vmul.f32 1.0, %v1686
  %v1688 = vrcp.pop %v1664
  %v1689 = vmul.f32 1.0, %v1688
  %v1690 = vrcp.pop %v1665
  %v1691 = vmul.f32 1.0, %v1690
  %v1692 = vmul.f32 %v950, %v1667
  %v1693 = vmul.f32 %v951, %v1669
  %v1694 = vmul.f32 %v952, %v1671
  %v1695 = vmul.f32 %v953, %v1673
  %v1696 = vmul.f32 %v954, %v1675
  %v1697 = vmul.f32 %v955, %v1677
  %v1698 = vmul.f32 %v956, %v1679
  %v1699 = vmul.f32 %v957, %v1681
  %v1700 = vmul.f32 %v958, %v1683
  %v1701 = vmul.f32 %v959, %v1685
  %v1702 = vmul.f32 %v960, %v1687
  %v1703 = vmul.f32 %v961, %v1689
  %v1704 = vmul.f32 %v962, %v1691
  %vm1705 = vcmask 801792
  %v1707 = vsel %vm1705, %v118, 0
  %v1710 = vsel %vm1705, %v119, 0
  %vm1712 = vcmask 1041408
  %v1714 = vsel %vm1712, %v1704, 0
  %1716 = vmatprep.subr.mxu0 0.0
  %1717 = vmatpush1.msra.mxu0 %v1692
  %1718 = vmatprep.subr.mxu0 0.0
  %1719 = vmatpush1.msra.mxu0 %v1693
  %1720 = vmatprep.subr.mxu0 0.0
  %1721 = vmatpush1.msra.mxu0 %v1694
  %1722 = vmatprep.subr.mxu0 0.0
  %1723 = vmatpush1.msra.mxu0 %v1695
  %1724 = vmatprep.subr.mxu0 0.0
  %1725 = vmatpush1.msra.mxu0 %v1696
  %1726 = vmatprep.subr.mxu0 0.0
  %1727 = vmatpush1.msra.mxu0 %v1697
  %1728 = vmatprep.subr.mxu0 0.0
  %1729 = vmatpush1.msra.mxu0 %v1698
  %1730 = vmatprep.subr.mxu0 0.0
  %1731 = vmatpush1.msra.mxu0 %v1699
  %1732 = vmatprep.subr.mxu0 0.0
  %1733 = vmatpush1.msra.mxu0 %v1700
  %1734 = vmatprep.subr.mxu0 0.0
  %1735 = vmatpush1.msra.mxu0 %v1701
  %1736 = vmatprep.subr.mxu0 0.0
  %1737 = vmatpush1.msra.mxu0 %v1702
  %1738 = vmatprep.subr.mxu0 0.0
  %1739 = vmatpush1.msra.mxu0 %v1703
  %1740 = vmatprep.subr.mxu0 0.0
  %1741 = vmatpush1.msra.mxu0 %v1714
  %1742 = vmatprep.subr.mxu0 0.0
  %1743 = vmatpush1.msra.mxu0 0.0
  %1744 = vmatprep.subr.mxu0 0.0
  %1745 = vmatpush1.msra.mxu0 0.0
  %1746 = vmatprep.subr.mxu0 0.0
  %1747 = vmatpush1.msra.mxu0 0.0
  %1748 = vmatprep.subr.mxu0 0.0
  %1749 = vmatpush1.msra.mxu0 0.0
  %1750 = vmatprep.subr.mxu0 0.0
  %1751 = vmatpush1.msra.mxu0 0.0
  %1752 = vmatprep.subr.mxu0 0.0
  %1753 = vmatpush1.msra.mxu0 0.0
  %1754 = vmatprep.subr.mxu0 0.0
  %1755 = vmatpush1.msra.mxu0 0.0
  %1756 = vmatprep.subr.mxu0 0.0
  %1757 = vmatpush1.msra.mxu0 0.0
  %1758 = vmatprep.subr.mxu0 0.0
  %1759 = vmatpush1.msra.mxu0 0.0
  %1760 = vmatprep.subr.mxu0 0.0
  %1761 = vmatpush1.msra.mxu0 0.0
  %1762 = vmatprep.subr.mxu0 0.0
  %1763 = vmatpush1.msra.mxu0 0.0
  %1764 = vmatprep.subr.mxu0 0.0
  %1765 = vmatpush1.msra.mxu0 0.0
  %1766 = vmatprep.subr.mxu0 0.0
  %1767 = vmatpush1.msra.mxu0 0.0
  %1768 = vmatprep.subr.mxu0 0.0
  %1769 = vmatpush1.msra.mxu0 0.0
  %1770 = vmatprep.subr.mxu0 0.0
  %1771 = vmatpush1.msra.mxu0 0.0
  %1772 = vmatprep.subr.mxu0 0.0
  %1773 = vmatpush1.msra.mxu0 0.0
  %1774 = vmatprep.subr.mxu0 0.0
  %1775 = vmatpush1.msra.mxu0 0.0
  %1776 = vmatprep.subr.mxu0 0.0
  %1777 = vmatpush1.msra.mxu0 0.0
  %1778 = vmatprep.subr.mxu0 0.0
  %1779 = vmatpush1.msra.mxu0 0.0
  %1780 = vmatprep.mubr.f32.mxu0 0.0
  %1781 = vmatmul.mubr.f32.gmra.mrb[0].mxu0 %v1707
  %v1782 = vpop.f32.mrb[0].mxu0
  %v1783 = vadd.f32 0.0, %v1782
  %v1784 = vpop.f32.mrb[0].mxu0
  %1785 = vmatprep.mubr.f32.mxu0 0.0
  %1786 = vmatmul.mubr.f32.gmra.mrb[0].mxu0 %v1710
  %v1787 = vpop.f32.mrb[0].mxu0
  %v1788 = vadd.f32 0.0, %v1787
  %v1789 = vpop.f32.mrb[0].mxu0
  %1790 = vdwg.mxu0
  %v1792 = vsel %vm144, %v1783, 0
  %v1795 = vsel %vm144, %v1788, 0
  %1797 = vmatprep.subr.mxu0 0.0
  %1798 = vmatpush1.msra.mxu0 %v120
  %1799 = vmatprep.subr.mxu0 0.0
  %1800 = vmatpush1.msra.mxu0 %v121
  %1801 = vmatprep.subr.mxu0 0.0
  %1802 = vmatpush1.msra.mxu0 %v122
  %1803 = vmatprep.subr.mxu0 0.0
  %1804 = vmatpush1.msra.mxu0 %v123
  %1805 = vmatprep.subr.mxu0 0.0
  %1806 = vmatpush1.msra.mxu0 %v124
  %1807 = vmatprep.subr.mxu0 0.0
  %1808 = vmatpush1.msra.mxu0 %v125
  %1809 = vmatprep.subr.mxu0 0.0
  %1810 = vmatpush1.msra.mxu0 %v126
  %1811 = vmatprep.subr.mxu0 0.0
  %1812 = vmatpush1.msra.mxu0 %v127
  %1813 = vmatprep.subr.mxu0 0.0
  %1814 = vmatpush1.msra.mxu0 0.0
  %1815 = vmatprep.subr.mxu0 0.0
  %1816 = vmatpush1.msra.mxu0 0.0
  %1817 = vmatprep.subr.mxu0 0.0
  %1818 = vmatpush1.msra.mxu0 0.0
  %1819 = vmatprep.subr.mxu0 0.0
  %1820 = vmatpush1.msra.mxu0 0.0
  %1821 = vmatprep.subr.mxu0 0.0
  %1822 = vmatpush1.msra.mxu0 0.0
  %1823 = vmatprep.subr.mxu0 0.0
  %1824 = vmatpush1.msra.mxu0 0.0
  %1825 = vmatprep.subr.mxu0 0.0
  %1826 = vmatpush1.msra.mxu0 0.0
  %1827 = vmatprep.subr.mxu0 0.0
  %1828 = vmatpush1.msra.mxu0 0.0
  %1829 = vmatprep.subr.mxu0 0.0
  %1830 = vmatpush1.msra.mxu0 0.0
  %1831 = vmatprep.subr.mxu0 0.0
  %1832 = vmatpush1.msra.mxu0 0.0
  %1833 = vmatprep.subr.mxu0 0.0
  %1834 = vmatpush1.msra.mxu0 0.0
  %1835 = vmatprep.subr.mxu0 0.0
  %1836 = vmatpush1.msra.mxu0 0.0
  %1837 = vmatprep.subr.mxu0 0.0
  %1838 = vmatpush1.msra.mxu0 0.0
  %1839 = vmatprep.subr.mxu0 0.0
  %1840 = vmatpush1.msra.mxu0 0.0
  %1841 = vmatprep.subr.mxu0 0.0
  %1842 = vmatpush1.msra.mxu0 0.0
  %1843 = vmatprep.subr.mxu0 0.0
  %1844 = vmatpush1.msra.mxu0 0.0
  %1845 = vmatprep.subr.mxu0 0.0
  %1846 = vmatpush1.msra.mxu0 0.0
  %1847 = vmatprep.subr.mxu0 0.0
  %1848 = vmatpush1.msra.mxu0 0.0
  %1849 = vmatprep.subr.mxu0 0.0
  %1850 = vmatpush1.msra.mxu0 0.0
  %1851 = vmatprep.subr.mxu0 0.0
  %1852 = vmatpush1.msra.mxu0 0.0
  %1853 = vmatprep.subr.mxu0 0.0
  %1854 = vmatpush1.msra.mxu0 0.0
  %1855 = vmatprep.subr.mxu0 0.0
  %1856 = vmatpush1.msra.mxu0 0.0
  %1857 = vmatprep.subr.mxu0 0.0
  %1858 = vmatpush1.msra.mxu0 0.0
  %1859 = vmatprep.subr.mxu0 0.0
  %1860 = vmatpush1.msra.mxu0 0.0
  %1861 = vmatprep.mubr.f32.mxu0 0.0
  %1862 = vmatmul.mubr.f32.gmra.mrb[0].mxu0 %v1792
  %v1863 = vpop.f32.mrb[0].mxu0
  %v1864 = vadd.f32 0.0, %v1863
  %v1865 = vpop.f32.mrb[0].mxu0
  %1866 = vmatprep.mubr.f32.mxu0 0.0
  %1867 = vmatmul.mubr.f32.gmra.mrb[0].mxu0 %v1795
  %v1868 = vpop.f32.mrb[0].mxu0
  %v1869 = vadd.f32 0.0, %v1868
  %v1870 = vpop.f32.mrb[0].mxu0
  %1871 = vdwg.mxu0
  %v1872 = vsub.f32 %v1783, %v1864
  %v1873 = vsub.f32 %v1788, %v1869
  %v1874 = vmul.f32 %v1872, %v1872
  %v1875 = vmul.f32 %v1873, %v1873
  %v1877 = vsel %vm144, %v1874, 0
  %v1880 = vsel %vm144, %v1875, 0
  %1882 = vmatprep.subr.mxu0 0.0
  %1883 = vmatpush1.msra.mxu0 %v120
  %1884 = vmatprep.subr.mxu0 0.0
  %1885 = vmatpush1.msra.mxu0 %v121
  %1886 = vmatprep.subr.mxu0 0.0
  %1887 = vmatpush1.msra.mxu0 %v122
  %1888 = vmatprep.subr.mxu0 0.0
  %1889 = vmatpush1.msra.mxu0 %v123
  %1890 = vmatprep.subr.mxu0 0.0
  %1891 = vmatpush1.msra.mxu0 %v124
  %1892 = vmatprep.subr.mxu0 0.0
  %1893 = vmatpush1.msra.mxu0 %v125
  %1894 = vmatprep.subr.mxu0 0.0
  %1895 = vmatpush1.msra.mxu0 %v126
  %1896 = vmatprep.subr.mxu0 0.0
  %1897 = vmatpush1.msra.mxu0 %v127
  %1898 = vmatprep.subr.mxu0 0.0
  %1899 = vmatpush1.msra.mxu0 0.0
  %1900 = vmatprep.subr.mxu0 0.0
  %1901 = vmatpush1.msra.mxu0 0.0
  %1902 = vmatprep.subr.mxu0 0.0
  %1903 = vmatpush1.msra.mxu0 0.0
  %1904 = vmatprep.subr.mxu0 0.0
  %1905 = vmatpush1.msra.mxu0 0.0
  %1906 = vmatprep.subr.mxu0 0.0
  %1907 = vmatpush1.msra.mxu0 0.0
  %1908 = vmatprep.subr.mxu0 0.0
  %1909 = vmatpush1.msra.mxu0 0.0
  %1910 = vmatprep.subr.mxu0 0.0
  %1911 = vmatpush1.msra.mxu0 0.0
  %1912 = vmatprep.subr.mxu0 0.0
  %1913 = vmatpush1.msra.mxu0 0.0
  %1914 = vmatprep.subr.mxu0 0.0
  %1915 = vmatpush1.msra.mxu0 0.0
  %1916 = vmatprep.subr.mxu0 0.0
  %1917 = vmatpush1.msra.mxu0 0.0
  %1918 = vmatprep.subr.mxu0 0.0
  %1919 = vmatpush1.msra.mxu0 0.0
  %1920 = vmatprep.subr.mxu0 0.0
  %1921 = vmatpush1.msra.mxu0 0.0
  %1922 = vmatprep.subr.mxu0 0.0
  %1923 = vmatpush1.msra.mxu0 0.0
  %1924 = vmatprep.subr.mxu0 0.0
  %1925 = vmatpush1.msra.mxu0 0.0
  %1926 = vmatprep.subr.mxu0 0.0
  %1927 = vmatpush1.msra.mxu0 0.0
  %1928 = vmatprep.subr.mxu0 0.0
  %1929 = vmatpush1.msra.mxu0 0.0
  %1930 = vmatprep.subr.mxu0 0.0
  %1931 = vmatpush1.msra.mxu0 0.0
  %1932 = vmatprep.subr.mxu0 0.0
  %1933 = vmatpush1.msra.mxu0 0.0
  %1934 = vmatprep.subr.mxu0 0.0
  %1935 = vmatpush1.msra.mxu0 0.0
  %1936 = vmatprep.subr.mxu0 0.0
  %1937 = vmatpush1.msra.mxu0 0.0
  %1938 = vmatprep.subr.mxu0 0.0
  %1939 = vmatpush1.msra.mxu0 0.0
  %1940 = vmatprep.subr.mxu0 0.0
  %1941 = vmatpush1.msra.mxu0 0.0
  %1942 = vmatprep.subr.mxu0 0.0
  %1943 = vmatpush1.msra.mxu0 0.0
  %1944 = vmatprep.subr.mxu0 0.0
  %1945 = vmatpush1.msra.mxu0 0.0
  %1946 = vmatprep.mubr.f32.mxu0 0.0
  %1947 = vmatmul.mubr.f32.gmra.mrb[0].mxu0 %v1877
  %v1948 = vpop.f32.mrb[0].mxu0
  %v1949 = vadd.f32 1e-05, %v1948
  %v1950 = vpop.f32.mrb[0].mxu0
  %1951 = vmatprep.mubr.f32.mxu0 0.0
  %1952 = vmatmul.mubr.f32.gmra.mrb[0].mxu0 %v1880
  %v1953 = vpop.f32.mrb[0].mxu0
  %v1954 = vadd.f32 1e-05, %v1953
  %v1955 = vpop.f32.mrb[0].mxu0
  %1956 = vdwg.mxu0
  %v1957 = vrsqrt.pop %v1949
  %v1958 = vrsqrt.pop %v1954
  %v1959 = vmul.f32 %v1872, %v1957
  %v1960 = vmul.f32 %v1873, %v1958
  %v1961 = vld [vmem:[%s15] sm:$0x1]
  %v1963 = vlaneseq
  %v1964 = vshrl.u32 %v1963, 7
  %v1965 = vsub.s32 0, %v1964
  %v1966 = vrot.slane %v1961, %v1965
  %v1968 = vmul.f32 %v1959, %v1966
  %v1969 = vmul.f32 %v1960, %v1966
  %v1970 = vld [vmem:[%s16] sm:$0x1]
  %v1972 = vlaneseq
  %v1973 = vshrl.u32 %v1972, 7
  %v1974 = vsub.s32 0, %v1973
  %v1975 = vrot.slane %v1970, %v1974
  %v1977 = vadd.f32 %v1968, %v1975
  %v1978 = vadd.f32 %v1969, %v1975
  %v1979 = vld [vmem:[%s17] sm:$0xff]
  %v1980 = vld [vmem:[%s17 + $0x8] sm:$0xff]
  %v1981 = vld [vmem:[%s17 + $0x10] sm:$0xff]
  %v1982 = vld [vmem:[%s17 + $0x18] sm:$0xff]
  %v1983 = vld [vmem:[%s17 + $0x20] sm:$0xff]
  %v1984 = vld [vmem:[%s17 + $0x28] sm:$0xff]
  %v1985 = vld [vmem:[%s17 + $0x30] sm:$0xff]
  %v1986 = vld [vmem:[%s17 + $0x38] sm:$0xff]
  %v1987 = vld [vmem:[%s18] sm:$0xff]
  %v1988 = vld [vmem:[%s18 + $0x8] sm:$0xff]
  %v1989 = vld [vmem:[%s18 + $0x10] sm:$0xff]
  %v1990 = vld [vmem:[%s18 + $0x18] sm:$0xff]
  %v1991 = vld [vmem:[%s18 + $0x20] sm:$0xff]
  %v1992 = vld [vmem:[%s18 + $0x28] sm:$0xff]
  %v1993 = vld [vmem:[%s18 + $0x30] sm:$0xff]
  %v1994 = vld [vmem:[%s18 + $0x38] sm:$0xff]
  %v1996 = vsel %vm144, %v1977, 0
  %v1999 = vsel %vm144, %v1978, 0
  %2001 = vmatprep.subr.mxu0 0.0
  %2002 = vmatpush1.msra.mxu0 %v1987
  %2003 = vmatprep.subr.mxu0 0.0
  %2004 = vmatpush1.msra.mxu0 %v1988
  %2005 = vmatprep.subr.mxu0 0.0
  %2006 = vmatpush1.msra.mxu0 %v1989
  %2007 = vmatprep.subr.mxu0 0.0
  %2008 = vmatpush1.msra.mxu0 %v1990
  %2009 = vmatprep.subr.mxu0 0.0
  %2010 = vmatpush1.msra.mxu0 %v1991
  %2011 = vmatprep.subr.mxu0 0.0
  %2012 = vmatpush1.msra.mxu0 %v1992
  %2013 = vmatprep.subr.mxu0 0.0
  %2014 = vmatpush1.msra.mxu0 %v1993
  %2015 = vmatprep.subr.mxu0 0.0
  %2016 = vmatpush1.msra.mxu0 %v1994
  %2017 = vmatprep.subr.mxu0 0.0
  %2018 = vmatpush1.msra.mxu0 0.0
  %2019 = vmatprep.subr.mxu0 0.0
  %2020 = vmatpush1.msra.mxu0 0.0
  %2021 = vmatprep.subr.mxu0 0.0
  %2022 = vmatpush1.msra.mxu0 0.0
  %2023 = vmatprep.subr.mxu0 0.0
  %2024 = vmatpush1.msra.mxu0 0.0
  %2025 = vmatprep.subr.mxu0 0.0
  %2026 = vmatpush1.msra.mxu0 0.0
  %2027 = vmatprep.subr.mxu0 0.0
  %2028 = vmatpush1.msra.mxu0 0.0
  %2029 = vmatprep.subr.mxu0 0.0
  %2030 = vmatpush1.msra.mxu0 0.0
  %2031 = vmatprep.subr.mxu0 0.0
  %2032 = vmatpush1.msra.mxu0 0.0
  %2033 = vmatprep.subr.mxu0 0.0
  %2034 = vmatpush1.msra.mxu0 0.0
  %2035 = vmatprep.subr.mxu0 0.0
  %2036 = vmatpush1.msra.mxu0 0.0
  %2037 = vmatprep.subr.mxu0 0.0
  %2038 = vmatpush1.msra.mxu0 0.0
  %2039 = vmatprep.subr.mxu0 0.0
  %2040 = vmatpush1.msra.mxu0 0.0
  %2041 = vmatprep.subr.mxu0 0.0
  %2042 = vmatpush1.msra.mxu0 0.0
  %2043 = vmatprep.subr.mxu0 0.0
  %2044 = vmatpush1.msra.mxu0 0.0
  %2045 = vmatprep.subr.mxu0 0.0
  %2046 = vmatpush1.msra.mxu0 0.0
  %2047 = vmatprep.subr.mxu0 0.0
  %2048 = vmatpush1.msra.mxu0 0.0
  %2049 = vmatprep.subr.mxu0 0.0
  %2050 = vmatpush1.msra.mxu0 0.0
  %2051 = vmatprep.subr.mxu0 0.0
  %2052 = vmatpush1.msra.mxu0 0.0
  %2053 = vmatprep.subr.mxu0 0.0
  %2054 = vmatpush1.msra.mxu0 0.0
  %2055 = vmatprep.subr.mxu0 0.0
  %2056 = vmatpush1.msra.mxu0 0.0
  %2057 = vmatprep.subr.mxu0 0.0
  %2058 = vmatpush1.msra.mxu0 0.0
  %2059 = vmatprep.subr.mxu0 0.0
  %2060 = vmatpush1.msra.mxu0 0.0
  %2061 = vmatprep.subr.mxu0 0.0
  %2062 = vmatpush1.msra.mxu0 0.0
  %2063 = vmatprep.subr.mxu0 0.0
  %2064 = vmatpush1.msra.mxu0 0.0
  %2065 = vmatprep.mubr.f32.mxu0 0.0
  %2066 = vmatmul.mubr.f32.gmra.mrb[0].mxu0 %v1996
  %v2067 = vpop.f32.mrb[0].mxu0
  %v2068 = vadd.f32 0.0, %v2067
  %v2069 = vpop.f32.mrb[0].mxu0
  %2070 = vmatprep.mubr.f32.mxu0 0.0
  %2071 = vmatmul.mubr.f32.gmra.mrb[0].mxu0 %v1999
  %v2072 = vpop.f32.mrb[0].mxu0
  %v2073 = vadd.f32 0.0, %v2072
  %v2074 = vpop.f32.mrb[0].mxu0
  %2075 = vdwg.mxu0
  %2076 = vmatprep.subr.mxu0 0.0
  %2077 = vmatpush1.msra.mxu0 %v1979
  %2078 = vmatprep.subr.mxu0 0.0
  %2079 = vmatpush1.msra.mxu0 %v1980
  %2080 = vmatprep.subr.mxu0 0.0
  %2081 = vmatpush1.msra.mxu0 %v1981
  %2082 = vmatprep.subr.mxu0 0.0
  %2083 = vmatpush1.msra.mxu0 %v1982
  %2084 = vmatprep.subr.mxu0 0.0
  %2085 = vmatpush1.msra.mxu0 %v1983
  %2086 = vmatprep.subr.mxu0 0.0
  %2087 = vmatpush1.msra.mxu0 %v1984
  %2088 = vmatprep.subr.mxu0 0.0
  %2089 = vmatpush1.msra.mxu0 %v1985
  %2090 = vmatprep.subr.mxu0 0.0
  %2091 = vmatpush1.msra.mxu0 %v1986
  %2092 = vmatprep.subr.mxu0 0.0
  %2093 = vmatpush1.msra.mxu0 0.0
  %2094 = vmatprep.subr.mxu0 0.0
  %2095 = vmatpush1.msra.mxu0 0.0
  %2096 = vmatprep.subr.mxu0 0.0
  %2097 = vmatpush1.msra.mxu0 0.0
  %2098 = vmatprep.subr.mxu0 0.0
  %2099 = vmatpush1.msra.mxu0 0.0
  %2100 = vmatprep.subr.mxu0 0.0
  %2101 = vmatpush1.msra.mxu0 0.0
  %2102 = vmatprep.subr.mxu0 0.0
  %2103 = vmatpush1.msra.mxu0 0.0
  %2104 = vmatprep.subr.mxu0 0.0
  %2105 = vmatpush1.msra.mxu0 0.0
  %2106 = vmatprep.subr.mxu0 0.0
  %2107 = vmatpush1.msra.mxu0 0.0
  %2108 = vmatprep.subr.mxu0 0.0
  %2109 = vmatpush1.msra.mxu0 0.0
  %2110 = vmatprep.subr.mxu0 0.0
  %2111 = vmatpush1.msra.mxu0 0.0
  %2112 = vmatprep.subr.mxu0 0.0
  %2113 = vmatpush1.msra.mxu0 0.0
  %2114 = vmatprep.subr.mxu0 0.0
  %2115 = vmatpush1.msra.mxu0 0.0
  %2116 = vmatprep.subr.mxu0 0.0
  %2117 = vmatpush1.msra.mxu0 0.0
  %2118 = vmatprep.subr.mxu0 0.0
  %2119 = vmatpush1.msra.mxu0 0.0
  %2120 = vmatprep.subr.mxu0 0.0
  %2121 = vmatpush1.msra.mxu0 0.0
  %2122 = vmatprep.subr.mxu0 0.0
  %2123 = vmatpush1.msra.mxu0 0.0
  %2124 = vmatprep.subr.mxu0 0.0
  %2125 = vmatpush1.msra.mxu0 0.0
  %2126 = vmatprep.subr.mxu0 0.0
  %2127 = vmatpush1.msra.mxu0 0.0
  %2128 = vmatprep.subr.mxu0 0.0
  %2129 = vmatpush1.msra.mxu0 0.0
  %2130 = vmatprep.subr.mxu0 0.0
  %2131 = vmatpush1.msra.mxu0 0.0
  %2132 = vmatprep.subr.mxu0 0.0
  %2133 = vmatpush1.msra.mxu0 0.0
  %2134 = vmatprep.subr.mxu0 0.0
  %2135 = vmatpush1.msra.mxu0 0.0
  %2136 = vmatprep.subr.mxu0 0.0
  %2137 = vmatpush1.msra.mxu0 0.0
  %2138 = vmatprep.subr.mxu0 0.0
  %2139 = vmatpush1.msra.mxu0 0.0
  %2140 = vmatprep.mubr.f32.mxu0 0.0
  %2141 = vmatmul.mubr.f32.gmra.mrb[0].mxu0 %v146
  %v2142 = vpop.f32.mrb[0].mxu0
  %v2143 = vadd.f32 %v2068, %v2142
  %v2144 = vpop.f32.mrb[0].mxu0
  %2145 = vmatprep.mubr.f32.mxu0 0.0
  %2146 = vmatmul.mubr.f32.gmra.mrb[0].mxu0 %v149
  %v2147 = vpop.f32.mrb[0].mxu0
  %v2148 = vadd.f32 %v2073, %v2147
  %v2149 = vpop.f32.mrb[0].mxu0
  %2150 = vdwg.mxu0
  %v2151 = vld [vmem:[%s19] sm:$0x1]
  %v2153 = vlaneseq
  %v2154 = vshrl.u32 %v2153, 7
  %v2155 = vsub.s32 0, %v2154
  %v2156 = vrot.slane %v2151, %v2155
  %v2158 = vadd.f32 %v2143, %v2156
  %v2159 = vadd.f32 %v2148, %v2156
  %v2160 = vmul.f32 %v2158, %v2158
  %v2161 = vmul.f32 %v2159, %v2159
  %v2162 = vmul.f32 %v2158, %v2160
  %v2163 = vmul.f32 %v2159, %v2161
  %v2164 = vmul.f32 %v2162, 0.044715
  %v2165 = vmul.f32 %v2163, 0.044715
  %v2166 = vadd.f32 %v2158, %v2164
  %v2167 = vadd.f32 %v2159, %v2165
  %v2168 = vmul.f32 %v2166, 0.7978846
  %v2169 = vmul.f32 %v2167, 0.7978846
  %v2170 = vtanh.pop %v2168
  %v2171 = vtanh.pop %v2169
  %v2172 = vadd.f32 %v2170, 1.0
  %v2173 = vadd.f32 %v2171, 1.0
  %v2174 = vmul.f32 %v2172, 0.5
  %v2175 = vmul.f32 %v2173, 0.5
  %v2176 = vmul.f32 %v2158, %v2174
  %v2177 = vmul.f32 %v2159, %v2175
  %s2178 = scalar_lea.vmem %s7, 64
  %v2179 = vld [vmem:[%s2178] sm:$0xff]
  %v2180 = vld [vmem:[%s2178 + $0x8] sm:$0xff]
  %v2181 = vld [vmem:[%s2178 + $0x10] sm:$0xff]
  %v2182 = vld [vmem:[%s2178 + $0x18] sm:$0xff]
  %v2183 = vld [vmem:[%s2178 + $0x20] sm:$0xff]
  %v2184 = vld [vmem:[%s2178 + $0x28] sm:$0xff]
  %v2185 = vld [vmem:[%s2178 + $0x30] sm:$0xff]
  %v2186 = vld [vmem:[%s2178 + $0x38] sm:$0xff]
  %v2188 = vsel %vm144, %v2176, 0
  %v2191 = vsel %vm144, %v2177, 0
  %2193 = vmatprep.subr.mxu0 0.0
  %2194 = vmatpush1.msra.mxu0 %v2179
  %2195 = vmatprep.subr.mxu0 0.0
  %2196 = vmatpush1.msra.mxu0 %v2180
  %2197 = vmatprep.subr.mxu0 0.0
  %2198 = vmatpush1.msra.mxu0 %v2181
  %2199 = vmatprep.subr.mxu0 0.0
  %2200 = vmatpush1.msra.mxu0 %v2182
  %2201 = vmatprep.subr.mxu0 0.0
  %2202 = vmatpush1.msra.mxu0 %v2183
  %2203 = vmatprep.subr.mxu0 0.0
  %2204 = vmatpush1.msra.mxu0 %v2184
  %2205 = vmatprep.subr.mxu0 0.0
  %2206 = vmatpush1.msra.mxu0 %v2185
  %2207 = vmatprep.subr.mxu0 0.0
  %2208 = vmatpush1.msra.mxu0 %v2186
  %2209 = vmatprep.subr.mxu0 0.0
  %2210 = vmatpush1.msra.mxu0 0.0
  %2211 = vmatprep.subr.mxu0 0.0
  %2212 = vmatpush1.msra.mxu0 0.0
  %2213 = vmatprep.subr.mxu0 0.0
  %2214 = vmatpush1.msra.mxu0 0.0
  %2215 = vmatprep.subr.mxu0 0.0
  %2216 = vmatpush1.msra.mxu0 0.0
  %2217 = vmatprep.subr.mxu0 0.0
  %2218 = vmatpush1.msra.mxu0 0.0
  %2219 = vmatprep.subr.mxu0 0.0
  %2220 = vmatpush1.msra.mxu0 0.0
  %2221 = vmatprep.subr.mxu0 0.0
  %2222 = vmatpush1.msra.mxu0 0.0
  %2223 = vmatprep.subr.mxu0 0.0
  %2224 = vmatpush1.msra.mxu0 0.0
  %2225 = vmatprep.subr.mxu0 0.0
  %2226 = vmatpush1.msra.mxu0 0.0
  %2227 = vmatprep.subr.mxu0 0.0
  %2228 = vmatpush1.msra.mxu0 0.0
  %2229 = vmatprep.subr.mxu0 0.0
  %2230 = vmatpush1.msra.mxu0 0.0
  %2231 = vmatprep.subr.mxu0 0.0
  %2232 = vmatpush1.msra.mxu0 0.0
  %2233 = vmatprep.subr.mxu0 0.0
  %2234 = vmatpush1.msra.mxu0 0.0
  %2235 = vmatprep.subr.mxu0 0.0
  %2236 = vmatpush1.msra.mxu0 0.0
  %2237 = vmatprep.subr.mxu0 0.0
  %2238 = vmatpush1.msra.mxu0 0.0
  %2239 = vmatprep.subr.mxu0 0.0
  %2240 = vmatpush1.msra.mxu0 0.0
  %2241 = vmatprep.subr.mxu0 0.0
  %2242 = vmatpush1.msra.mxu0 0.0
  %2243 = vmatprep.subr.mxu0 0.0
  %2244 = vmatpush1.msra.mxu0 0.0
  %2245 = vmatprep.subr.mxu0 0.0
  %2246 = vmatpush1.msra.mxu0 0.0
  %2247 = vmatprep.subr.mxu0 0.0
  %2248 = vmatpush1.msra.mxu0 0.0
  %2249 = vmatprep.subr.mxu0 0.0
  %2250 = vmatpush1.msra.mxu0 0.0
  %2251 = vmatprep.subr.mxu0 0.0
  %2252 = vmatpush1.msra.mxu0 0.0
  %2253 = vmatprep.subr.mxu0 0.0
  %2254 = vmatpush1.msra.mxu0 0.0
  %2255 = vmatprep.subr.mxu0 0.0
  %2256 = vmatpush1.msra.mxu0 0.0
  %2257 = vmatprep.mubr.f32.mxu0 0.0
  %2258 = vmatmul.mubr.f32.gmra.mrb[0].mxu0 %v2188
  %v2259 = vpop.f32.mrb[0].mxu0
  %v2260 = vadd.f32 0.0, %v2259
  %v2261 = vpop.f32.mrb[0].mxu0
  %2262 = vmatprep.mubr.f32.mxu0 0.0
  %2263 = vmatmul.mubr.f32.gmra.mrb[0].mxu0 %v2191
  %v2264 = vpop.f32.mrb[0].mxu0
  %v2265 = vadd.f32 0.0, %v2264
  %v2266 = vpop.f32.mrb[0].mxu0
  %2267 = vdwg.mxu0
  %s2268 = scalar_lea.vmem %s8, 64
  %v2269 = vld [vmem:[%s2268] sm:$0xff]
  %v2270 = vld [vmem:[%s2268 + $0x8] sm:$0xff]
  %v2271 = vld [vmem:[%s2268 + $0x10] sm:$0xff]
  %v2272 = vld [vmem:[%s2268 + $0x18] sm:$0xff]
  %v2273 = vld [vmem:[%s2268 + $0x20] sm:$0xff]
  %v2274 = vld [vmem:[%s2268 + $0x28] sm:$0xff]
  %v2275 = vld [vmem:[%s2268 + $0x30] sm:$0xff]
  %v2276 = vld [vmem:[%s2268 + $0x38] sm:$0xff]
  %2277 = vmatprep.subr.mxu0 0.0
  %2278 = vmatpush1.msra.mxu0 %v2269
  %2279 = vmatprep.subr.mxu0 0.0
  %2280 = vmatpush1.msra.mxu0 %v2270
  %2281 = vmatprep.subr.mxu0 0.0
  %2282 = vmatpush1.msra.mxu0 %v2271
  %2283 = vmatprep.subr.mxu0 0.0
  %2284 = vmatpush1.msra.mxu0 %v2272
  %2285 = vmatprep.subr.mxu0 0.0
  %2286 = vmatpush1.msra.mxu0 %v2273
  %2287 = vmatprep.subr.mxu0 0.0
  %2288 = vmatpush1.msra.mxu0 %v2274
  %2289 = vmatprep.subr.mxu0 0.0
  %2290 = vmatpush1.msra.mxu0 %v2275
  %2291 = vmatprep.subr.mxu0 0.0
  %2292 = vmatpush1.msra.mxu0 %v2276
  %2293 = vmatprep.subr.mxu0 0.0
  %2294 = vmatpush1.msra.mxu0 0.0
  %2295 = vmatprep.subr.mxu0 0.0
  %2296 = vmatpush1.msra.mxu0 0.0
  %2297 = vmatprep.subr.mxu0 0.0
  %2298 = vmatpush1.msra.mxu0 0.0
  %2299 = vmatprep.subr.mxu0 0.0
  %2300 = vmatpush1.msra.mxu0 0.0
  %2301 = vmatprep.subr.mxu0 0.0
  %2302 = vmatpush1.msra.mxu0 0.0
  %2303 = vmatprep.subr.mxu0 0.0
  %2304 = vmatpush1.msra.mxu0 0.0
  %2305 = vmatprep.subr.mxu0 0.0
  %2306 = vmatpush1.msra.mxu0 0.0
  %2307 = vmatprep.subr.mxu0 0.0
  %2308 = vmatpush1.msra.mxu0 0.0
  %2309 = vmatprep.subr.mxu0 0.0
  %2310 = vmatpush1.msra.mxu0 0.0
  %2311 = vmatprep.subr.mxu0 0.0
  %2312 = vmatpush1.msra.mxu0 0.0
  %2313 = vmatprep.subr.mxu0 0.0
  %2314 = vmatpush1.msra.mxu0 0.0
  %2315 = vmatprep.subr.mxu0 0.0
  %2316 = vmatpush1.msra.mxu0 0.0
  %2317 = vmatprep.subr.mxu0 0.0
  %2318 = vmatpush1.msra.mxu0 0.0
  %2319 = vmatprep.subr.mxu0 0.0
  %2320 = vmatpush1.msra.mxu0 0.0
  %2321 = vmatprep.subr.mxu0 0.0
  %2322 = vmatpush1.msra.mxu0 0.0
  %2323 = vmatprep.subr.mxu0 0.0
  %2324 = vmatpush1.msra.mxu0 0.0
  %2325 = vmatprep.subr.mxu0 0.0
  %2326 = vmatpush1.msra.mxu0 0.0
  %2327 = vmatprep.subr.mxu0 0.0
  %2328 = vmatpush1.msra.mxu0 0.0
  %2329 = vmatprep.subr.mxu0 0.0
  %2330 = vmatpush1.msra.mxu0 0.0
  %2331 = vmatprep.subr.mxu0 0.0
  %2332 = vmatpush1.msra.mxu0 0.0
  %2333 = vmatprep.subr.mxu0 0.0
  %2334 = vmatpush1.msra.mxu0 0.0
  %2335 = vmatprep.subr.mxu0 0.0
  %2336 = vmatpush1.msra.mxu0 0.0
  %2337 = vmatprep.subr.mxu0 0.0
  %2338 = vmatpush1.msra.mxu0 0.0
  %2339 = vmatprep.subr.mxu0 0.0
  %2340 = vmatpush1.msra.mxu0 0.0
  %2341 = vmatprep.mubr.f32.mxu0 0.0
  %2342 = vmatmul.mubr.f32.gmra.mrb[0].mxu0 %v2188
  %v2343 = vpop.f32.mrb[0].mxu0
  %v2344 = vadd.f32 0.0, %v2343
  %v2345 = vpop.f32.mrb[0].mxu0
  %2346 = vmatprep.mubr.f32.mxu0 0.0
  %2347 = vmatmul.mubr.f32.gmra.mrb[0].mxu0 %v2191
  %v2348 = vpop.f32.mrb[0].mxu0
  %v2349 = vadd.f32 0.0, %v2348
  %v2350 = vpop.f32.mrb[0].mxu0
  %2351 = vdwg.mxu0
  %s2352 = scalar_lea.vmem %s9, 8
  %v2353 = vld [vmem:[%s2352] sm:$0xff]
  %v2355 = vsel %vm350, %v2349, 0
  %2357 = vmatprep.subr.mxu0 0.0
  %2358 = vmatpush1.msra.mxu0 %v2344
  %2359 = vmatprep.subr.mxu0 0.0
  %2360 = vmatpush1.msra.mxu0 %v2355
  %2361 = vmatprep.subr.mxu0 0.0
  %2362 = vmatpush1.msra.mxu0 0.0
  %2363 = vmatprep.subr.mxu0 0.0
  %2364 = vmatpush1.msra.mxu0 0.0
  %2365 = vmatprep.subr.mxu0 0.0
  %2366 = vmatpush1.msra.mxu0 0.0
  %2367 = vmatprep.subr.mxu0 0.0
  %2368 = vmatpush1.msra.mxu0 0.0
  %2369 = vmatprep.subr.mxu0 0.0
  %2370 = vmatpush1.msra.mxu0 0.0
  %2371 = vmatprep.subr.mxu0 0.0
  %2372 = vmatpush1.msra.mxu0 0.0
  %2373 = vmatprep.subr.mxu0 0.0
  %2374 = vmatpush1.msra.mxu0 0.0
  %2375 = vmatprep.subr.mxu0 0.0
  %2376 = vmatpush1.msra.mxu0 0.0
  %2377 = vmatprep.subr.mxu0 0.0
  %2378 = vmatpush1.msra.mxu0 0.0
  %2379 = vmatprep.subr.mxu0 0.0
  %2380 = vmatpush1.msra.mxu0 0.0
  %2381 = vmatprep.subr.mxu0 0.0
  %2382 = vmatpush1.msra.mxu0 0.0
  %2383 = vmatprep.subr.mxu0 0.0
  %2384 = vmatpush1.msra.mxu0 0.0
  %2385 = vmatprep.subr.mxu0 0.0
  %2386 = vmatpush1.msra.mxu0 0.0
  %2387 = vmatprep.subr.mxu0 0.0
  %2388 = vmatpush1.msra.mxu0 0.0
  %2389 = vmatprep.subr.mxu0 0.0
  %2390 = vmatpush1.msra.mxu0 0.0
  %2391 = vmatprep.subr.mxu0 0.0
  %2392 = vmatpush1.msra.mxu0 0.0
  %2393 = vmatprep.subr.mxu0 0.0
  %2394 = vmatpush1.msra.mxu0 0.0
  %2395 = vmatprep.subr.mxu0 0.0
  %2396 = vmatpush1.msra.mxu0 0.0
  %2397 = vmatprep.subr.mxu0 0.0
  %2398 = vmatpush1.msra.mxu0 0.0
  %2399 = vmatprep.subr.mxu0 0.0
  %2400 = vmatpush1.msra.mxu0 0.0
  %2401 = vmatprep.subr.mxu0 0.0
  %2402 = vmatpush1.msra.mxu0 0.0
  %2403 = vmatprep.subr.mxu0 0.0
  %2404 = vmatpush1.msra.mxu0 0.0
  %2405 = vmatprep.subr.mxu0 0.0
  %2406 = vmatpush1.msra.mxu0 0.0
  %2407 = vmatprep.subr.mxu0 0.0
  %2408 = vmatpush1.msra.mxu0 0.0
  %2409 = vmatprep.subr.mxu0 0.0
  %2410 = vmatpush1.msra.mxu0 0.0
  %2411 = vmatprep.subr.mxu0 0.0
  %2412 = vmatpush1.msra.mxu0 0.0
  %2413 = vmatprep.subr.mxu0 0.0
  %2414 = vmatpush1.msra.mxu0 0.0
  %2415 = vmatprep.subr.mxu0 0.0
  %2416 = vmatpush1.msra.mxu0 0.0
  %2417 = vmatprep.subr.mxu0 0.0
  %2418 = vmatpush1.msra.mxu0 0.0
  %2419 = vmatprep.subr.mxu0 0.0
  %2420 = vmatpush1.msra.mxu0 0.0
  %2421 = vmatprep.mubr.f32.mxu0 0.0
  %2422 = vmatmul.mubr.f32.gmra.mrb[0].mxu0 %v312
  %v2423 = vpop.f32.mrb[0].mxu0
  %v2424 = vadd.f32 0.0, %v2423
  %v2425 = vpop.f32.mrb[0].mxu0
  %2426 = vmatprep.mubr.f32.mxu0 0.0
  %2427 = vmatmul.mubr.f32.gmra.mrb[0].mxu0 %v315
  %v2428 = vpop.f32.mrb[0].mxu0
  %v2429 = vadd.f32 0.0, %v2428
  %v2430 = vpop.f32.mrb[0].mxu0
  %2431 = vmatprep.mubr.f32.mxu0 0.0
  %2432 = vmatmul.mubr.f32.gmra.mrb[0].mxu0 %v318
  %v2433 = vpop.f32.mrb[0].mxu0
  %v2434 = vadd.f32 0.0, %v2433
  %v2435 = vpop.f32.mrb[0].mxu0
  %2436 = vmatprep.mubr.f32.mxu0 0.0
  %2437 = vmatmul.mubr.f32.gmra.mrb[0].mxu0 %v321
  %v2438 = vpop.f32.mrb[0].mxu0
  %v2439 = vadd.f32 0.0, %v2438
  %v2440 = vpop.f32.mrb[0].mxu0
  %2441 = vmatprep.mubr.f32.mxu0 0.0
  %2442 = vmatmul.mubr.f32.gmra.mrb[0].mxu0 %v324
  %v2443 = vpop.f32.mrb[0].mxu0
  %v2444 = vadd.f32 0.0, %v2443
  %v2445 = vpop.f32.mrb[0].mxu0
  %2446 = vmatprep.mubr.f32.mxu0 0.0
  %2447 = vmatmul.mubr.f32.gmra.mrb[0].mxu0 %v327
  %v2448 = vpop.f32.mrb[0].mxu0
  %v2449 = vadd.f32 0.0, %v2448
  %v2450 = vpop.f32.mrb[0].mxu0
  %2451 = vmatprep.mubr.f32.mxu0 0.0
  %2452 = vmatmul.mubr.f32.gmra.mrb[0].mxu0 %v330
  %v2453 = vpop.f32.mrb[0].mxu0
  %v2454 = vadd.f32 0.0, %v2453
  %v2455 = vpop.f32.mrb[0].mxu0
  %2456 = vmatprep.mubr.f32.mxu0 0.0
  %2457 = vmatmul.mubr.f32.gmra.mrb[0].mxu0 %v333
  %v2458 = vpop.f32.mrb[0].mxu0
  %v2459 = vadd.f32 0.0, %v2458
  %v2460 = vpop.f32.mrb[0].mxu0
  %2461 = vmatprep.mubr.f32.mxu0 0.0
  %2462 = vmatmul.mubr.f32.gmra.mrb[0].mxu0 %v336
  %v2463 = vpop.f32.mrb[0].mxu0
  %v2464 = vadd.f32 0.0, %v2463
  %v2465 = vpop.f32.mrb[0].mxu0
  %2466 = vmatprep.mubr.f32.mxu0 0.0
  %2467 = vmatmul.mubr.f32.gmra.mrb[0].mxu0 %v339
  %v2468 = vpop.f32.mrb[0].mxu0
  %v2469 = vadd.f32 0.0, %v2468
  %v2470 = vpop.f32.mrb[0].mxu0
  %2471 = vmatprep.mubr.f32.mxu0 0.0
  %2472 = vmatmul.mubr.f32.gmra.mrb[0].mxu0 %v342
  %v2473 = vpop.f32.mrb[0].mxu0
  %v2474 = vadd.f32 0.0, %v2473
  %v2475 = vpop.f32.mrb[0].mxu0
  %2476 = vmatprep.mubr.f32.mxu0 0.0
  %2477 = vmatmul.mubr.f32.gmra.mrb[0].mxu0 %v345
  %v2478 = vpop.f32.mrb[0].mxu0
  %v2479 = vadd.f32 0.0, %v2478
  %v2480 = vpop.f32.mrb[0].mxu0
  %2481 = vmatprep.mubr.f32.mxu0 0.0
  %2482 = vmatmul.mubr.f32.gmra.mrb[0].mxu0 %v348
  %v2483 = vpop.f32.mrb[0].mxu0
  %v2484 = vadd.f32 0.0, %v2483
  %v2485 = vpop.f32.mrb[0].mxu0
  %2486 = vdwg.mxu0
  %v2488 = vsel %vm350, %v2265, 0
  %2490 = vmatprep.subr.mxu0 0.0
  %2491 = vmatpush1.msra.mxu0 %v2260
  %2492 = vmatprep.subr.mxu0 0.0
  %2493 = vmatpush1.msra.mxu0 %v2488
  %2494 = vmatprep.subr.mxu0 0.0
  %2495 = vmatpush1.msra.mxu0 0.0
  %2496 = vmatprep.subr.mxu0 0.0
  %2497 = vmatpush1.msra.mxu0 0.0
  %2498 = vmatprep.subr.mxu0 0.0
  %2499 = vmatpush1.msra.mxu0 0.0
  %2500 = vmatprep.subr.mxu0 0.0
  %2501 = vmatpush1.msra.mxu0 0.0
  %2502 = vmatprep.subr.mxu0 0.0
  %2503 = vmatpush1.msra.mxu0 0.0
  %2504 = vmatprep.subr.mxu0 0.0
  %2505 = vmatpush1.msra.mxu0 0.0
  %2506 = vmatprep.subr.mxu0 0.0
  %2507 = vmatpush1.msra.mxu0 0.0
  %2508 = vmatprep.subr.mxu0 0.0
  %2509 = vmatpush1.msra.mxu0 0.0
  %2510 = vmatprep.subr.mxu0 0.0
  %2511 = vmatpush1.msra.mxu0 0.0
  %2512 = vmatprep.subr.mxu0 0.0
  %2513 = vmatpush1.msra.mxu0 0.0
  %2514 = vmatprep.subr.mxu0 0.0
  %2515 = vmatpush1.msra.mxu0 0.0
  %2516 = vmatprep.subr.mxu0 0.0
  %2517 = vmatpush1.msra.mxu0 0.0
  %2518 = vmatprep.subr.mxu0 0.0
  %2519 = vmatpush1.msra.mxu0 0.0
  %2520 = vmatprep.subr.mxu0 0.0
  %2521 = vmatpush1.msra.mxu0 0.0
  %2522 = vmatprep.subr.mxu0 0.0
  %2523 = vmatpush1.msra.mxu0 0.0
  %2524 = vmatprep.subr.mxu0 0.0
  %2525 = vmatpush1.msra.mxu0 0.0
  %2526 = vmatprep.subr.mxu0 0.0
  %2527 = vmatpush1.msra.mxu0 0.0
  %2528 = vmatprep.subr.mxu0 0.0
  %2529 = vmatpush1.msra.mxu0 0.0
  %2530 = vmatprep.subr.mxu0 0.0
  %2531 = vmatpush1.msra.mxu0 0.0
  %2532 = vmatprep.subr.mxu0 0.0
  %2533 = vmatpush1.msra.mxu0 0.0
  %2534 = vmatprep.subr.mxu0 0.0
  %2535 = vmatpush1.msra.mxu0 0.0
  %2536 = vmatprep.subr.mxu0 0.0
  %2537 = vmatpush1.msra.mxu0 0.0
  %2538 = vmatprep.subr.mxu0 0.0
  %2539 = vmatpush1.msra.mxu0 0.0
  %2540 = vmatprep.subr.mxu0 0.0
  %2541 = vmatpush1.msra.mxu0 0.0
  %2542 = vmatprep.subr.mxu0 0.0
  %2543 = vmatpush1.msra.mxu0 0.0
  %2544 = vmatprep.subr.mxu0 0.0
  %2545 = vmatpush1.msra.mxu0 0.0
  %2546 = vmatprep.subr.mxu0 0.0
  %2547 = vmatpush1.msra.mxu0 0.0
  %2548 = vmatprep.subr.mxu0 0.0
  %2549 = vmatpush1.msra.mxu0 0.0
  %2550 = vmatprep.subr.mxu0 0.0
  %2551 = vmatpush1.msra.mxu0 0.0
  %2552 = vmatprep.subr.mxu0 0.0
  %2553 = vmatpush1.msra.mxu0 0.0
  %2554 = vmatprep.mubr.f32.mxu0 0.0
  %2555 = vmatmul.mubr.f32.gmra.mrb[0].mxu0 %v485
  %v2556 = vpop.f32.mrb[0].mxu0
  %v2557 = vadd.f32 %v2424, %v2556
  %v2558 = vpop.f32.mrb[0].mxu0
  %2559 = vmatprep.mubr.f32.mxu0 0.0
  %2560 = vmatmul.mubr.f32.gmra.mrb[0].mxu0 %v488
  %v2561 = vpop.f32.mrb[0].mxu0
  %v2562 = vadd.f32 %v2429, %v2561
  %v2563 = vpop.f32.mrb[0].mxu0
  %2564 = vmatprep.mubr.f32.mxu0 0.0
  %2565 = vmatmul.mubr.f32.gmra.mrb[0].mxu0 %v491
  %v2566 = vpop.f32.mrb[0].mxu0
  %v2567 = vadd.f32 %v2434, %v2566
  %v2568 = vpop.f32.mrb[0].mxu0
  %2569 = vmatprep.mubr.f32.mxu0 0.0
  %2570 = vmatmul.mubr.f32.gmra.mrb[0].mxu0 %v494
  %v2571 = vpop.f32.mrb[0].mxu0
  %v2572 = vadd.f32 %v2439, %v2571
  %v2573 = vpop.f32.mrb[0].mxu0
  %2574 = vmatprep.mubr.f32.mxu0 0.0
  %2575 = vmatmul.mubr.f32.gmra.mrb[0].mxu0 %v497
  %v2576 = vpop.f32.mrb[0].mxu0
  %v2577 = vadd.f32 %v2444, %v2576
  %v2578 = vpop.f32.mrb[0].mxu0
  %2579 = vmatprep.mubr.f32.mxu0 0.0
  %2580 = vmatmul.mubr.f32.gmra.mrb[0].mxu0 %v500
  %v2581 = vpop.f32.mrb[0].mxu0
  %v2582 = vadd.f32 %v2449, %v2581
  %v2583 = vpop.f32.mrb[0].mxu0
  %2584 = vmatprep.mubr.f32.mxu0 0.0
  %2585 = vmatmul.mubr.f32.gmra.mrb[0].mxu0 %v503
  %v2586 = vpop.f32.mrb[0].mxu0
  %v2587 = vadd.f32 %v2454, %v2586
  %v2588 = vpop.f32.mrb[0].mxu0
  %2589 = vmatprep.mubr.f32.mxu0 0.0
  %2590 = vmatmul.mubr.f32.gmra.mrb[0].mxu0 %v506
  %v2591 = vpop.f32.mrb[0].mxu0
  %v2592 = vadd.f32 %v2459, %v2591
  %v2593 = vpop.f32.mrb[0].mxu0
  %2594 = vmatprep.mubr.f32.mxu0 0.0
  %2595 = vmatmul.mubr.f32.gmra.mrb[0].mxu0 %v509
  %v2596 = vpop.f32.mrb[0].mxu0
  %v2597 = vadd.f32 %v2464, %v2596
  %v2598 = vpop.f32.mrb[0].mxu0
  %2599 = vmatprep.mubr.f32.mxu0 0.0
  %2600 = vmatmul.mubr.f32.gmra.mrb[0].mxu0 %v512
  %v2601 = vpop.f32.mrb[0].mxu0
  %v2602 = vadd.f32 %v2469, %v2601
  %v2603 = vpop.f32.mrb[0].mxu0
  %2604 = vmatprep.mubr.f32.mxu0 0.0
  %2605 = vmatmul.mubr.f32.gmra.mrb[0].mxu0 %v515
  %v2606 = vpop.f32.mrb[0].mxu0
  %v2607 = vadd.f32 %v2474, %v2606
  %v2608 = vpop.f32.mrb[0].mxu0
  %2609 = vmatprep.mubr.f32.mxu0 0.0
  %2610 = vmatmul.mubr.f32.gmra.mrb[0].mxu0 %v518
  %v2611 = vpop.f32.mrb[0].mxu0
  %v2612 = vadd.f32 %v2479, %v2611
  %v2613 = vpop.f32.mrb[0].mxu0
  %2614 = vmatprep.mubr.f32.mxu0 0.0
  %2615 = vmatmul.mubr.f32.gmra.mrb[0].mxu0 %v521
  %v2616 = vpop.f32.mrb[0].mxu0
  %v2617 = vadd.f32 %v2484, %v2616
  %v2618 = vpop.f32.mrb[0].mxu0
  %2619 = vdwg.mxu0
  %2620 = vmatprep.subr.mxu0 0.0
  %2621 = vmatpush1.msra.mxu0 %v2353
  %2622 = vmatprep.subr.mxu0 0.0
  %2623 = vmatpush1.msra.mxu0 0.0
  %2624 = vmatprep.subr.mxu0 0.0
  %2625 = vmatpush1.msra.mxu0 0.0
  %2626 = vmatprep.subr.mxu0 0.0
  %2627 = vmatpush1.msra.mxu0 0.0
  %2628 = vmatprep.subr.mxu0 0.0
  %2629 = vmatpush1.msra.mxu0 0.0
  %2630 = vmatprep.subr.mxu0 0.0
  %2631 = vmatpush1.msra.mxu0 0.0
  %2632 = vmatprep.subr.mxu0 0.0
  %2633 = vmatpush1.msra.mxu0 0.0
  %2634 = vmatprep.subr.mxu0 0.0
  %2635 = vmatpush1.msra.mxu0 0.0
  %2636 = vmatprep.subr.mxu0 0.0
  %2637 = vmatpush1.msra.mxu0 0.0
  %2638 = vmatprep.subr.mxu0 0.0
  %2639 = vmatpush1.msra.mxu0 0.0
  %2640 = vmatprep.subr.mxu0 0.0
  %2641 = vmatpush1.msra.mxu0 0.0
  %2642 = vmatprep.subr.mxu0 0.0
  %2643 = vmatpush1.msra.mxu0 0.0
  %2644 = vmatprep.subr.mxu0 0.0
  %2645 = vmatpush1.msra.mxu0 0.0
  %2646 = vmatprep.subr.mxu0 0.0
  %2647 = vmatpush1.msra.mxu0 0.0
  %2648 = vmatprep.subr.mxu0 0.0
  %2649 = vmatpush1.msra.mxu0 0.0
  %2650 = vmatprep.subr.mxu0 0.0
  %2651 = vmatpush1.msra.mxu0 0.0
  %2652 = vmatprep.subr.mxu0 0.0
  %2653 = vmatpush1.msra.mxu0 0.0
  %2654 = vmatprep.subr.mxu0 0.0
  %2655 = vmatpush1.msra.mxu0 0.0
  %2656 = vmatprep.subr.mxu0 0.0
  %2657 = vmatpush1.msra.mxu0 0.0
  %2658 = vmatprep.subr.mxu0 0.0
  %2659 = vmatpush1.msra.mxu0 0.0
  %2660 = vmatprep.subr.mxu0 0.0
  %2661 = vmatpush1.msra.mxu0 0.0
  %2662 = vmatprep.subr.mxu0 0.0
  %2663 = vmatpush1.msra.mxu0 0.0
  %2664 = vmatprep.subr.mxu0 0.0
  %2665 = vmatpush1.msra.mxu0 0.0
  %2666 = vmatprep.subr.mxu0 0.0
  %2667 = vmatpush1.msra.mxu0 0.0
  %2668 = vmatprep.subr.mxu0 0.0
  %2669 = vmatpush1.msra.mxu0 0.0
  %2670 = vmatprep.subr.mxu0 0.0
  %2671 = vmatpush1.msra.mxu0 0.0
  %2672 = vmatprep.subr.mxu0 0.0
  %2673 = vmatpush1.msra.mxu0 0.0
  %2674 = vmatprep.subr.mxu0 0.0
  %2675 = vmatpush1.msra.mxu0 0.0
  %2676 = vmatprep.subr.mxu0 0.0
  %2677 = vmatpush1.msra.mxu0 0.0
  %2678 = vmatprep.subr.mxu0 0.0
  %2679 = vmatpush1.msra.mxu0 0.0
  %2680 = vmatprep.subr.mxu0 0.0
  %2681 = vmatpush1.msra.mxu0 0.0
  %2682 = vmatprep.subr.mxu0 0.0
  %2683 = vmatpush1.msra.mxu0 0.0
  %2684 = vmatprep.mubr.f32.mxu0 0.0
  %2685 = vmatmul.mubr.f32.gmra.mrb[0].mxu0 %v658
  %v2686 = vpop.f32.mrb[0].mxu0
  %v2687 = vadd.f32 %v2557, %v2686
  %v2688 = vpop.f32.mrb[0].mxu0
  %2689 = vmatprep.mubr.f32.mxu0 0.0
  %2690 = vmatmul.mubr.f32.gmra.mrb[0].mxu0 %v661
  %v2691 = vpop.f32.mrb[0].mxu0
  %v2692 = vadd.f32 %v2562, %v2691
  %v2693 = vpop.f32.mrb[0].mxu0
  %2694 = vmatprep.mubr.f32.mxu0 0.0
  %2695 = vmatmul.mubr.f32.gmra.mrb[0].mxu0 %v664
  %v2696 = vpop.f32.mrb[0].mxu0
  %v2697 = vadd.f32 %v2567, %v2696
  %v2698 = vpop.f32.mrb[0].mxu0
  %2699 = vmatprep.mubr.f32.mxu0 0.0
  %2700 = vmatmul.mubr.f32.gmra.mrb[0].mxu0 %v667
  %v2701 = vpop.f32.mrb[0].mxu0
  %v2702 = vadd.f32 %v2572, %v2701
  %v2703 = vpop.f32.mrb[0].mxu0
  %2704 = vmatprep.mubr.f32.mxu0 0.0
  %2705 = vmatmul.mubr.f32.gmra.mrb[0].mxu0 %v670
  %v2706 = vpop.f32.mrb[0].mxu0
  %v2707 = vadd.f32 %v2577, %v2706
  %v2708 = vpop.f32.mrb[0].mxu0
  %2709 = vmatprep.mubr.f32.mxu0 0.0
  %2710 = vmatmul.mubr.f32.gmra.mrb[0].mxu0 %v673
  %v2711 = vpop.f32.mrb[0].mxu0
  %v2712 = vadd.f32 %v2582, %v2711
  %v2713 = vpop.f32.mrb[0].mxu0
  %2714 = vmatprep.mubr.f32.mxu0 0.0
  %2715 = vmatmul.mubr.f32.gmra.mrb[0].mxu0 %v676
  %v2716 = vpop.f32.mrb[0].mxu0
  %v2717 = vadd.f32 %v2587, %v2716
  %v2718 = vpop.f32.mrb[0].mxu0
  %2719 = vmatprep.mubr.f32.mxu0 0.0
  %2720 = vmatmul.mubr.f32.gmra.mrb[0].mxu0 %v679
  %v2721 = vpop.f32.mrb[0].mxu0
  %v2722 = vadd.f32 %v2592, %v2721
  %v2723 = vpop.f32.mrb[0].mxu0
  %2724 = vmatprep.mubr.f32.mxu0 0.0
  %2725 = vmatmul.mubr.f32.gmra.mrb[0].mxu0 %v682
  %v2726 = vpop.f32.mrb[0].mxu0
  %v2727 = vadd.f32 %v2597, %v2726
  %v2728 = vpop.f32.mrb[0].mxu0
  %2729 = vmatprep.mubr.f32.mxu0 0.0
  %2730 = vmatmul.mubr.f32.gmra.mrb[0].mxu0 %v685
  %v2731 = vpop.f32.mrb[0].mxu0
  %v2732 = vadd.f32 %v2602, %v2731
  %v2733 = vpop.f32.mrb[0].mxu0
  %2734 = vmatprep.mubr.f32.mxu0 0.0
  %2735 = vmatmul.mubr.f32.gmra.mrb[0].mxu0 %v688
  %v2736 = vpop.f32.mrb[0].mxu0
  %v2737 = vadd.f32 %v2607, %v2736
  %v2738 = vpop.f32.mrb[0].mxu0
  %2739 = vmatprep.mubr.f32.mxu0 0.0
  %2740 = vmatmul.mubr.f32.gmra.mrb[0].mxu0 %v691
  %v2741 = vpop.f32.mrb[0].mxu0
  %v2742 = vadd.f32 %v2612, %v2741
  %v2743 = vpop.f32.mrb[0].mxu0
  %2744 = vmatprep.mubr.f32.mxu0 0.0
  %2745 = vmatmul.mubr.f32.gmra.mrb[0].mxu0 %v694
  %v2746 = vpop.f32.mrb[0].mxu0
  %v2747 = vadd.f32 %v2617, %v2746
  %v2748 = vpop.f32.mrb[0].mxu0
  %2749 = vdwg.mxu0
  %s2750 = scalar_lea.vmem %s10, 1
  %v2751 = vld [vmem:[%s2750] sm:$0x1]
  %v2753 = vlaneseq
  %v2754 = vshrl.u32 %v2753, 7
  %v2755 = vsub.s32 0, %v2754
  %v2756 = vrot.slane %v2751, %v2755
  %v2758 = vadd.f32 %v2687, %v2756
  %v2759 = vadd.f32 %v2692, %v2756
  %v2760 = vadd.f32 %v2697, %v2756
  %v2761 = vadd.f32 %v2702, %v2756
  %v2762 = vadd.f32 %v2707, %v2756
  %v2763 = vadd.f32 %v2712, %v2756
  %v2764 = vadd.f32 %v2717, %v2756
  %v2765 = vadd.f32 %v2722, %v2756
  %v2766 = vadd.f32 %v2727, %v2756
  %v2767 = vadd.f32 %v2732, %v2756
  %v2768 = vadd.f32 %v2737, %v2756
  %v2769 = vadd.f32 %v2742, %v2756
  %v2770 = vadd.f32 %v2747, %v2756
  %v2771 = vmul.f32 %v2758, %v2758
  %v2772 = vmul.f32 %v2759, %v2759
  %v2773 = vmul.f32 %v2760, %v2760
  %v2774 = vmul.f32 %v2761, %v2761
  %v2775 = vmul.f32 %v2762, %v2762
  %v2776 = vmul.f32 %v2763, %v2763
  %v2777 = vmul.f32 %v2764, %v2764
  %v2778 = vmul.f32 %v2765, %v2765
  %v2779 = vmul.f32 %v2766, %v2766
  %v2780 = vmul.f32 %v2767, %v2767
  %v2781 = vmul.f32 %v2768, %v2768
  %v2782 = vmul.f32 %v2769, %v2769
  %v2783 = vmul.f32 %v2770, %v2770
  %v2784 = vmul.f32 %v2758, %v2771
  %v2785 = vmul.f32 %v2759, %v2772
  %v2786 = vmul.f32 %v2760, %v2773
  %v2787 = vmul.f32 %v2761, %v2774
  %v2788 = vmul.f32 %v2762, %v2775
  %v2789 = vmul.f32 %v2763, %v2776
  %v2790 = vmul.f32 %v2764, %v2777
  %v2791 = vmul.f32 %v2765, %v2778
  %v2792 = vmul.f32 %v2766, %v2779
  %v2793 = vmul.f32 %v2767, %v2780
  %v2794 = vmul.f32 %v2768, %v2781
  %v2795 = vmul.f32 %v2769, %v2782
  %v2796 = vmul.f32 %v2770, %v2783
  %v2797 = vmul.f32 %v2784, 0.044715
  %v2798 = vmul.f32 %v2785, 0.044715
  %v2799 = vmul.f32 %v2786, 0.044715
  %v2800 = vmul.f32 %v2787, 0.044715
  %v2801 = vmul.f32 %v2788, 0.044715
  %v2802 = vmul.f32 %v2789, 0.044715
  %v2803 = vmul.f32 %v2790, 0.044715
  %v2804 = vmul.f32 %v2791, 0.044715
  %v2805 = vmul.f32 %v2792, 0.044715
  %v2806 = vmul.f32 %v2793, 0.044715
  %v2807 = vmul.f32 %v2794, 0.044715
  %v2808 = vmul.f32 %v2795, 0.044715
  %v2809 = vmul.f32 %v2796, 0.044715
  %v2810 = vadd.f32 %v2758, %v2797
  %v2811 = vadd.f32 %v2759, %v2798
  %v2812 = vadd.f32 %v2760, %v2799
  %v2813 = vadd.f32 %v2761, %v2800
  %v2814 = vadd.f32 %v2762, %v2801
  %v2815 = vadd.f32 %v2763, %v2802
  %v2816 = vadd.f32 %v2764, %v2803
  %v2817 = vadd.f32 %v2765, %v2804
  %v2818 = vadd.f32 %v2766, %v2805
  %v2819 = vadd.f32 %v2767, %v2806
  %v2820 = vadd.f32 %v2768, %v2807
  %v2821 = vadd.f32 %v2769, %v2808
  %v2822 = vadd.f32 %v2770, %v2809
  %v2823 = vmul.f32 %v2810, 0.7978846
  %v2824 = vmul.f32 %v2811, 0.7978846
  %v2825 = vmul.f32 %v2812, 0.7978846
  %v2826 = vmul.f32 %v2813, 0.7978846
  %v2827 = vmul.f32 %v2814, 0.7978846
  %v2828 = vmul.f32 %v2815, 0.7978846
  %v2829 = vmul.f32 %v2816, 0.7978846
  %v2830 = vmul.f32 %v2817, 0.7978846
  %v2831 = vmul.f32 %v2818, 0.7978846
  %v2832 = vmul.f32 %v2819, 0.7978846
  %v2833 = vmul.f32 %v2820, 0.7978846
  %v2834 = vmul.f32 %v2821, 0.7978846
  %v2835 = vmul.f32 %v2822, 0.7978846
  %v2836 = vtanh.pop %v2823
  %v2837 = vtanh.pop %v2824
  %v2838 = vtanh.pop %v2825
  %v2839 = vtanh.pop %v2826
  %v2840 = vtanh.pop %v2827
  %v2841 = vtanh.pop %v2828
  %v2842 = vtanh.pop %v2829
  %v2843 = vtanh.pop %v2830
  %v2844 = vtanh.pop %v2831
  %v2845 = vtanh.pop %v2832
  %v2846 = vtanh.pop %v2833
  %v2847 = vtanh.pop %v2834
  %v2848 = vtanh.pop %v2835
  %v2849 = vadd.f32 %v2836, 1.0
  %v2850 = vadd.f32 %v2837, 1.0
  %v2851 = vadd.f32 %v2838, 1.0
  %v2852 = vadd.f32 %v2839, 1.0
  %v2853 = vadd.f32 %v2840, 1.0
  %v2854 = vadd.f32 %v2841, 1.0
  %v2855 = vadd.f32 %v2842, 1.0
  %v2856 = vadd.f32 %v2843, 1.0
  %v2857 = vadd.f32 %v2844, 1.0
  %v2858 = vadd.f32 %v2845, 1.0
  %v2859 = vadd.f32 %v2846, 1.0
  %v2860 = vadd.f32 %v2847, 1.0
  %v2861 = vadd.f32 %v2848, 1.0
  %v2862 = vmul.f32 %v2849, 0.5
  %v2863 = vmul.f32 %v2850, 0.5
  %v2864 = vmul.f32 %v2851, 0.5
  %v2865 = vmul.f32 %v2852, 0.5
  %v2866 = vmul.f32 %v2853, 0.5
  %v2867 = vmul.f32 %v2854, 0.5
  %v2868 = vmul.f32 %v2855, 0.5
  %v2869 = vmul.f32 %v2856, 0.5
  %v2870 = vmul.f32 %v2857, 0.5
  %v2871 = vmul.f32 %v2858, 0.5
  %v2872 = vmul.f32 %v2859, 0.5
  %v2873 = vmul.f32 %v2860, 0.5
  %v2874 = vmul.f32 %v2861, 0.5
  %v2875 = vmul.f32 %v2758, %v2862
  %v2876 = vmul.f32 %v2759, %v2863
  %v2877 = vmul.f32 %v2760, %v2864
  %v2878 = vmul.f32 %v2761, %v2865
  %v2879 = vmul.f32 %v2762, %v2866
  %v2880 = vmul.f32 %v2763, %v2867
  %v2881 = vmul.f32 %v2764, %v2868
  %v2882 = vmul.f32 %v2765, %v2869
  %v2883 = vmul.f32 %v2766, %v2870
  %v2884 = vmul.f32 %v2767, %v2871
  %v2885 = vmul.f32 %v2768, %v2872
  %v2886 = vmul.f32 %v2769, %v2873
  %v2887 = vmul.f32 %v2770, %v2874
  %s2888 = scalar_lea.vmem %s11, 64
  %v2889 = vld [vmem:[%s2888] sm:$0xff]
  %v2890 = vld [vmem:[%s2888 + $0x8] sm:$0xff]
  %v2891 = vld [vmem:[%s2888 + $0x10] sm:$0xff]
  %v2892 = vld [vmem:[%s2888 + $0x18] sm:$0xff]
  %v2893 = vld [vmem:[%s2888 + $0x20] sm:$0xff]
  %v2894 = vld [vmem:[%s2888 + $0x28] sm:$0xff]
  %v2895 = vld [vmem:[%s2888 + $0x30] sm:$0xff]
  %v2896 = vld [vmem:[%s2888 + $0x38] sm:$0xff]
  %s2897 = scalar_lea.vmem %s12, 1
  %v2898 = vld [vmem:[%s2897] sm:$0x1]
  %v2900 = vlaneseq
  %v2901 = vshrl.u32 %v2900, 7
  %v2902 = vsub.s32 0, %v2901
  %v2903 = vrot.slane %v2898, %v2902
  %v2906 = vsel %vm144, %v2875, 0
  %v2909 = vsel %vm144, %v2876, 0
  %v2912 = vsel %vm144, %v2877, 0
  %v2915 = vsel %vm144, %v2878, 0
  %v2918 = vsel %vm144, %v2879, 0
  %v2921 = vsel %vm144, %v2880, 0
  %v2924 = vsel %vm144, %v2881, 0
  %v2927 = vsel %vm144, %v2882, 0
  %v2930 = vsel %vm144, %v2883, 0
  %v2933 = vsel %vm144, %v2884, 0
  %v2936 = vsel %vm144, %v2885, 0
  %v2939 = vsel %vm144, %v2886, 0
  %v2942 = vsel %vm144, %v2887, 0
  %2944 = vmatprep.subr.mxu0 0.0
  %2945 = vmatpush1.msra.mxu0 %v2889
  %2946 = vmatprep.subr.mxu0 0.0
  %2947 = vmatpush1.msra.mxu0 %v2890
  %2948 = vmatprep.subr.mxu0 0.0
  %2949 = vmatpush1.msra.mxu0 %v2891
  %2950 = vmatprep.subr.mxu0 0.0
  %2951 = vmatpush1.msra.mxu0 %v2892
  %2952 = vmatprep.subr.mxu0 0.0
  %2953 = vmatpush1.msra.mxu0 %v2893
  %2954 = vmatprep.subr.mxu0 0.0
  %2955 = vmatpush1.msra.mxu0 %v2894
  %2956 = vmatprep.subr.mxu0 0.0
  %2957 = vmatpush1.msra.mxu0 %v2895
  %2958 = vmatprep.subr.mxu0 0.0
  %2959 = vmatpush1.msra.mxu0 %v2896
  %2960 = vmatprep.subr.mxu0 0.0
  %2961 = vmatpush1.msra.mxu0 0.0
  %2962 = vmatprep.subr.mxu0 0.0
  %2963 = vmatpush1.msra.mxu0 0.0
  %2964 = vmatprep.subr.mxu0 0.0
  %2965 = vmatpush1.msra.mxu0 0.0
  %2966 = vmatprep.subr.mxu0 0.0
  %2967 = vmatpush1.msra.mxu0 0.0
  %2968 = vmatprep.subr.mxu0 0.0
  %2969 = vmatpush1.msra.mxu0 0.0
  %2970 = vmatprep.subr.mxu0 0.0
  %2971 = vmatpush1.msra.mxu0 0.0
  %2972 = vmatprep.subr.mxu0 0.0
  %2973 = vmatpush1.msra.mxu0 0.0
  %2974 = vmatprep.subr.mxu0 0.0
  %2975 = vmatpush1.msra.mxu0 0.0
  %2976 = vmatprep.subr.mxu0 0.0
  %2977 = vmatpush1.msra.mxu0 0.0
  %2978 = vmatprep.subr.mxu0 0.0
  %2979 = vmatpush1.msra.mxu0 0.0
  %2980 = vmatprep.subr.mxu0 0.0
  %2981 = vmatpush1.msra.mxu0 0.0
  %2982 = vmatprep.subr.mxu0 0.0
  %2983 = vmatpush1.msra.mxu0 0.0
  %2984 = vmatprep.subr.mxu0 0.0
  %2985 = vmatpush1.msra.mxu0 0.0
  %2986 = vmatprep.subr.mxu0 0.0
  %2987 = vmatpush1.msra.mxu0 0.0
  %2988 = vmatprep.subr.mxu0 0.0
  %2989 = vmatpush1.msra.mxu0 0.0
  %2990 = vmatprep.subr.mxu0 0.0
  %2991 = vmatpush1.msra.mxu0 0.0
  %2992 = vmatprep.subr.mxu0 0.0
  %2993 = vmatpush1.msra.mxu0 0.0
  %2994 = vmatprep.subr.mxu0 0.0
  %2995 = vmatpush1.msra.mxu0 0.0
  %2996 = vmatprep.subr.mxu0 0.0
  %2997 = vmatpush1.msra.mxu0 0.0
  %2998 = vmatprep.subr.mxu0 0.0
  %2999 = vmatpush1.msra.mxu0 0.0
  %3000 = vmatprep.subr.mxu0 0.0
  %3001 = vmatpush1.msra.mxu0 0.0
  %3002 = vmatprep.subr.mxu0 0.0
  %3003 = vmatpush1.msra.mxu0 0.0
  %3004 = vmatprep.subr.mxu0 0.0
  %3005 = vmatpush1.msra.mxu0 0.0
  %3006 = vmatprep.subr.mxu0 0.0
  %3007 = vmatpush1.msra.mxu0 0.0
  %3008 = vmatprep.mubr.f32.mxu0 0.0
  %3009 = vmatmul.mubr.f32.gmra.mrb[0].mxu0 %v2906
  %v3010 = vpop.f32.mrb[0].mxu0
  %v3011 = vadd.f32 %v2903, %v3010
  %v3012 = vpop.f32.mrb[0].mxu0
  %3013 = vmatprep.mubr.f32.mxu0 0.0
  %3014 = vmatmul.mubr.f32.gmra.mrb[0].mxu0 %v2909
  %v3015 = vpop.f32.mrb[0].mxu0
  %v3016 = vadd.f32 %v2903, %v3015
  %v3017 = vpop.f32.mrb[0].mxu0
  %3018 = vmatprep.mubr.f32.mxu0 0.0
  %3019 = vmatmul.mubr.f32.gmra.mrb[0].mxu0 %v2912
  %v3020 = vpop.f32.mrb[0].mxu0
  %v3021 = vadd.f32 %v2903, %v3020
  %v3022 = vpop.f32.mrb[0].mxu0
  %3023 = vmatprep.mubr.f32.mxu0 0.0
  %3024 = vmatmul.mubr.f32.gmra.mrb[0].mxu0 %v2915
  %v3025 = vpop.f32.mrb[0].mxu0
  %v3026 = vadd.f32 %v2903, %v3025
  %v3027 = vpop.f32.mrb[0].mxu0
  %3028 = vmatprep.mubr.f32.mxu0 0.0
  %3029 = vmatmul.mubr.f32.gmra.mrb[0].mxu0 %v2918
  %v3030 = vpop.f32.mrb[0].mxu0
  %v3031 = vadd.f32 %v2903, %v3030
  %v3032 = vpop.f32.mrb[0].mxu0
  %3033 = vmatprep.mubr.f32.mxu0 0.0
  %3034 = vmatmul.mubr.f32.gmra.mrb[0].mxu0 %v2921
  %v3035 = vpop.f32.mrb[0].mxu0
  %v3036 = vadd.f32 %v2903, %v3035
  %v3037 = vpop.f32.mrb[0].mxu0
  %3038 = vmatprep.mubr.f32.mxu0 0.0
  %3039 = vmatmul.mubr.f32.gmra.mrb[0].mxu0 %v2924
  %v3040 = vpop.f32.mrb[0].mxu0
  %v3041 = vadd.f32 %v2903, %v3040
  %v3042 = vpop.f32.mrb[0].mxu0
  %3043 = vmatprep.mubr.f32.mxu0 0.0
  %3044 = vmatmul.mubr.f32.gmra.mrb[0].mxu0 %v2927
  %v3045 = vpop.f32.mrb[0].mxu0
  %v3046 = vadd.f32 %v2903, %v3045
  %v3047 = vpop.f32.mrb[0].mxu0
  %3048 = vmatprep.mubr.f32.mxu0 0.0
  %3049 = vmatmul.mubr.f32.gmra.mrb[0].mxu0 %v2930
  %v3050 = vpop.f32.mrb[0].mxu0
  %v3051 = vadd.f32 %v2903, %v3050
  %v3052 = vpop.f32.mrb[0].mxu0
  %3053 = vmatprep.mubr.f32.mxu0 0.0
  %3054 = vmatmul.mubr.f32.gmra.mrb[0].mxu0 %v2933
  %v3055 = vpop.f32.mrb[0].mxu0
  %v3056 = vadd.f32 %v2903, %v3055
  %v3057 = vpop.f32.mrb[0].mxu0
  %3058 = vmatprep.mubr.f32.mxu0 0.0
  %3059 = vmatmul.mubr.f32.gmra.mrb[0].mxu0 %v2936
  %v3060 = vpop.f32.mrb[0].mxu0
  %v3061 = vadd.f32 %v2903, %v3060
  %v3062 = vpop.f32.mrb[0].mxu0
  %3063 = vmatprep.mubr.f32.mxu0 0.0
  %3064 = vmatmul.mubr.f32.gmra.mrb[0].mxu0 %v2939
  %v3065 = vpop.f32.mrb[0].mxu0
  %v3066 = vadd.f32 %v2903, %v3065
  %v3067 = vpop.f32.mrb[0].mxu0
  %3068 = vmatprep.mubr.f32.mxu0 0.0
  %3069 = vmatmul.mubr.f32.gmra.mrb[0].mxu0 %v2942
  %v3070 = vpop.f32.mrb[0].mxu0
  %v3071 = vadd.f32 %v2903, %v3070
  %v3072 = vpop.f32.mrb[0].mxu0
  %3073 = vdwg.mxu0
  %v3074 = vmul.f32 %v3011, %v3011
  %v3075 = vmul.f32 %v3016, %v3016
  %v3076 = vmul.f32 %v3021, %v3021
  %v3077 = vmul.f32 %v3026, %v3026
  %v3078 = vmul.f32 %v3031, %v3031
  %v3079 = vmul.f32 %v3036, %v3036
  %v3080 = vmul.f32 %v3041, %v3041
  %v3081 = vmul.f32 %v3046, %v3046
  %v3082 = vmul.f32 %v3051, %v3051
  %v3083 = vmul.f32 %v3056, %v3056
  %v3084 = vmul.f32 %v3061, %v3061
  %v3085 = vmul.f32 %v3066, %v3066
  %v3086 = vmul.f32 %v3071, %v3071
  %v3087 = vmul.f32 %v3011, %v3074
  %v3088 = vmul.f32 %v3016, %v3075
  %v3089 = vmul.f32 %v3021, %v3076
  %v3090 = vmul.f32 %v3026, %v3077
  %v3091 = vmul.f32 %v3031, %v3078
  %v3092 = vmul.f32 %v3036, %v3079
  %v3093 = vmul.f32 %v3041, %v3080
  %v3094 = vmul.f32 %v3046, %v3081
  %v3095 = vmul.f32 %v3051, %v3082
  %v3096 = vmul.f32 %v3056, %v3083
  %v3097 = vmul.f32 %v3061, %v3084
  %v3098 = vmul.f32 %v3066, %v3085
  %v3099 = vmul.f32 %v3071, %v3086
  %v3100 = vmul.f32 %v3087, 0.044715
  %v3101 = vmul.f32 %v3088, 0.044715
  %v3102 = vmul.f32 %v3089, 0.044715
  %v3103 = vmul.f32 %v3090, 0.044715
  %v3104 = vmul.f32 %v3091, 0.044715
  %v3105 = vmul.f32 %v3092, 0.044715
  %v3106 = vmul.f32 %v3093, 0.044715
  %v3107 = vmul.f32 %v3094, 0.044715
  %v3108 = vmul.f32 %v3095, 0.044715
  %v3109 = vmul.f32 %v3096, 0.044715
  %v3110 = vmul.f32 %v3097, 0.044715
  %v3111 = vmul.f32 %v3098, 0.044715
  %v3112 = vmul.f32 %v3099, 0.044715
  %v3113 = vadd.f32 %v3011, %v3100
  %v3114 = vadd.f32 %v3016, %v3101
  %v3115 = vadd.f32 %v3021, %v3102
  %v3116 = vadd.f32 %v3026, %v3103
  %v3117 = vadd.f32 %v3031, %v3104
  %v3118 = vadd.f32 %v3036, %v3105
  %v3119 = vadd.f32 %v3041, %v3106
  %v3120 = vadd.f32 %v3046, %v3107
  %v3121 = vadd.f32 %v3051, %v3108
  %v3122 = vadd.f32 %v3056, %v3109
  %v3123 = vadd.f32 %v3061, %v3110
  %v3124 = vadd.f32 %v3066, %v3111
  %v3125 = vadd.f32 %v3071, %v3112
  %v3126 = vmul.f32 %v3113, 0.7978846
  %v3127 = vmul.f32 %v3114, 0.7978846
  %v3128 = vmul.f32 %v3115, 0.7978846
  %v3129 = vmul.f32 %v3116, 0.7978846
  %v3130 = vmul.f32 %v3117, 0.7978846
  %v3131 = vmul.f32 %v3118, 0.7978846
  %v3132 = vmul.f32 %v3119, 0.7978846
  %v3133 = vmul.f32 %v3120, 0.7978846
  %v3134 = vmul.f32 %v3121, 0.7978846
  %v3135 = vmul.f32 %v3122, 0.7978846
  %v3136 = vmul.f32 %v3123, 0.7978846
  %v3137 = vmul.f32 %v3124, 0.7978846
  %v3138 = vmul.f32 %v3125, 0.7978846
  %v3139 = vtanh.pop %v3126
  %v3140 = vtanh.pop %v3127
  %v3141 = vtanh.pop %v3128
  %v3142 = vtanh.pop %v3129
  %v3143 = vtanh.pop %v3130
  %v3144 = vtanh.pop %v3131
  %v3145 = vtanh.pop %v3132
  %v3146 = vtanh.pop %v3133
  %v3147 = vtanh.pop %v3134
  %v3148 = vtanh.pop %v3135
  %v3149 = vtanh.pop %v3136
  %v3150 = vtanh.pop %v3137
  %v3151 = vtanh.pop %v3138
  %v3152 = vadd.f32 %v3139, 1.0
  %v3153 = vadd.f32 %v3140, 1.0
  %v3154 = vadd.f32 %v3141, 1.0
  %v3155 = vadd.f32 %v3142, 1.0
  %v3156 = vadd.f32 %v3143, 1.0
  %v3157 = vadd.f32 %v3144, 1.0
  %v3158 = vadd.f32 %v3145, 1.0
  %v3159 = vadd.f32 %v3146, 1.0
  %v3160 = vadd.f32 %v3147, 1.0
  %v3161 = vadd.f32 %v3148, 1.0
  %v3162 = vadd.f32 %v3149, 1.0
  %v3163 = vadd.f32 %v3150, 1.0
  %v3164 = vadd.f32 %v3151, 1.0
  %v3165 = vmul.f32 %v3152, 0.5
  %v3166 = vmul.f32 %v3153, 0.5
  %v3167 = vmul.f32 %v3154, 0.5
  %v3168 = vmul.f32 %v3155, 0.5
  %v3169 = vmul.f32 %v3156, 0.5
  %v3170 = vmul.f32 %v3157, 0.5
  %v3171 = vmul.f32 %v3158, 0.5
  %v3172 = vmul.f32 %v3159, 0.5
  %v3173 = vmul.f32 %v3160, 0.5
  %v3174 = vmul.f32 %v3161, 0.5
  %v3175 = vmul.f32 %v3162, 0.5
  %v3176 = vmul.f32 %v3163, 0.5
  %v3177 = vmul.f32 %v3164, 0.5
  %v3178 = vmul.f32 %v3011, %v3165
  %v3179 = vmul.f32 %v3016, %v3166
  %v3180 = vmul.f32 %v3021, %v3167
  %v3181 = vmul.f32 %v3026, %v3168
  %v3182 = vmul.f32 %v3031, %v3169
  %v3183 = vmul.f32 %v3036, %v3170
  %v3184 = vmul.f32 %v3041, %v3171
  %v3185 = vmul.f32 %v3046, %v3172
  %v3186 = vmul.f32 %v3051, %v3173
  %v3187 = vmul.f32 %v3056, %v3174
  %v3188 = vmul.f32 %v3061, %v3175
  %v3189 = vmul.f32 %v3066, %v3176
  %v3190 = vmul.f32 %v3071, %v3177
  %s3191 = scalar_lea.vmem %s13, 32
  %v3192 = vld [vmem:[%s3191] sm:$0xff]
  %v3193 = vld [vmem:[%s3191 + $0x8] sm:$0xff]
  %v3194 = vld [vmem:[%s3191 + $0x10] sm:$0xff]
  %v3195 = vld [vmem:[%s3191 + $0x18] sm:$0xff]
  %s3196 = scalar_lea.vmem %s14, 1
  %v3197 = vld [vmem:[%s3196] sm:$0x1]
  %v3199 = vlaneseq
  %v3200 = vshrl.u32 %v3199, 7
  %v3201 = vsub.s32 0, %v3200
  %v3202 = vrot.slane %v3197, %v3201
  %v3205 = vsel %vm1275, %v3178, 0
  %v3208 = vsel %vm1275, %v3179, 0
  %v3211 = vsel %vm1275, %v3180, 0
  %v3214 = vsel %vm1275, %v3181, 0
  %v3217 = vsel %vm1275, %v3182, 0
  %v3220 = vsel %vm1275, %v3183, 0
  %v3223 = vsel %vm1275, %v3184, 0
  %v3226 = vsel %vm1275, %v3185, 0
  %v3229 = vsel %vm1275, %v3186, 0
  %v3232 = vsel %vm1275, %v3187, 0
  %v3235 = vsel %vm1275, %v3188, 0
  %v3238 = vsel %vm1275, %v3189, 0
  %v3241 = vsel %vm1275, %v3190, 0
  %3243 = vmatprep.subr.mxu0 0.0
  %3244 = vmatpush1.msra.mxu0 %v3192
  %3245 = vmatprep.subr.mxu0 0.0
  %3246 = vmatpush1.msra.mxu0 %v3193
  %3247 = vmatprep.subr.mxu0 0.0
  %3248 = vmatpush1.msra.mxu0 %v3194
  %3249 = vmatprep.subr.mxu0 0.0
  %3250 = vmatpush1.msra.mxu0 %v3195
  %3251 = vmatprep.subr.mxu0 0.0
  %3252 = vmatpush1.msra.mxu0 0.0
  %3253 = vmatprep.subr.mxu0 0.0
  %3254 = vmatpush1.msra.mxu0 0.0
  %3255 = vmatprep.subr.mxu0 0.0
  %3256 = vmatpush1.msra.mxu0 0.0
  %3257 = vmatprep.subr.mxu0 0.0
  %3258 = vmatpush1.msra.mxu0 0.0
  %3259 = vmatprep.subr.mxu0 0.0
  %3260 = vmatpush1.msra.mxu0 0.0
  %3261 = vmatprep.subr.mxu0 0.0
  %3262 = vmatpush1.msra.mxu0 0.0
  %3263 = vmatprep.subr.mxu0 0.0
  %3264 = vmatpush1.msra.mxu0 0.0
  %3265 = vmatprep.subr.mxu0 0.0
  %3266 = vmatpush1.msra.mxu0 0.0
  %3267 = vmatprep.subr.mxu0 0.0
  %3268 = vmatpush1.msra.mxu0 0.0
  %3269 = vmatprep.subr.mxu0 0.0
  %3270 = vmatpush1.msra.mxu0 0.0
  %3271 = vmatprep.subr.mxu0 0.0
  %3272 = vmatpush1.msra.mxu0 0.0
  %3273 = vmatprep.subr.mxu0 0.0
  %3274 = vmatpush1.msra.mxu0 0.0
  %3275 = vmatprep.subr.mxu0 0.0
  %3276 = vmatpush1.msra.mxu0 0.0
  %3277 = vmatprep.subr.mxu0 0.0
  %3278 = vmatpush1.msra.mxu0 0.0
  %3279 = vmatprep.subr.mxu0 0.0
  %3280 = vmatpush1.msra.mxu0 0.0
  %3281 = vmatprep.subr.mxu0 0.0
  %3282 = vmatpush1.msra.mxu0 0.0
  %3283 = vmatprep.subr.mxu0 0.0
  %3284 = vmatpush1.msra.mxu0 0.0
  %3285 = vmatprep.subr.mxu0 0.0
  %3286 = vmatpush1.msra.mxu0 0.0
  %3287 = vmatprep.subr.mxu0 0.0
  %3288 = vmatpush1.msra.mxu0 0.0
  %3289 = vmatprep.subr.mxu0 0.0
  %3290 = vmatpush1.msra.mxu0 0.0
  %3291 = vmatprep.subr.mxu0 0.0
  %3292 = vmatpush1.msra.mxu0 0.0
  %3293 = vmatprep.subr.mxu0 0.0
  %3294 = vmatpush1.msra.mxu0 0.0
  %3295 = vmatprep.subr.mxu0 0.0
  %3296 = vmatpush1.msra.mxu0 0.0
  %3297 = vmatprep.subr.mxu0 0.0
  %3298 = vmatpush1.msra.mxu0 0.0
  %3299 = vmatprep.subr.mxu0 0.0
  %3300 = vmatpush1.msra.mxu0 0.0
  %3301 = vmatprep.subr.mxu0 0.0
  %3302 = vmatpush1.msra.mxu0 0.0
  %3303 = vmatprep.subr.mxu0 0.0
  %3304 = vmatpush1.msra.mxu0 0.0
  %3305 = vmatprep.subr.mxu0 0.0
  %3306 = vmatpush1.msra.mxu0 0.0
  %3307 = vmatprep.mubr.f32.mxu0 0.0
  %3308 = vmatmul.mubr.f32.gmra.mrb[0].mxu0 %v3205
  %v3309 = vpop.f32.mrb[0].mxu0
  %v3310 = vadd.f32 %v3202, %v3309
  %v3311 = vpop.f32.mrb[0].mxu0
  %3312 = vmatprep.mubr.f32.mxu0 0.0
  %3313 = vmatmul.mubr.f32.gmra.mrb[0].mxu0 %v3208
  %v3314 = vpop.f32.mrb[0].mxu0
  %v3315 = vadd.f32 %v3202, %v3314
  %v3316 = vpop.f32.mrb[0].mxu0
  %3317 = vmatprep.mubr.f32.mxu0 0.0
  %3318 = vmatmul.mubr.f32.gmra.mrb[0].mxu0 %v3211
  %v3319 = vpop.f32.mrb[0].mxu0
  %v3320 = vadd.f32 %v3202, %v3319
  %v3321 = vpop.f32.mrb[0].mxu0
  %3322 = vmatprep.mubr.f32.mxu0 0.0
  %3323 = vmatmul.mubr.f32.gmra.mrb[0].mxu0 %v3214
  %v3324 = vpop.f32.mrb[0].mxu0
  %v3325 = vadd.f32 %v3202, %v3324
  %v3326 = vpop.f32.mrb[0].mxu0
  %3327 = vmatprep.mubr.f32.mxu0 0.0
  %3328 = vmatmul.mubr.f32.gmra.mrb[0].mxu0 %v3217
  %v3329 = vpop.f32.mrb[0].mxu0
  %v3330 = vadd.f32 %v3202, %v3329
  %v3331 = vpop.f32.mrb[0].mxu0
  %3332 = vmatprep.mubr.f32.mxu0 0.0
  %3333 = vmatmul.mubr.f32.gmra.mrb[0].mxu0 %v3220
  %v3334 = vpop.f32.mrb[0].mxu0
  %v3335 = vadd.f32 %v3202, %v3334
  %v3336 = vpop.f32.mrb[0].mxu0
  %3337 = vmatprep.mubr.f32.mxu0 0.0
  %3338 = vmatmul.mubr.f32.gmra.mrb[0].mxu0 %v3223
  %v3339 = vpop.f32.mrb[0].mxu0
  %v3340 = vadd.f32 %v3202, %v3339
  %v3341 = vpop.f32.mrb[0].mxu0
  %3342 = vmatprep.mubr.f32.mxu0 0.0
  %3343 = vmatmul.mubr.f32.gmra.mrb[0].mxu0 %v3226
  %v3344 = vpop.f32.mrb[0].mxu0
  %v3345 = vadd.f32 %v3202, %v3344
  %v3346 = vpop.f32.mrb[0].mxu0
  %3347 = vmatprep.mubr.f32.mxu0 0.0
  %3348 = vmatmul.mubr.f32.gmra.mrb[0].mxu0 %v3229
  %v3349 = vpop.f32.mrb[0].mxu0
  %v3350 = vadd.f32 %v3202, %v3349
  %v3351 = vpop.f32.mrb[0].mxu0
  %3352 = vmatprep.mubr.f32.mxu0 0.0
  %3353 = vmatmul.mubr.f32.gmra.mrb[0].mxu0 %v3232
  %v3354 = vpop.f32.mrb[0].mxu0
  %v3355 = vadd.f32 %v3202, %v3354
  %v3356 = vpop.f32.mrb[0].mxu0
  %3357 = vmatprep.mubr.f32.mxu0 0.0
  %3358 = vmatmul.mubr.f32.gmra.mrb[0].mxu0 %v3235
  %v3359 = vpop.f32.mrb[0].mxu0
  %v3360 = vadd.f32 %v3202, %v3359
  %v3361 = vpop.f32.mrb[0].mxu0
  %3362 = vmatprep.mubr.f32.mxu0 0.0
  %3363 = vmatmul.mubr.f32.gmra.mrb[0].mxu0 %v3238
  %v3364 = vpop.f32.mrb[0].mxu0
  %v3365 = vadd.f32 %v3202, %v3364
  %v3366 = vpop.f32.mrb[0].mxu0
  %3367 = vmatprep.mubr.f32.mxu0 0.0
  %3368 = vmatmul.mubr.f32.gmra.mrb[0].mxu0 %v3241
  %v3369 = vpop.f32.mrb[0].mxu0
  %v3370 = vadd.f32 %v3202, %v3369
  %v3371 = vpop.f32.mrb[0].mxu0
  %3372 = vdwg.mxu0
  %v3374 = vsel %vm144, %v3310, 0
  %v3377 = vsel %vm144, %v3315, 0
  %v3380 = vsel %vm144, %v3320, 0
  %v3383 = vsel %vm144, %v3325, 0
  %v3386 = vsel %vm144, %v3330, 0
  %v3389 = vsel %vm144, %v3335, 0
  %v3392 = vsel %vm144, %v3340, 0
  %v3395 = vsel %vm144, %v3345, 0
  %v3398 = vsel %vm144, %v3350, 0
  %v3401 = vsel %vm144, %v3355, 0
  %v3404 = vsel %vm144, %v3360, 0
  %v3407 = vsel %vm144, %v3365, 0
  %v3410 = vsel %vm144, %v3370, 0
  %3412 = vmatprep.subr.mxu0 0.0
  %3413 = vmatpush1.msra.mxu0 %v128
  %3414 = vmatprep.subr.mxu0 0.0
  %3415 = vmatpush1.msra.mxu0 %v129
  %3416 = vmatprep.subr.mxu0 0.0
  %3417 = vmatpush1.msra.mxu0 %v130
  %3418 = vmatprep.subr.mxu0 0.0
  %3419 = vmatpush1.msra.mxu0 %v131
  %3420 = vmatprep.subr.mxu0 0.0
  %3421 = vmatpush1.msra.mxu0 %v132
  %3422 = vmatprep.subr.mxu0 0.0
  %3423 = vmatpush1.msra.mxu0 %v133
  %3424 = vmatprep.subr.mxu0 0.0
  %3425 = vmatpush1.msra.mxu0 %v134
  %3426 = vmatprep.subr.mxu0 0.0
  %3427 = vmatpush1.msra.mxu0 %v135
  %3428 = vmatprep.subr.mxu0 0.0
  %3429 = vmatpush1.msra.mxu0 0.0
  %3430 = vmatprep.subr.mxu0 0.0
  %3431 = vmatpush1.msra.mxu0 0.0
  %3432 = vmatprep.subr.mxu0 0.0
  %3433 = vmatpush1.msra.mxu0 0.0
  %3434 = vmatprep.subr.mxu0 0.0
  %3435 = vmatpush1.msra.mxu0 0.0
  %3436 = vmatprep.subr.mxu0 0.0
  %3437 = vmatpush1.msra.mxu0 0.0
  %3438 = vmatprep.subr.mxu0 0.0
  %3439 = vmatpush1.msra.mxu0 0.0
  %3440 = vmatprep.subr.mxu0 0.0
  %3441 = vmatpush1.msra.mxu0 0.0
  %3442 = vmatprep.subr.mxu0 0.0
  %3443 = vmatpush1.msra.mxu0 0.0
  %3444 = vmatprep.subr.mxu0 0.0
  %3445 = vmatpush1.msra.mxu0 0.0
  %3446 = vmatprep.subr.mxu0 0.0
  %3447 = vmatpush1.msra.mxu0 0.0
  %3448 = vmatprep.subr.mxu0 0.0
  %3449 = vmatpush1.msra.mxu0 0.0
  %3450 = vmatprep.subr.mxu0 0.0
  %3451 = vmatpush1.msra.mxu0 0.0
  %3452 = vmatprep.subr.mxu0 0.0
  %3453 = vmatpush1.msra.mxu0 0.0
  %3454 = vmatprep.subr.mxu0 0.0
  %3455 = vmatpush1.msra.mxu0 0.0
  %3456 = vmatprep.subr.mxu0 0.0
  %3457 = vmatpush1.msra.mxu0 0.0
  %3458 = vmatprep.subr.mxu0 0.0
  %3459 = vmatpush1.msra.mxu0 0.0
  %3460 = vmatprep.subr.mxu0 0.0
  %3461 = vmatpush1.msra.mxu0 0.0
  %3462 = vmatprep.subr.mxu0 0.0
  %3463 = vmatpush1.msra.mxu0 0.0
  %3464 = vmatprep.subr.mxu0 0.0
  %3465 = vmatpush1.msra.mxu0 0.0
  %3466 = vmatprep.subr.mxu0 0.0
  %3467 = vmatpush1.msra.mxu0 0.0
  %3468 = vmatprep.subr.mxu0 0.0
  %3469 = vmatpush1.msra.mxu0 0.0
  %3470 = vmatprep.subr.mxu0 0.0
  %3471 = vmatpush1.msra.mxu0 0.0
  %3472 = vmatprep.subr.mxu0 0.0
  %3473 = vmatpush1.msra.mxu0 0.0
  %3474 = vmatprep.subr.mxu0 0.0
  %3475 = vmatpush1.msra.mxu0 0.0
  %3476 = vmatprep.mubr.f32.mxu0 0.0
  %3477 = vmatmul.mubr.f32.gmra.mrb[0].mxu0 %v3374
  %v3478 = vpop.f32.mrb[0].mxu0
  %v3479 = vadd.f32 0.0, %v3478
  %v3480 = vpop.f32.mrb[0].mxu0
  %3481 = vmatprep.mubr.f32.mxu0 0.0
  %3482 = vmatmul.mubr.f32.gmra.mrb[0].mxu0 %v3377
  %v3483 = vpop.f32.mrb[0].mxu0
  %v3484 = vadd.f32 0.0, %v3483
  %v3485 = vpop.f32.mrb[0].mxu0
  %3486 = vmatprep.mubr.f32.mxu0 0.0
  %3487 = vmatmul.mubr.f32.gmra.mrb[0].mxu0 %v3380
  %v3488 = vpop.f32.mrb[0].mxu0
  %v3489 = vadd.f32 0.0, %v3488
  %v3490 = vpop.f32.mrb[0].mxu0
  %3491 = vmatprep.mubr.f32.mxu0 0.0
  %3492 = vmatmul.mubr.f32.gmra.mrb[0].mxu0 %v3383
  %v3493 = vpop.f32.mrb[0].mxu0
  %v3494 = vadd.f32 0.0, %v3493
  %v3495 = vpop.f32.mrb[0].mxu0
  %3496 = vmatprep.mubr.f32.mxu0 0.0
  %3497 = vmatmul.mubr.f32.gmra.mrb[0].mxu0 %v3386
  %v3498 = vpop.f32.mrb[0].mxu0
  %v3499 = vadd.f32 0.0, %v3498
  %v3500 = vpop.f32.mrb[0].mxu0
  %3501 = vmatprep.mubr.f32.mxu0 0.0
  %3502 = vmatmul.mubr.f32.gmra.mrb[0].mxu0 %v3389
  %v3503 = vpop.f32.mrb[0].mxu0
  %v3504 = vadd.f32 0.0, %v3503
  %v3505 = vpop.f32.mrb[0].mxu0
  %3506 = vmatprep.mubr.f32.mxu0 0.0
  %3507 = vmatmul.mubr.f32.gmra.mrb[0].mxu0 %v3392
  %v3508 = vpop.f32.mrb[0].mxu0
  %v3509 = vadd.f32 0.0, %v3508
  %v3510 = vpop.f32.mrb[0].mxu0
  %3511 = vmatprep.mubr.f32.mxu0 0.0
  %3512 = vmatmul.mubr.f32.gmra.mrb[0].mxu0 %v3395
  %v3513 = vpop.f32.mrb[0].mxu0
  %v3514 = vadd.f32 0.0, %v3513
  %v3515 = vpop.f32.mrb[0].mxu0
  %3516 = vmatprep.mubr.f32.mxu0 0.0
  %3517 = vmatmul.mubr.f32.gmra.mrb[0].mxu0 %v3398
  %v3518 = vpop.f32.mrb[0].mxu0
  %v3519 = vadd.f32 0.0, %v3518
  %v3520 = vpop.f32.mrb[0].mxu0
  %3521 = vmatprep.mubr.f32.mxu0 0.0
  %3522 = vmatmul.mubr.f32.gmra.mrb[0].mxu0 %v3401
  %v3523 = vpop.f32.mrb[0].mxu0
  %v3524 = vadd.f32 0.0, %v3523
  %v3525 = vpop.f32.mrb[0].mxu0
  %3526 = vmatprep.mubr.f32.mxu0 0.0
  %3527 = vmatmul.mubr.f32.gmra.mrb[0].mxu0 %v3404
  %v3528 = vpop.f32.mrb[0].mxu0
  %v3529 = vadd.f32 0.0, %v3528
  %v3530 = vpop.f32.mrb[0].mxu0
  %3531 = vmatprep.mubr.f32.mxu0 0.0
  %3532 = vmatmul.mubr.f32.gmra.mrb[0].mxu0 %v3407
  %v3533 = vpop.f32.mrb[0].mxu0
  %v3534 = vadd.f32 0.0, %v3533
  %v3535 = vpop.f32.mrb[0].mxu0
  %3536 = vmatprep.mubr.f32.mxu0 0.0
  %3537 = vmatmul.mubr.f32.gmra.mrb[0].mxu0 %v3410
  %v3538 = vpop.f32.mrb[0].mxu0
  %v3539 = vadd.f32 0.0, %v3538
  %v3540 = vpop.f32.mrb[0].mxu0
  %3541 = vdwg.mxu0
  %v3542 = vxor.u32 %v3310, 2147483648
  %v3543 = vxor.u32 %v3315, 2147483648
  %v3544 = vxor.u32 %v3320, 2147483648
  %v3545 = vxor.u32 %v3325, 2147483648
  %v3546 = vxor.u32 %v3330, 2147483648
  %v3547 = vxor.u32 %v3335, 2147483648
  %v3548 = vxor.u32 %v3340, 2147483648
  %v3549 = vxor.u32 %v3345, 2147483648
  %v3550 = vxor.u32 %v3350, 2147483648
  %v3551 = vxor.u32 %v3355, 2147483648
  %v3552 = vxor.u32 %v3360, 2147483648
  %v3553 = vxor.u32 %v3365, 2147483648
  %v3554 = vxor.u32 %v3370, 2147483648
  %v3555 = vmul.f32 %v3542, 1.442695
  %v3556 = vpow.pop %v3555
  %v3557 = vmul.f32 %v3543, 1.442695
  %v3558 = vpow.pop %v3557
  %v3559 = vmul.f32 %v3544, 1.442695
  %v3560 = vpow.pop %v3559
  %v3561 = vmul.f32 %v3545, 1.442695
  %v3562 = vpow.pop %v3561
  %v3563 = vmul.f32 %v3546, 1.442695
  %v3564 = vpow.pop %v3563
  %v3565 = vmul.f32 %v3547, 1.442695
  %v3566 = vpow.pop %v3565
  %v3567 = vmul.f32 %v3548, 1.442695
  %v3568 = vpow.pop %v3567
  %v3569 = vmul.f32 %v3549, 1.442695
  %v3570 = vpow.pop %v3569
  %v3571 = vmul.f32 %v3550, 1.442695
  %v3572 = vpow.pop %v3571
  %v3573 = vmul.f32 %v3551, 1.442695
  %v3574 = vpow.pop %v3573
  %v3575 = vmul.f32 %v3552, 1.442695
  %v3576 = vpow.pop %v3575
  %v3577 = vmul.f32 %v3553, 1.442695
  %v3578 = vpow.pop %v3577
  %v3579 = vmul.f32 %v3554, 1.442695
  %v3580 = vpow.pop %v3579
  %v3581 = vadd.f32 %v3556, 1.0
  %v3582 = vadd.f32 %v3558, 1.0
  %v3583 = vadd.f32 %v3560, 1.0
  %v3584 = vadd.f32 %v3562, 1.0
  %v3585 = vadd.f32 %v3564, 1.0
  %v3586 = vadd.f32 %v3566, 1.0
  %v3587 = vadd.f32 %v3568, 1.0
  %v3588 = vadd.f32 %v3570, 1.0
  %v3589 = vadd.f32 %v3572, 1.0
  %v3590 = vadd.f32 %v3574, 1.0
  %v3591 = vadd.f32 %v3576, 1.0
  %v3592 = vadd.f32 %v3578, 1.0
  %v3593 = vadd.f32 %v3580, 1.0
  %v3594 = vrcp.pop %v3581
  %v3595 = vmul.f32 1.0, %v3594
  %v3596 = vrcp.pop %v3582
  %v3597 = vmul.f32 1.0, %v3596
  %v3598 = vrcp.pop %v3583
  %v3599 = vmul.f32 1.0, %v3598
  %v3600 = vrcp.pop %v3584
  %v3601 = vmul.f32 1.0, %v3600
  %v3602 = vrcp.pop %v3585
  %v3603 = vmul.f32 1.0, %v3602
  %v3604 = vrcp.pop %v3586
  %v3605 = vmul.f32 1.0, %v3604
  %v3606 = vrcp.pop %v3587
  %v3607 = vmul.f32 1.0, %v3606
  %v3608 = vrcp.pop %v3588
  %v3609 = vmul.f32 1.0, %v3608
  %v3610 = vrcp.pop %v3589
  %v3611 = vmul.f32 1.0, %v3610
  %v3612 = vrcp.pop %v3590
  %v3613 = vmul.f32 1.0, %v3612
  %v3614 = vrcp.pop %v3591
  %v3615 = vmul.f32 1.0, %v3614
  %v3616 = vrcp.pop %v3592
  %v3617 = vmul.f32 1.0, %v3616
  %v3618 = vrcp.pop %v3593
  %v3619 = vmul.f32 1.0, %v3618
  %v3620 = vmul.f32 %v2875, %v3595
  %v3621 = vmul.f32 %v2876, %v3597
  %v3622 = vmul.f32 %v2877, %v3599
  %v3623 = vmul.f32 %v2878, %v3601
  %v3624 = vmul.f32 %v2879, %v3603
  %v3625 = vmul.f32 %v2880, %v3605
  %v3626 = vmul.f32 %v2881, %v3607
  %v3627 = vmul.f32 %v2882, %v3609
  %v3628 = vmul.f32 %v2883, %v3611
  %v3629 = vmul.f32 %v2884, %v3613
  %v3630 = vmul.f32 %v2885, %v3615
  %v3631 = vmul.f32 %v2886, %v3617
  %v3632 = vmul.f32 %v2887, %v3619
  %v3634 = vsel %vm1712, %v3632, 0
  %3636 = vmatprep.subr.mxu0 0.0
  %3637 = vmatpush1.msra.mxu0 %v3620
  %3638 = vmatprep.subr.mxu0 0.0
  %3639 = vmatpush1.msra.mxu0 %v3621
  %3640 = vmatprep.subr.mxu0 0.0
  %3641 = vmatpush1.msra.mxu0 %v3622
  %3642 = vmatprep.subr.mxu0 0.0
  %3643 = vmatpush1.msra.mxu0 %v3623
  %3644 = vmatprep.subr.mxu0 0.0
  %3645 = vmatpush1.msra.mxu0 %v3624
  %3646 = vmatprep.subr.mxu0 0.0
  %3647 = vmatpush1.msra.mxu0 %v3625
  %3648 = vmatprep.subr.mxu0 0.0
  %3649 = vmatpush1.msra.mxu0 %v3626
  %3650 = vmatprep.subr.mxu0 0.0
  %3651 = vmatpush1.msra.mxu0 %v3627
  %3652 = vmatprep.subr.mxu0 0.0
  %3653 = vmatpush1.msra.mxu0 %v3628
  %3654 = vmatprep.subr.mxu0 0.0
  %3655 = vmatpush1.msra.mxu0 %v3629
  %3656 = vmatprep.subr.mxu0 0.0
  %3657 = vmatpush1.msra.mxu0 %v3630
  %3658 = vmatprep.subr.mxu0 0.0
  %3659 = vmatpush1.msra.mxu0 %v3631
  %3660 = vmatprep.subr.mxu0 0.0
  %3661 = vmatpush1.msra.mxu0 %v3634
  %3662 = vmatprep.subr.mxu0 0.0
  %3663 = vmatpush1.msra.mxu0 0.0
  %3664 = vmatprep.subr.mxu0 0.0
  %3665 = vmatpush1.msra.mxu0 0.0
  %3666 = vmatprep.subr.mxu0 0.0
  %3667 = vmatpush1.msra.mxu0 0.0
  %3668 = vmatprep.subr.mxu0 0.0
  %3669 = vmatpush1.msra.mxu0 0.0
  %3670 = vmatprep.subr.mxu0 0.0
  %3671 = vmatpush1.msra.mxu0 0.0
  %3672 = vmatprep.subr.mxu0 0.0
  %3673 = vmatpush1.msra.mxu0 0.0
  %3674 = vmatprep.subr.mxu0 0.0
  %3675 = vmatpush1.msra.mxu0 0.0
  %3676 = vmatprep.subr.mxu0 0.0
  %3677 = vmatpush1.msra.mxu0 0.0
  %3678 = vmatprep.subr.mxu0 0.0
  %3679 = vmatpush1.msra.mxu0 0.0
  %3680 = vmatprep.subr.mxu0 0.0
  %3681 = vmatpush1.msra.mxu0 0.0
  %3682 = vmatprep.subr.mxu0 0.0
  %3683 = vmatpush1.msra.mxu0 0.0
  %3684 = vmatprep.subr.mxu0 0.0
  %3685 = vmatpush1.msra.mxu0 0.0
  %3686 = vmatprep.subr.mxu0 0.0
  %3687 = vmatpush1.msra.mxu0 0.0
  %3688 = vmatprep.subr.mxu0 0.0
  %3689 = vmatpush1.msra.mxu0 0.0
  %3690 = vmatprep.subr.mxu0 0.0
  %3691 = vmatpush1.msra.mxu0 0.0
  %3692 = vmatprep.subr.mxu0 0.0
  %3693 = vmatpush1.msra.mxu0 0.0
  %3694 = vmatprep.subr.mxu0 0.0
  %3695 = vmatpush1.msra.mxu0 0.0
  %3696 = vmatprep.subr.mxu0 0.0
  %3697 = vmatpush1.msra.mxu0 0.0
  %3698 = vmatprep.subr.mxu0 0.0
  %3699 = vmatpush1.msra.mxu0 0.0
  %3700 = vmatprep.mubr.f32.mxu0 0.0
  %3701 = vmatmul.mubr.f32.gmra.mrb[0].mxu0 %v1707
  %v3702 = vpop.f32.mrb[0].mxu0
  %v3703 = vadd.f32 0.0, %v3702
  %v3704 = vpop.f32.mrb[0].mxu0
  %3705 = vmatprep.mubr.f32.mxu0 0.0
  %3706 = vmatmul.mubr.f32.gmra.mrb[0].mxu0 %v1710
  %v3707 = vpop.f32.mrb[0].mxu0
  %v3708 = vadd.f32 0.0, %v3707
  %v3709 = vpop.f32.mrb[0].mxu0
  %3710 = vdwg.mxu0
  %v3712 = vsel %vm144, %v3703, 0
  %v3715 = vsel %vm144, %v3708, 0
  %3717 = vmatprep.subr.mxu0 0.0
  %3718 = vmatpush1.msra.mxu0 %v120
  %3719 = vmatprep.subr.mxu0 0.0
  %3720 = vmatpush1.msra.mxu0 %v121
  %3721 = vmatprep.subr.mxu0 0.0
  %3722 = vmatpush1.msra.mxu0 %v122
  %3723 = vmatprep.subr.mxu0 0.0
  %3724 = vmatpush1.msra.mxu0 %v123
  %3725 = vmatprep.subr.mxu0 0.0
  %3726 = vmatpush1.msra.mxu0 %v124
  %3727 = vmatprep.subr.mxu0 0.0
  %3728 = vmatpush1.msra.mxu0 %v125
  %3729 = vmatprep.subr.mxu0 0.0
  %3730 = vmatpush1.msra.mxu0 %v126
  %3731 = vmatprep.subr.mxu0 0.0
  %3732 = vmatpush1.msra.mxu0 %v127
  %3733 = vmatprep.subr.mxu0 0.0
  %3734 = vmatpush1.msra.mxu0 0.0
  %3735 = vmatprep.subr.mxu0 0.0
  %3736 = vmatpush1.msra.mxu0 0.0
  %3737 = vmatprep.subr.mxu0 0.0
  %3738 = vmatpush1.msra.mxu0 0.0
  %3739 = vmatprep.subr.mxu0 0.0
  %3740 = vmatpush1.msra.mxu0 0.0
  %3741 = vmatprep.subr.mxu0 0.0
  %3742 = vmatpush1.msra.mxu0 0.0
  %3743 = vmatprep.subr.mxu0 0.0
  %3744 = vmatpush1.msra.mxu0 0.0
  %3745 = vmatprep.subr.mxu0 0.0
  %3746 = vmatpush1.msra.mxu0 0.0
  %3747 = vmatprep.subr.mxu0 0.0
  %3748 = vmatpush1.msra.mxu0 0.0
  %3749 = vmatprep.subr.mxu0 0.0
  %3750 = vmatpush1.msra.mxu0 0.0
  %3751 = vmatprep.subr.mxu0 0.0
  %3752 = vmatpush1.msra.mxu0 0.0
  %3753 = vmatprep.subr.mxu0 0.0
  %3754 = vmatpush1.msra.mxu0 0.0
  %3755 = vmatprep.subr.mxu0 0.0
  %3756 = vmatpush1.msra.mxu0 0.0
  %3757 = vmatprep.subr.mxu0 0.0
  %3758 = vmatpush1.msra.mxu0 0.0
  %3759 = vmatprep.subr.mxu0 0.0
  %3760 = vmatpush1.msra.mxu0 0.0
  %3761 = vmatprep.subr.mxu0 0.0
  %3762 = vmatpush1.msra.mxu0 0.0
  %3763 = vmatprep.subr.mxu0 0.0
  %3764 = vmatpush1.msra.mxu0 0.0
  %3765 = vmatprep.subr.mxu0 0.0
  %3766 = vmatpush1.msra.mxu0 0.0
  %3767 = vmatprep.subr.mxu0 0.0
  %3768 = vmatpush1.msra.mxu0 0.0
  %3769 = vmatprep.subr.mxu0 0.0
  %3770 = vmatpush1.msra.mxu0 0.0
  %3771 = vmatprep.subr.mxu0 0.0
  %3772 = vmatpush1.msra.mxu0 0.0
  %3773 = vmatprep.subr.mxu0 0.0
  %3774 = vmatpush1.msra.mxu0 0.0
  %3775 = vmatprep.subr.mxu0 0.0
  %3776 = vmatpush1.msra.mxu0 0.0
  %3777 = vmatprep.subr.mxu0 0.0
  %3778 = vmatpush1.msra.mxu0 0.0
  %3779 = vmatprep.subr.mxu0 0.0
  %3780 = vmatpush1.msra.mxu0 0.0
  %3781 = vmatprep.mubr.f32.mxu0 0.0
  %3782 = vmatmul.mubr.f32.gmra.mrb[0].mxu0 %v3712
  %v3783 = vpop.f32.mrb[0].mxu0
  %v3784 = vadd.f32 0.0, %v3783
  %v3785 = vpop.f32.mrb[0].mxu0
  %3786 = vmatprep.mubr.f32.mxu0 0.0
  %3787 = vmatmul.mubr.f32.gmra.mrb[0].mxu0 %v3715
  %v3788 = vpop.f32.mrb[0].mxu0
  %v3789 = vadd.f32 0.0, %v3788
  %v3790 = vpop.f32.mrb[0].mxu0
  %3791 = vdwg.mxu0
  %v3792 = vsub.f32 %v3703, %v3784
  %v3793 = vsub.f32 %v3708, %v3789
  %v3794 = vmul.f32 %v3792, %v3792
  %v3795 = vmul.f32 %v3793, %v3793
  %v3797 = vsel %vm144, %v3794, 0
  %v3800 = vsel %vm144, %v3795, 0
  %3802 = vmatprep.subr.mxu0 0.0
  %3803 = vmatpush1.msra.mxu0 %v120
  %3804 = vmatprep.subr.mxu0 0.0
  %3805 = vmatpush1.msra.mxu0 %v121
  %3806 = vmatprep.subr.mxu0 0.0
  %3807 = vmatpush1.msra.mxu0 %v122
  %3808 = vmatprep.subr.mxu0 0.0
  %3809 = vmatpush1.msra.mxu0 %v123
  %3810 = vmatprep.subr.mxu0 0.0
  %3811 = vmatpush1.msra.mxu0 %v124
  %3812 = vmatprep.subr.mxu0 0.0
  %3813 = vmatpush1.msra.mxu0 %v125
  %3814 = vmatprep.subr.mxu0 0.0
  %3815 = vmatpush1.msra.mxu0 %v126
  %3816 = vmatprep.subr.mxu0 0.0
  %3817 = vmatpush1.msra.mxu0 %v127
  %3818 = vmatprep.subr.mxu0 0.0
  %3819 = vmatpush1.msra.mxu0 0.0
  %3820 = vmatprep.subr.mxu0 0.0
  %3821 = vmatpush1.msra.mxu0 0.0
  %3822 = vmatprep.subr.mxu0 0.0
  %3823 = vmatpush1.msra.mxu0 0.0
  %3824 = vmatprep.subr.mxu0 0.0
  %3825 = vmatpush1.msra.mxu0 0.0
  %3826 = vmatprep.subr.mxu0 0.0
  %3827 = vmatpush1.msra.mxu0 0.0
  %3828 = vmatprep.subr.mxu0 0.0
  %3829 = vmatpush1.msra.mxu0 0.0
  %3830 = vmatprep.subr.mxu0 0.0
  %3831 = vmatpush1.msra.mxu0 0.0
  %3832 = vmatprep.subr.mxu0 0.0
  %3833 = vmatpush1.msra.mxu0 0.0
  %3834 = vmatprep.subr.mxu0 0.0
  %3835 = vmatpush1.msra.mxu0 0.0
  %3836 = vmatprep.subr.mxu0 0.0
  %3837 = vmatpush1.msra.mxu0 0.0
  %3838 = vmatprep.subr.mxu0 0.0
  %3839 = vmatpush1.msra.mxu0 0.0
  %3840 = vmatprep.subr.mxu0 0.0
  %3841 = vmatpush1.msra.mxu0 0.0
  %3842 = vmatprep.subr.mxu0 0.0
  %3843 = vmatpush1.msra.mxu0 0.0
  %3844 = vmatprep.subr.mxu0 0.0
  %3845 = vmatpush1.msra.mxu0 0.0
  %3846 = vmatprep.subr.mxu0 0.0
  %3847 = vmatpush1.msra.mxu0 0.0
  %3848 = vmatprep.subr.mxu0 0.0
  %3849 = vmatpush1.msra.mxu0 0.0
  %3850 = vmatprep.subr.mxu0 0.0
  %3851 = vmatpush1.msra.mxu0 0.0
  %3852 = vmatprep.subr.mxu0 0.0
  %3853 = vmatpush1.msra.mxu0 0.0
  %3854 = vmatprep.subr.mxu0 0.0
  %3855 = vmatpush1.msra.mxu0 0.0
  %3856 = vmatprep.subr.mxu0 0.0
  %3857 = vmatpush1.msra.mxu0 0.0
  %3858 = vmatprep.subr.mxu0 0.0
  %3859 = vmatpush1.msra.mxu0 0.0
  %3860 = vmatprep.subr.mxu0 0.0
  %3861 = vmatpush1.msra.mxu0 0.0
  %3862 = vmatprep.subr.mxu0 0.0
  %3863 = vmatpush1.msra.mxu0 0.0
  %3864 = vmatprep.subr.mxu0 0.0
  %3865 = vmatpush1.msra.mxu0 0.0
  %3866 = vmatprep.mubr.f32.mxu0 0.0
  %3867 = vmatmul.mubr.f32.gmra.mrb[0].mxu0 %v3797
  %v3868 = vpop.f32.mrb[0].mxu0
  %v3869 = vadd.f32 1e-05, %v3868
  %v3870 = vpop.f32.mrb[0].mxu0
  %3871 = vmatprep.mubr.f32.mxu0 0.0
  %3872 = vmatmul.mubr.f32.gmra.mrb[0].mxu0 %v3800
  %v3873 = vpop.f32.mrb[0].mxu0
  %v3874 = vadd.f32 1e-05, %v3873
  %v3875 = vpop.f32.mrb[0].mxu0
  %3876 = vdwg.mxu0
  %v3877 = vrsqrt.pop %v3869
  %v3878 = vrsqrt.pop %v3874
  %v3879 = vmul.f32 %v3792, %v3877
  %v3880 = vmul.f32 %v3793, %v3878
  %s3881 = scalar_lea.vmem %s15, 1
  %v3882 = vld [vmem:[%s3881] sm:$0x1]
  %v3884 = vlaneseq
  %v3885 = vshrl.u32 %v3884, 7
  %v3886 = vsub.s32 0, %v3885
  %v3887 = vrot.slane %v3882, %v3886
  %v3889 = vmul.f32 %v3879, %v3887
  %v3890 = vmul.f32 %v3880, %v3887
  %s3891 = scalar_lea.vmem %s16, 1
  %v3892 = vld [vmem:[%s3891] sm:$0x1]
  %v3894 = vlaneseq
  %v3895 = vshrl.u32 %v3894, 7
  %v3896 = vsub.s32 0, %v3895
  %v3897 = vrot.slane %v3892, %v3896
  %v3899 = vadd.f32 %v3889, %v3897
  %v3900 = vadd.f32 %v3890, %v3897
  %s3901 = scalar_lea.vmem %s17, 64
  %v3902 = vld [vmem:[%s3901] sm:$0xff]
  %v3903 = vld [vmem:[%s3901 + $0x8] sm:$0xff]
  %v3904 = vld [vmem:[%s3901 + $0x10] sm:$0xff]
  %v3905 = vld [vmem:[%s3901 + $0x18] sm:$0xff]
  %v3906 = vld [vmem:[%s3901 + $0x20] sm:$0xff]
  %v3907 = vld [vmem:[%s3901 + $0x28] sm:$0xff]
  %v3908 = vld [vmem:[%s3901 + $0x30] sm:$0xff]
  %v3909 = vld [vmem:[%s3901 + $0x38] sm:$0xff]
  %s3910 = scalar_lea.vmem %s18, 64
  %v3911 = vld [vmem:[%s3910] sm:$0xff]
  %v3912 = vld [vmem:[%s3910 + $0x8] sm:$0xff]
  %v3913 = vld [vmem:[%s3910 + $0x10] sm:$0xff]
  %v3914 = vld [vmem:[%s3910 + $0x18] sm:$0xff]
  %v3915 = vld [vmem:[%s3910 + $0x20] sm:$0xff]
  %v3916 = vld [vmem:[%s3910 + $0x28] sm:$0xff]
  %v3917 = vld [vmem:[%s3910 + $0x30] sm:$0xff]
  %v3918 = vld [vmem:[%s3910 + $0x38] sm:$0xff]
  %v3920 = vsel %vm144, %v3899, 0
  %v3923 = vsel %vm144, %v3900, 0
  %3925 = vmatprep.subr.mxu0 0.0
  %3926 = vmatpush1.msra.mxu0 %v3911
  %3927 = vmatprep.subr.mxu0 0.0
  %3928 = vmatpush1.msra.mxu0 %v3912
  %3929 = vmatprep.subr.mxu0 0.0
  %3930 = vmatpush1.msra.mxu0 %v3913
  %3931 = vmatprep.subr.mxu0 0.0
  %3932 = vmatpush1.msra.mxu0 %v3914
  %3933 = vmatprep.subr.mxu0 0.0
  %3934 = vmatpush1.msra.mxu0 %v3915
  %3935 = vmatprep.subr.mxu0 0.0
  %3936 = vmatpush1.msra.mxu0 %v3916
  %3937 = vmatprep.subr.mxu0 0.0
  %3938 = vmatpush1.msra.mxu0 %v3917
  %3939 = vmatprep.subr.mxu0 0.0
  %3940 = vmatpush1.msra.mxu0 %v3918
  %3941 = vmatprep.subr.mxu0 0.0
  %3942 = vmatpush1.msra.mxu0 0.0
  %3943 = vmatprep.subr.mxu0 0.0
  %3944 = vmatpush1.msra.mxu0 0.0
  %3945 = vmatprep.subr.mxu0 0.0
  %3946 = vmatpush1.msra.mxu0 0.0
  %3947 = vmatprep.subr.mxu0 0.0
  %3948 = vmatpush1.msra.mxu0 0.0
  %3949 = vmatprep.subr.mxu0 0.0
  %3950 = vmatpush1.msra.mxu0 0.0
  %3951 = vmatprep.subr.mxu0 0.0
  %3952 = vmatpush1.msra.mxu0 0.0
  %3953 = vmatprep.subr.mxu0 0.0
  %3954 = vmatpush1.msra.mxu0 0.0
  %3955 = vmatprep.subr.mxu0 0.0
  %3956 = vmatpush1.msra.mxu0 0.0
  %3957 = vmatprep.subr.mxu0 0.0
  %3958 = vmatpush1.msra.mxu0 0.0
  %3959 = vmatprep.subr.mxu0 0.0
  %3960 = vmatpush1.msra.mxu0 0.0
  %3961 = vmatprep.subr.mxu0 0.0
  %3962 = vmatpush1.msra.mxu0 0.0
  %3963 = vmatprep.subr.mxu0 0.0
  %3964 = vmatpush1.msra.mxu0 0.0
  %3965 = vmatprep.subr.mxu0 0.0
  %3966 = vmatpush1.msra.mxu0 0.0
  %3967 = vmatprep.subr.mxu0 0.0
  %3968 = vmatpush1.msra.mxu0 0.0
  %3969 = vmatprep.subr.mxu0 0.0
  %3970 = vmatpush1.msra.mxu0 0.0
  %3971 = vmatprep.subr.mxu0 0.0
  %3972 = vmatpush1.msra.mxu0 0.0
  %3973 = vmatprep.subr.mxu0 0.0
  %3974 = vmatpush1.msra.mxu0 0.0
  %3975 = vmatprep.subr.mxu0 0.0
  %3976 = vmatpush1.msra.mxu0 0.0
  %3977 = vmatprep.subr.mxu0 0.0
  %3978 = vmatpush1.msra.mxu0 0.0
  %3979 = vmatprep.subr.mxu0 0.0
  %3980 = vmatpush1.msra.mxu0 0.0
  %3981 = vmatprep.subr.mxu0 0.0
  %3982 = vmatpush1.msra.mxu0 0.0
  %3983 = vmatprep.subr.mxu0 0.0
  %3984 = vmatpush1.msra.mxu0 0.0
  %3985 = vmatprep.subr.mxu0 0.0
  %3986 = vmatpush1.msra.mxu0 0.0
  %3987 = vmatprep.subr.mxu0 0.0
  %3988 = vmatpush1.msra.mxu0 0.0
  %3989 = vmatprep.mubr.f32.mxu0 0.0
  %3990 = vmatmul.mubr.f32.gmra.mrb[0].mxu0 %v3920
  %v3991 = vpop.f32.mrb[0].mxu0
  %v3992 = vadd.f32 0.0, %v3991
  %v3993 = vpop.f32.mrb[0].mxu0
  %3994 = vmatprep.mubr.f32.mxu0 0.0
  %3995 = vmatmul.mubr.f32.gmra.mrb[0].mxu0 %v3923
  %v3996 = vpop.f32.mrb[0].mxu0
  %v3997 = vadd.f32 0.0, %v3996
  %v3998 = vpop.f32.mrb[0].mxu0
  %3999 = vdwg.mxu0
  %4000 = vmatprep.subr.mxu0 0.0
  %4001 = vmatpush1.msra.mxu0 %v3902
  %4002 = vmatprep.subr.mxu0 0.0
  %4003 = vmatpush1.msra.mxu0 %v3903
  %4004 = vmatprep.subr.mxu0 0.0
  %4005 = vmatpush1.msra.mxu0 %v3904
  %4006 = vmatprep.subr.mxu0 0.0
  %4007 = vmatpush1.msra.mxu0 %v3905
  %4008 = vmatprep.subr.mxu0 0.0
  %4009 = vmatpush1.msra.mxu0 %v3906
  %4010 = vmatprep.subr.mxu0 0.0
  %4011 = vmatpush1.msra.mxu0 %v3907
  %4012 = vmatprep.subr.mxu0 0.0
  %4013 = vmatpush1.msra.mxu0 %v3908
  %4014 = vmatprep.subr.mxu0 0.0
  %4015 = vmatpush1.msra.mxu0 %v3909
  %4016 = vmatprep.subr.mxu0 0.0
  %4017 = vmatpush1.msra.mxu0 0.0
  %4018 = vmatprep.subr.mxu0 0.0
  %4019 = vmatpush1.msra.mxu0 0.0
  %4020 = vmatprep.subr.mxu0 0.0
  %4021 = vmatpush1.msra.mxu0 0.0
  %4022 = vmatprep.subr.mxu0 0.0
  %4023 = vmatpush1.msra.mxu0 0.0
  %4024 = vmatprep.subr.mxu0 0.0
  %4025 = vmatpush1.msra.mxu0 0.0
  %4026 = vmatprep.subr.mxu0 0.0
  %4027 = vmatpush1.msra.mxu0 0.0
  %4028 = vmatprep.subr.mxu0 0.0
  %4029 = vmatpush1.msra.mxu0 0.0
  %4030 = vmatprep.subr.mxu0 0.0
  %4031 = vmatpush1.msra.mxu0 0.0
  %4032 = vmatprep.subr.mxu0 0.0
  %4033 = vmatpush1.msra.mxu0 0.0
  %4034 = vmatprep.subr.mxu0 0.0
  %4035 = vmatpush1.msra.mxu0 0.0
  %4036 = vmatprep.subr.mxu0 0.0
  %4037 = vmatpush1.msra.mxu0 0.0
  %4038 = vmatprep.subr.mxu0 0.0
  %4039 = vmatpush1.msra.mxu0 0.0
  %4040 = vmatprep.subr.mxu0 0.0
  %4041 = vmatpush1.msra.mxu0 0.0
  %4042 = vmatprep.subr.mxu0 0.0
  %4043 = vmatpush1.msra.mxu0 0.0
  %4044 = vmatprep.subr.mxu0 0.0
  %4045 = vmatpush1.msra.mxu0 0.0
  %4046 = vmatprep.subr.mxu0 0.0
  %4047 = vmatpush1.msra.mxu0 0.0
  %4048 = vmatprep.subr.mxu0 0.0
  %4049 = vmatpush1.msra.mxu0 0.0
  %4050 = vmatprep.subr.mxu0 0.0
  %4051 = vmatpush1.msra.mxu0 0.0
  %4052 = vmatprep.subr.mxu0 0.0
  %4053 = vmatpush1.msra.mxu0 0.0
  %4054 = vmatprep.subr.mxu0 0.0
  %4055 = vmatpush1.msra.mxu0 0.0
  %4056 = vmatprep.subr.mxu0 0.0
  %4057 = vmatpush1.msra.mxu0 0.0
  %4058 = vmatprep.subr.mxu0 0.0
  %4059 = vmatpush1.msra.mxu0 0.0
  %4060 = vmatprep.subr.mxu0 0.0
  %4061 = vmatpush1.msra.mxu0 0.0
  %4062 = vmatprep.subr.mxu0 0.0
  %4063 = vmatpush1.msra.mxu0 0.0
  %4064 = vmatprep.mubr.f32.mxu0 0.0
  %4065 = vmatmul.mubr.f32.gmra.mrb[0].mxu0 %v146
  %v4066 = vpop.f32.mrb[0].mxu0
  %v4067 = vadd.f32 %v3992, %v4066
  %v4068 = vpop.f32.mrb[0].mxu0
  %4069 = vmatprep.mubr.f32.mxu0 0.0
  %4070 = vmatmul.mubr.f32.gmra.mrb[0].mxu0 %v149
  %v4071 = vpop.f32.mrb[0].mxu0
  %v4072 = vadd.f32 %v3997, %v4071
  %v4073 = vpop.f32.mrb[0].mxu0
  %4074 = vdwg.mxu0
  %s4075 = scalar_lea.vmem %s19, 1
  %v4076 = vld [vmem:[%s4075] sm:$0x1]
  %v4078 = vlaneseq
  %v4079 = vshrl.u32 %v4078, 7
  %v4080 = vsub.s32 0, %v4079
  %v4081 = vrot.slane %v4076, %v4080
  %v4083 = vadd.f32 %v4067, %v4081
  %v4084 = vadd.f32 %v4072, %v4081
  %v4085 = vmul.f32 %v4083, %v4083
  %v4086 = vmul.f32 %v4084, %v4084
  %v4087 = vmul.f32 %v4083, %v4085
  %v4088 = vmul.f32 %v4084, %v4086
  %v4089 = vmul.f32 %v4087, 0.044715
  %v4090 = vmul.f32 %v4088, 0.044715
  %v4091 = vadd.f32 %v4083, %v4089
  %v4092 = vadd.f32 %v4084, %v4090
  %v4093 = vmul.f32 %v4091, 0.7978846
  %v4094 = vmul.f32 %v4092, 0.7978846
  %v4095 = vtanh.pop %v4093
  %v4096 = vtanh.pop %v4094
  %v4097 = vadd.f32 %v4095, 1.0
  %v4098 = vadd.f32 %v4096, 1.0
  %v4099 = vmul.f32 %v4097, 0.5
  %v4100 = vmul.f32 %v4098, 0.5
  %v4101 = vmul.f32 %v4083, %v4099
  %v4102 = vmul.f32 %v4084, %v4100
  %s4103 = scalar_lea.vmem %s7, 128
  %v4104 = vld [vmem:[%s4103] sm:$0xff]
  %v4105 = vld [vmem:[%s4103 + $0x8] sm:$0xff]
  %v4106 = vld [vmem:[%s4103 + $0x10] sm:$0xff]
  %v4107 = vld [vmem:[%s4103 + $0x18] sm:$0xff]
  %v4108 = vld [vmem:[%s4103 + $0x20] sm:$0xff]
  %v4109 = vld [vmem:[%s4103 + $0x28] sm:$0xff]
  %v4110 = vld [vmem:[%s4103 + $0x30] sm:$0xff]
  %v4111 = vld [vmem:[%s4103 + $0x38] sm:$0xff]
  %v4113 = vsel %vm144, %v4101, 0
  %v4116 = vsel %vm144, %v4102, 0
  %4118 = vmatprep.subr.mxu0 0.0
  %4119 = vmatpush1.msra.mxu0 %v4104
  %4120 = vmatprep.subr.mxu0 0.0
  %4121 = vmatpush1.msra.mxu0 %v4105
  %4122 = vmatprep.subr.mxu0 0.0
  %4123 = vmatpush1.msra.mxu0 %v4106
  %4124 = vmatprep.subr.mxu0 0.0
  %4125 = vmatpush1.msra.mxu0 %v4107
  %4126 = vmatprep.subr.mxu0 0.0
  %4127 = vmatpush1.msra.mxu0 %v4108
  %4128 = vmatprep.subr.mxu0 0.0
  %4129 = vmatpush1.msra.mxu0 %v4109
  %4130 = vmatprep.subr.mxu0 0.0
  %4131 = vmatpush1.msra.mxu0 %v4110
  %4132 = vmatprep.subr.mxu0 0.0
  %4133 = vmatpush1.msra.mxu0 %v4111
  %4134 = vmatprep.subr.mxu0 0.0
  %4135 = vmatpush1.msra.mxu0 0.0
  %4136 = vmatprep.subr.mxu0 0.0
  %4137 = vmatpush1.msra.mxu0 0.0
  %4138 = vmatprep.subr.mxu0 0.0
  %4139 = vmatpush1.msra.mxu0 0.0
  %4140 = vmatprep.subr.mxu0 0.0
  %4141 = vmatpush1.msra.mxu0 0.0
  %4142 = vmatprep.subr.mxu0 0.0
  %4143 = vmatpush1.msra.mxu0 0.0
  %4144 = vmatprep.subr.mxu0 0.0
  %4145 = vmatpush1.msra.mxu0 0.0
  %4146 = vmatprep.subr.mxu0 0.0
  %4147 = vmatpush1.msra.mxu0 0.0
  %4148 = vmatprep.subr.mxu0 0.0
  %4149 = vmatpush1.msra.mxu0 0.0
  %4150 = vmatprep.subr.mxu0 0.0
  %4151 = vmatpush1.msra.mxu0 0.0
  %4152 = vmatprep.subr.mxu0 0.0
  %4153 = vmatpush1.msra.mxu0 0.0
  %4154 = vmatprep.subr.mxu0 0.0
  %4155 = vmatpush1.msra.mxu0 0.0
  %4156 = vmatprep.subr.mxu0 0.0
  %4157 = vmatpush1.msra.mxu0 0.0
  %4158 = vmatprep.subr.mxu0 0.0
  %4159 = vmatpush1.msra.mxu0 0.0
  %4160 = vmatprep.subr.mxu0 0.0
  %4161 = vmatpush1.msra.mxu0 0.0
  %4162 = vmatprep.subr.mxu0 0.0
  %4163 = vmatpush1.msra.mxu0 0.0
  %4164 = vmatprep.subr.mxu0 0.0
  %4165 = vmatpush1.msra.mxu0 0.0
  %4166 = vmatprep.subr.mxu0 0.0
  %4167 = vmatpush1.msra.mxu0 0.0
  %4168 = vmatprep.subr.mxu0 0.0
  %4169 = vmatpush1.msra.mxu0 0.0
  %4170 = vmatprep.subr.mxu0 0.0
  %4171 = vmatpush1.msra.mxu0 0.0
  %4172 = vmatprep.subr.mxu0 0.0
  %4173 = vmatpush1.msra.mxu0 0.0
  %4174 = vmatprep.subr.mxu0 0.0
  %4175 = vmatpush1.msra.mxu0 0.0
  %4176 = vmatprep.subr.mxu0 0.0
  %4177 = vmatpush1.msra.mxu0 0.0
  %4178 = vmatprep.subr.mxu0 0.0
  %4179 = vmatpush1.msra.mxu0 0.0
  %4180 = vmatprep.subr.mxu0 0.0
  %4181 = vmatpush1.msra.mxu0 0.0
  %4182 = vmatprep.mubr.f32.mxu0 0.0
  %4183 = vmatmul.mubr.f32.gmra.mrb[0].mxu0 %v4113
  %v4184 = vpop.f32.mrb[0].mxu0
  %v4185 = vadd.f32 0.0, %v4184
  %v4186 = vpop.f32.mrb[0].mxu0
  %4187 = vmatprep.mubr.f32.mxu0 0.0
  %4188 = vmatmul.mubr.f32.gmra.mrb[0].mxu0 %v4116
  %v4189 = vpop.f32.mrb[0].mxu0
  %v4190 = vadd.f32 0.0, %v4189
  %v4191 = vpop.f32.mrb[0].mxu0
  %4192 = vdwg.mxu0
  %s4193 = scalar_lea.vmem %s8, 128
  %v4194 = vld [vmem:[%s4193] sm:$0xff]
  %v4195 = vld [vmem:[%s4193 + $0x8] sm:$0xff]
  %v4196 = vld [vmem:[%s4193 + $0x10] sm:$0xff]
  %v4197 = vld [vmem:[%s4193 + $0x18] sm:$0xff]
  %v4198 = vld [vmem:[%s4193 + $0x20] sm:$0xff]
  %v4199 = vld [vmem:[%s4193 + $0x28] sm:$0xff]
  %v4200 = vld [vmem:[%s4193 + $0x30] sm:$0xff]
  %v4201 = vld [vmem:[%s4193 + $0x38] sm:$0xff]
  %4202 = vmatprep.subr.mxu0 0.0
  %4203 = vmatpush1.msra.mxu0 %v4194
  %4204 = vmatprep.subr.mxu0 0.0
  %4205 = vmatpush1.msra.mxu0 %v4195
  %4206 = vmatprep.subr.mxu0 0.0
  %4207 = vmatpush1.msra.mxu0 %v4196
  %4208 = vmatprep.subr.mxu0 0.0
  %4209 = vmatpush1.msra.mxu0 %v4197
  %4210 = vmatprep.subr.mxu0 0.0
  %4211 = vmatpush1.msra.mxu0 %v4198
  %4212 = vmatprep.subr.mxu0 0.0
  %4213 = vmatpush1.msra.mxu0 %v4199
  %4214 = vmatprep.subr.mxu0 0.0
  %4215 = vmatpush1.msra.mxu0 %v4200
  %4216 = vmatprep.subr.mxu0 0.0
  %4217 = vmatpush1.msra.mxu0 %v4201
  %4218 = vmatprep.subr.mxu0 0.0
  %4219 = vmatpush1.msra.mxu0 0.0
  %4220 = vmatprep.subr.mxu0 0.0
  %4221 = vmatpush1.msra.mxu0 0.0
  %4222 = vmatprep.subr.mxu0 0.0
  %4223 = vmatpush1.msra.mxu0 0.0
  %4224 = vmatprep.subr.mxu0 0.0
  %4225 = vmatpush1.msra.mxu0 0.0
  %4226 = vmatprep.subr.mxu0 0.0
  %4227 = vmatpush1.msra.mxu0 0.0
  %4228 = vmatprep.subr.mxu0 0.0
  %4229 = vmatpush1.msra.mxu0 0.0
  %4230 = vmatprep.subr.mxu0 0.0
  %4231 = vmatpush1.msra.mxu0 0.0
  %4232 = vmatprep.subr.mxu0 0.0
  %4233 = vmatpush1.msra.mxu0 0.0
  %4234 = vmatprep.subr.mxu0 0.0
  %4235 = vmatpush1.msra.mxu0 0.0
  %4236 = vmatprep.subr.mxu0 0.0
  %4237 = vmatpush1.msra.mxu0 0.0
  %4238 = vmatprep.subr.mxu0 0.0
  %4239 = vmatpush1.msra.mxu0 0.0
  %4240 = vmatprep.subr.mxu0 0.0
  %4241 = vmatpush1.msra.mxu0 0.0
  %4242 = vmatprep.subr.mxu0 0.0
  %4243 = vmatpush1.msra.mxu0 0.0
  %4244 = vmatprep.subr.mxu0 0.0
  %4245 = vmatpush1.msra.mxu0 0.0
  %4246 = vmatprep.subr.mxu0 0.0
  %4247 = vmatpush1.msra.mxu0 0.0
  %4248 = vmatprep.subr.mxu0 0.0
  %4249 = vmatpush1.msra.mxu0 0.0
  %4250 = vmatprep.subr.mxu0 0.0
  %4251 = vmatpush1.msra.mxu0 0.0
  %4252 = vmatprep.subr.mxu0 0.0
  %4253 = vmatpush1.msra.mxu0 0.0
  %4254 = vmatprep.subr.mxu0 0.0
  %4255 = vmatpush1.msra.mxu0 0.0
  %4256 = vmatprep.subr.mxu0 0.0
  %4257 = vmatpush1.msra.mxu0 0.0
  %4258 = vmatprep.subr.mxu0 0.0
  %4259 = vmatpush1.msra.mxu0 0.0
  %4260 = vmatprep.subr.mxu0 0.0
  %4261 = vmatpush1.msra.mxu0 0.0
  %4262 = vmatprep.subr.mxu0 0.0
  %4263 = vmatpush1.msra.mxu0 0.0
  %4264 = vmatprep.subr.mxu0 0.0
  %4265 = vmatpush1.msra.mxu0 0.0
  %4266 = vmatprep.mubr.f32.mxu0 0.0
  %4267 = vmatmul.mubr.f32.gmra.mrb[0].mxu0 %v4113
  %v4268 = vpop.f32.mrb[0].mxu0
  %v4269 = vadd.f32 0.0, %v4268
  %v4270 = vpop.f32.mrb[0].mxu0
  %4271 = vmatprep.mubr.f32.mxu0 0.0
  %4272 = vmatmul.mubr.f32.gmra.mrb[0].mxu0 %v4116
  %v4273 = vpop.f32.mrb[0].mxu0
  %v4274 = vadd.f32 0.0, %v4273
  %v4275 = vpop.f32.mrb[0].mxu0
  %4276 = vdwg.mxu0
  %s4277 = scalar_lea.vmem %s9, 16
  %v4278 = vld [vmem:[%s4277] sm:$0xff]
  %v4280 = vsel %vm350, %v4274, 0
  %4282 = vmatprep.subr.mxu0 0.0
  %4283 = vmatpush1.msra.mxu0 %v4269
  %4284 = vmatprep.subr.mxu0 0.0
  %4285 = vmatpush1.msra.mxu0 %v4280
  %4286 = vmatprep.subr.mxu0 0.0
  %4287 = vmatpush1.msra.mxu0 0.0
  %4288 = vmatprep.subr.mxu0 0.0
  %4289 = vmatpush1.msra.mxu0 0.0
  %4290 = vmatprep.subr.mxu0 0.0
  %4291 = vmatpush1.msra.mxu0 0.0
  %4292 = vmatprep.subr.mxu0 0.0
  %4293 = vmatpush1.msra.mxu0 0.0
  %4294 = vmatprep.subr.mxu0 0.0
  %4295 = vmatpush1.msra.mxu0 0.0
  %4296 = vmatprep.subr.mxu0 0.0
  %4297 = vmatpush1.msra.mxu0 0.0
  %4298 = vmatprep.subr.mxu0 0.0
  %4299 = vmatpush1.msra.mxu0 0.0
  %4300 = vmatprep.subr.mxu0 0.0
  %4301 = vmatpush1.msra.mxu0 0.0
  %4302 = vmatprep.subr.mxu0 0.0
  %4303 = vmatpush1.msra.mxu0 0.0
  %4304 = vmatprep.subr.mxu0 0.0
  %4305 = vmatpush1.msra.mxu0 0.0
  %4306 = vmatprep.subr.mxu0 0.0
  %4307 = vmatpush1.msra.mxu0 0.0
  %4308 = vmatprep.subr.mxu0 0.0
  %4309 = vmatpush1.msra.mxu0 0.0
  %4310 = vmatprep.subr.mxu0 0.0
  %4311 = vmatpush1.msra.mxu0 0.0
  %4312 = vmatprep.subr.mxu0 0.0
  %4313 = vmatpush1.msra.mxu0 0.0
  %4314 = vmatprep.subr.mxu0 0.0
  %4315 = vmatpush1.msra.mxu0 0.0
  %4316 = vmatprep.subr.mxu0 0.0
  %4317 = vmatpush1.msra.mxu0 0.0
  %4318 = vmatprep.subr.mxu0 0.0
  %4319 = vmatpush1.msra.mxu0 0.0
  %4320 = vmatprep.subr.mxu0 0.0
  %4321 = vmatpush1.msra.mxu0 0.0
  %4322 = vmatprep.subr.mxu0 0.0
  %4323 = vmatpush1.msra.mxu0 0.0
  %4324 = vmatprep.subr.mxu0 0.0
  %4325 = vmatpush1.msra.mxu0 0.0
  %4326 = vmatprep.subr.mxu0 0.0
  %4327 = vmatpush1.msra.mxu0 0.0
  %4328 = vmatprep.subr.mxu0 0.0
  %4329 = vmatpush1.msra.mxu0 0.0
  %4330 = vmatprep.subr.mxu0 0.0
  %4331 = vmatpush1.msra.mxu0 0.0
  %4332 = vmatprep.subr.mxu0 0.0
  %4333 = vmatpush1.msra.mxu0 0.0
  %4334 = vmatprep.subr.mxu0 0.0
  %4335 = vmatpush1.msra.mxu0 0.0
  %4336 = vmatprep.subr.mxu0 0.0
  %4337 = vmatpush1.msra.mxu0 0.0
  %4338 = vmatprep.subr.mxu0 0.0
  %4339 = vmatpush1.msra.mxu0 0.0
  %4340 = vmatprep.subr.mxu0 0.0
  %4341 = vmatpush1.msra.mxu0 0.0
  %4342 = vmatprep.subr.mxu0 0.0
  %4343 = vmatpush1.msra.mxu0 0.0
  %4344 = vmatprep.subr.mxu0 0.0
  %4345 = vmatpush1.msra.mxu0 0.0
  %4346 = vmatprep.mubr.f32.mxu0 0.0
  %4347 = vmatmul.mubr.f32.gmra.mrb[0].mxu0 %v312
  %v4348 = vpop.f32.mrb[0].mxu0
  %v4349 = vadd.f32 0.0, %v4348
  %v4350 = vpop.f32.mrb[0].mxu0
  %4351 = vmatprep.mubr.f32.mxu0 0.0
  %4352 = vmatmul.mubr.f32.gmra.mrb[0].mxu0 %v315
  %v4353 = vpop.f32.mrb[0].mxu0
  %v4354 = vadd.f32 0.0, %v4353
  %v4355 = vpop.f32.mrb[0].mxu0
  %4356 = vmatprep.mubr.f32.mxu0 0.0
  %4357 = vmatmul.mubr.f32.gmra.mrb[0].mxu0 %v318
  %v4358 = vpop.f32.mrb[0].mxu0
  %v4359 = vadd.f32 0.0, %v4358
  %v4360 = vpop.f32.mrb[0].mxu0
  %4361 = vmatprep.mubr.f32.mxu0 0.0
  %4362 = vmatmul.mubr.f32.gmra.mrb[0].mxu0 %v321
  %v4363 = vpop.f32.mrb[0].mxu0
  %v4364 = vadd.f32 0.0, %v4363
  %v4365 = vpop.f32.mrb[0].mxu0
  %4366 = vmatprep.mubr.f32.mxu0 0.0
  %4367 = vmatmul.mubr.f32.gmra.mrb[0].mxu0 %v324
  %v4368 = vpop.f32.mrb[0].mxu0
  %v4369 = vadd.f32 0.0, %v4368
  %v4370 = vpop.f32.mrb[0].mxu0
  %4371 = vmatprep.mubr.f32.mxu0 0.0
  %4372 = vmatmul.mubr.f32.gmra.mrb[0].mxu0 %v327
  %v4373 = vpop.f32.mrb[0].mxu0
  %v4374 = vadd.f32 0.0, %v4373
  %v4375 = vpop.f32.mrb[0].mxu0
  %4376 = vmatprep.mubr.f32.mxu0 0.0
  %4377 = vmatmul.mubr.f32.gmra.mrb[0].mxu0 %v330
  %v4378 = vpop.f32.mrb[0].mxu0
  %v4379 = vadd.f32 0.0, %v4378
  %v4380 = vpop.f32.mrb[0].mxu0
  %4381 = vmatprep.mubr.f32.mxu0 0.0
  %4382 = vmatmul.mubr.f32.gmra.mrb[0].mxu0 %v333
  %v4383 = vpop.f32.mrb[0].mxu0
  %v4384 = vadd.f32 0.0, %v4383
  %v4385 = vpop.f32.mrb[0].mxu0
  %4386 = vmatprep.mubr.f32.mxu0 0.0
  %4387 = vmatmul.mubr.f32.gmra.mrb[0].mxu0 %v336
  %v4388 = vpop.f32.mrb[0].mxu0
  %v4389 = vadd.f32 0.0, %v4388
  %v4390 = vpop.f32.mrb[0].mxu0
  %4391 = vmatprep.mubr.f32.mxu0 0.0
  %4392 = vmatmul.mubr.f32.gmra.mrb[0].mxu0 %v339
  %v4393 = vpop.f32.mrb[0].mxu0
  %v4394 = vadd.f32 0.0, %v4393
  %v4395 = vpop.f32.mrb[0].mxu0
  %4396 = vmatprep.mubr.f32.mxu0 0.0
  %4397 = vmatmul.mubr.f32.gmra.mrb[0].mxu0 %v342
  %v4398 = vpop.f32.mrb[0].mxu0
  %v4399 = vadd.f32 0.0, %v4398
  %v4400 = vpop.f32.mrb[0].mxu0
  %4401 = vmatprep.mubr.f32.mxu0 0.0
  %4402 = vmatmul.mubr.f32.gmra.mrb[0].mxu0 %v345
  %v4403 = vpop.f32.mrb[0].mxu0
  %v4404 = vadd.f32 0.0, %v4403
  %v4405 = vpop.f32.mrb[0].mxu0
  %4406 = vmatprep.mubr.f32.mxu0 0.0
  %4407 = vmatmul.mubr.f32.gmra.mrb[0].mxu0 %v348
  %v4408 = vpop.f32.mrb[0].mxu0
  %v4409 = vadd.f32 0.0, %v4408
  %v4410 = vpop.f32.mrb[0].mxu0
  %4411 = vdwg.mxu0
  %v4413 = vsel %vm350, %v4190, 0
  %4415 = vmatprep.subr.mxu0 0.0
  %4416 = vmatpush1.msra.mxu0 %v4185
  %4417 = vmatprep.subr.mxu0 0.0
  %4418 = vmatpush1.msra.mxu0 %v4413
  %4419 = vmatprep.subr.mxu0 0.0
  %4420 = vmatpush1.msra.mxu0 0.0
  %4421 = vmatprep.subr.mxu0 0.0
  %4422 = vmatpush1.msra.mxu0 0.0
  %4423 = vmatprep.subr.mxu0 0.0
  %4424 = vmatpush1.msra.mxu0 0.0
  %4425 = vmatprep.subr.mxu0 0.0
  %4426 = vmatpush1.msra.mxu0 0.0
  %4427 = vmatprep.subr.mxu0 0.0
  %4428 = vmatpush1.msra.mxu0 0.0
  %4429 = vmatprep.subr.mxu0 0.0
  %4430 = vmatpush1.msra.mxu0 0.0
  %4431 = vmatprep.subr.mxu0 0.0
  %4432 = vmatpush1.msra.mxu0 0.0
  %4433 = vmatprep.subr.mxu0 0.0
  %4434 = vmatpush1.msra.mxu0 0.0
  %4435 = vmatprep.subr.mxu0 0.0
  %4436 = vmatpush1.msra.mxu0 0.0
  %4437 = vmatprep.subr.mxu0 0.0
  %4438 = vmatpush1.msra.mxu0 0.0
  %4439 = vmatprep.subr.mxu0 0.0
  %4440 = vmatpush1.msra.mxu0 0.0
  %4441 = vmatprep.subr.mxu0 0.0
  %4442 = vmatpush1.msra.mxu0 0.0
  %4443 = vmatprep.subr.mxu0 0.0
  %4444 = vmatpush1.msra.mxu0 0.0
  %4445 = vmatprep.subr.mxu0 0.0
  %4446 = vmatpush1.msra.mxu0 0.0
  %4447 = vmatprep.subr.mxu0 0.0
  %4448 = vmatpush1.msra.mxu0 0.0
  %4449 = vmatprep.subr.mxu0 0.0
  %4450 = vmatpush1.msra.mxu0 0.0
  %4451 = vmatprep.subr.mxu0 0.0
  %4452 = vmatpush1.msra.mxu0 0.0
  %4453 = vmatprep.subr.mxu0 0.0
  %4454 = vmatpush1.msra.mxu0 0.0
  %4455 = vmatprep.subr.mxu0 0.0
  %4456 = vmatpush1.msra.mxu0 0.0
  %4457 = vmatprep.subr.mxu0 0.0
  %4458 = vmatpush1.msra.mxu0 0.0
  %4459 = vmatprep.subr.mxu0 0.0
  %4460 = vmatpush1.msra.mxu0 0.0
  %4461 = vmatprep.subr.mxu0 0.0
  %4462 = vmatpush1.msra.mxu0 0.0
  %4463 = vmatprep.subr.mxu0 0.0
  %4464 = vmatpush1.msra.mxu0 0.0
  %4465 = vmatprep.subr.mxu0 0.0
  %4466 = vmatpush1.msra.mxu0 0.0
  %4467 = vmatprep.subr.mxu0 0.0
  %4468 = vmatpush1.msra.mxu0 0.0
  %4469 = vmatprep.subr.mxu0 0.0
  %4470 = vmatpush1.msra.mxu0 0.0
  %4471 = vmatprep.subr.mxu0 0.0
  %4472 = vmatpush1.msra.mxu0 0.0
  %4473 = vmatprep.subr.mxu0 0.0
  %4474 = vmatpush1.msra.mxu0 0.0
  %4475 = vmatprep.subr.mxu0 0.0
  %4476 = vmatpush1.msra.mxu0 0.0
  %4477 = vmatprep.subr.mxu0 0.0
  %4478 = vmatpush1.msra.mxu0 0.0
  %4479 = vmatprep.mubr.f32.mxu0 0.0
  %4480 = vmatmul.mubr.f32.gmra.mrb[0].mxu0 %v485
  %v4481 = vpop.f32.mrb[0].mxu0
  %v4482 = vadd.f32 %v4349, %v4481
  %v4483 = vpop.f32.mrb[0].mxu0
  %4484 = vmatprep.mubr.f32.mxu0 0.0
  %4485 = vmatmul.mubr.f32.gmra.mrb[0].mxu0 %v488
  %v4486 = vpop.f32.mrb[0].mxu0
  %v4487 = vadd.f32 %v4354, %v4486
  %v4488 = vpop.f32.mrb[0].mxu0
  %4489 = vmatprep.mubr.f32.mxu0 0.0
  %4490 = vmatmul.mubr.f32.gmra.mrb[0].mxu0 %v491
  %v4491 = vpop.f32.mrb[0].mxu0
  %v4492 = vadd.f32 %v4359, %v4491
  %v4493 = vpop.f32.mrb[0].mxu0
  %4494 = vmatprep.mubr.f32.mxu0 0.0
  %4495 = vmatmul.mubr.f32.gmra.mrb[0].mxu0 %v494
  %v4496 = vpop.f32.mrb[0].mxu0
  %v4497 = vadd.f32 %v4364, %v4496
  %v4498 = vpop.f32.mrb[0].mxu0
  %4499 = vmatprep.mubr.f32.mxu0 0.0
  %4500 = vmatmul.mubr.f32.gmra.mrb[0].mxu0 %v497
  %v4501 = vpop.f32.mrb[0].mxu0
  %v4502 = vadd.f32 %v4369, %v4501
  %v4503 = vpop.f32.mrb[0].mxu0
  %4504 = vmatprep.mubr.f32.mxu0 0.0
  %4505 = vmatmul.mubr.f32.gmra.mrb[0].mxu0 %v500
  %v4506 = vpop.f32.mrb[0].mxu0
  %v4507 = vadd.f32 %v4374, %v4506
  %v4508 = vpop.f32.mrb[0].mxu0
  %4509 = vmatprep.mubr.f32.mxu0 0.0
  %4510 = vmatmul.mubr.f32.gmra.mrb[0].mxu0 %v503
  %v4511 = vpop.f32.mrb[0].mxu0
  %v4512 = vadd.f32 %v4379, %v4511
  %v4513 = vpop.f32.mrb[0].mxu0
  %4514 = vmatprep.mubr.f32.mxu0 0.0
  %4515 = vmatmul.mubr.f32.gmra.mrb[0].mxu0 %v506
  %v4516 = vpop.f32.mrb[0].mxu0
  %v4517 = vadd.f32 %v4384, %v4516
  %v4518 = vpop.f32.mrb[0].mxu0
  %4519 = vmatprep.mubr.f32.mxu0 0.0
  %4520 = vmatmul.mubr.f32.gmra.mrb[0].mxu0 %v509
  %v4521 = vpop.f32.mrb[0].mxu0
  %v4522 = vadd.f32 %v4389, %v4521
  %v4523 = vpop.f32.mrb[0].mxu0
  %4524 = vmatprep.mubr.f32.mxu0 0.0
  %4525 = vmatmul.mubr.f32.gmra.mrb[0].mxu0 %v512
  %v4526 = vpop.f32.mrb[0].mxu0
  %v4527 = vadd.f32 %v4394, %v4526
  %v4528 = vpop.f32.mrb[0].mxu0
  %4529 = vmatprep.mubr.f32.mxu0 0.0
  %4530 = vmatmul.mubr.f32.gmra.mrb[0].mxu0 %v515
  %v4531 = vpop.f32.mrb[0].mxu0
  %v4532 = vadd.f32 %v4399, %v4531
  %v4533 = vpop.f32.mrb[0].mxu0
  %4534 = vmatprep.mubr.f32.mxu0 0.0
  %4535 = vmatmul.mubr.f32.gmra.mrb[0].mxu0 %v518
  %v4536 = vpop.f32.mrb[0].mxu0
  %v4537 = vadd.f32 %v4404, %v4536
  %v4538 = vpop.f32.mrb[0].mxu0
  %4539 = vmatprep.mubr.f32.mxu0 0.0
  %4540 = vmatmul.mubr.f32.gmra.mrb[0].mxu0 %v521
  %v4541 = vpop.f32.mrb[0].mxu0
  %v4542 = vadd.f32 %v4409, %v4541
  %v4543 = vpop.f32.mrb[0].mxu0
  %4544 = vdwg.mxu0
  %4545 = vmatprep.subr.mxu0 0.0
  %4546 = vmatpush1.msra.mxu0 %v4278
  %4547 = vmatprep.subr.mxu0 0.0
  %4548 = vmatpush1.msra.mxu0 0.0
  %4549 = vmatprep.subr.mxu0 0.0
  %4550 = vmatpush1.msra.mxu0 0.0
  %4551 = vmatprep.subr.mxu0 0.0
  %4552 = vmatpush1.msra.mxu0 0.0
  %4553 = vmatprep.subr.mxu0 0.0
  %4554 = vmatpush1.msra.mxu0 0.0
  %4555 = vmatprep.subr.mxu0 0.0
  %4556 = vmatpush1.msra.mxu0 0.0
  %4557 = vmatprep.subr.mxu0 0.0
  %4558 = vmatpush1.msra.mxu0 0.0
  %4559 = vmatprep.subr.mxu0 0.0
  %4560 = vmatpush1.msra.mxu0 0.0
  %4561 = vmatprep.subr.mxu0 0.0
  %4562 = vmatpush1.msra.mxu0 0.0
  %4563 = vmatprep.subr.mxu0 0.0
  %4564 = vmatpush1.msra.mxu0 0.0
  %4565 = vmatprep.subr.mxu0 0.0
  %4566 = vmatpush1.msra.mxu0 0.0
  %4567 = vmatprep.subr.mxu0 0.0
  %4568 = vmatpush1.msra.mxu0 0.0
  %4569 = vmatprep.subr.mxu0 0.0
  %4570 = vmatpush1.msra.mxu0 0.0
  %4571 = vmatprep.subr.mxu0 0.0
  %4572 = vmatpush1.msra.mxu0 0.0
  %4573 = vmatprep.subr.mxu0 0.0
  %4574 = vmatpush1.msra.mxu0 0.0
  %4575 = vmatprep.subr.mxu0 0.0
  %4576 = vmatpush1.msra.mxu0 0.0
  %4577 = vmatprep.subr.mxu0 0.0
  %4578 = vmatpush1.msra.mxu0 0.0
  %4579 = vmatprep.subr.mxu0 0.0
  %4580 = vmatpush1.msra.mxu0 0.0
  %4581 = vmatprep.subr.mxu0 0.0
  %4582 = vmatpush1.msra.mxu0 0.0
  %4583 = vmatprep.subr.mxu0 0.0
  %4584 = vmatpush1.msra.mxu0 0.0
  %4585 = vmatprep.subr.mxu0 0.0
  %4586 = vmatpush1.msra.mxu0 0.0
  %4587 = vmatprep.subr.mxu0 0.0
  %4588 = vmatpush1.msra.mxu0 0.0
  %4589 = vmatprep.subr.mxu0 0.0
  %4590 = vmatpush1.msra.mxu0 0.0
  %4591 = vmatprep.subr.mxu0 0.0
  %4592 = vmatpush1.msra.mxu0 0.0
  %4593 = vmatprep.subr.mxu0 0.0
  %4594 = vmatpush1.msra.mxu0 0.0
  %4595 = vmatprep.subr.mxu0 0.0
  %4596 = vmatpush1.msra.mxu0 0.0
  %4597 = vmatprep.subr.mxu0 0.0
  %4598 = vmatpush1.msra.mxu0 0.0
  %4599 = vmatprep.subr.mxu0 0.0
  %4600 = vmatpush1.msra.mxu0 0.0
  %4601 = vmatprep.subr.mxu0 0.0
  %4602 = vmatpush1.msra.mxu0 0.0
  %4603 = vmatprep.subr.mxu0 0.0
  %4604 = vmatpush1.msra.mxu0 0.0
  %4605 = vmatprep.subr.mxu0 0.0
  %4606 = vmatpush1.msra.mxu0 0.0
  %4607 = vmatprep.subr.mxu0 0.0
  %4608 = vmatpush1.msra.mxu0 0.0
  %4609 = vmatprep.mubr.f32.mxu0 0.0
  %4610 = vmatmul.mubr.f32.gmra.mrb[0].mxu0 %v658
  %v4611 = vpop.f32.mrb[0].mxu0
  %v4612 = vadd.f32 %v4482, %v4611
  %v4613 = vpop.f32.mrb[0].mxu0
  %4614 = vmatprep.mubr.f32.mxu0 0.0
  %4615 = vmatmul.mubr.f32.gmra.mrb[0].mxu0 %v661
  %v4616 = vpop.f32.mrb[0].mxu0
  %v4617 = vadd.f32 %v4487, %v4616
  %v4618 = vpop.f32.mrb[0].mxu0
  %4619 = vmatprep.mubr.f32.mxu0 0.0
  %4620 = vmatmul.mubr.f32.gmra.mrb[0].mxu0 %v664
  %v4621 = vpop.f32.mrb[0].mxu0
  %v4622 = vadd.f32 %v4492, %v4621
  %v4623 = vpop.f32.mrb[0].mxu0
  %4624 = vmatprep.mubr.f32.mxu0 0.0
  %4625 = vmatmul.mubr.f32.gmra.mrb[0].mxu0 %v667
  %v4626 = vpop.f32.mrb[0].mxu0
  %v4627 = vadd.f32 %v4497, %v4626
  %v4628 = vpop.f32.mrb[0].mxu0
  %4629 = vmatprep.mubr.f32.mxu0 0.0
  %4630 = vmatmul.mubr.f32.gmra.mrb[0].mxu0 %v670
  %v4631 = vpop.f32.mrb[0].mxu0
  %v4632 = vadd.f32 %v4502, %v4631
  %v4633 = vpop.f32.mrb[0].mxu0
  %4634 = vmatprep.mubr.f32.mxu0 0.0
  %4635 = vmatmul.mubr.f32.gmra.mrb[0].mxu0 %v673
  %v4636 = vpop.f32.mrb[0].mxu0
  %v4637 = vadd.f32 %v4507, %v4636
  %v4638 = vpop.f32.mrb[0].mxu0
  %4639 = vmatprep.mubr.f32.mxu0 0.0
  %4640 = vmatmul.mubr.f32.gmra.mrb[0].mxu0 %v676
  %v4641 = vpop.f32.mrb[0].mxu0
  %v4642 = vadd.f32 %v4512, %v4641
  %v4643 = vpop.f32.mrb[0].mxu0
  %4644 = vmatprep.mubr.f32.mxu0 0.0
  %4645 = vmatmul.mubr.f32.gmra.mrb[0].mxu0 %v679
  %v4646 = vpop.f32.mrb[0].mxu0
  %v4647 = vadd.f32 %v4517, %v4646
  %v4648 = vpop.f32.mrb[0].mxu0
  %4649 = vmatprep.mubr.f32.mxu0 0.0
  %4650 = vmatmul.mubr.f32.gmra.mrb[0].mxu0 %v682
  %v4651 = vpop.f32.mrb[0].mxu0
  %v4652 = vadd.f32 %v4522, %v4651
  %v4653 = vpop.f32.mrb[0].mxu0
  %4654 = vmatprep.mubr.f32.mxu0 0.0
  %4655 = vmatmul.mubr.f32.gmra.mrb[0].mxu0 %v685
  %v4656 = vpop.f32.mrb[0].mxu0
  %v4657 = vadd.f32 %v4527, %v4656
  %v4658 = vpop.f32.mrb[0].mxu0
  %4659 = vmatprep.mubr.f32.mxu0 0.0
  %4660 = vmatmul.mubr.f32.gmra.mrb[0].mxu0 %v688
  %v4661 = vpop.f32.mrb[0].mxu0
  %v4662 = vadd.f32 %v4532, %v4661
  %v4663 = vpop.f32.mrb[0].mxu0
  %4664 = vmatprep.mubr.f32.mxu0 0.0
  %4665 = vmatmul.mubr.f32.gmra.mrb[0].mxu0 %v691
  %v4666 = vpop.f32.mrb[0].mxu0
  %v4667 = vadd.f32 %v4537, %v4666
  %v4668 = vpop.f32.mrb[0].mxu0
  %4669 = vmatprep.mubr.f32.mxu0 0.0
  %4670 = vmatmul.mubr.f32.gmra.mrb[0].mxu0 %v694
  %v4671 = vpop.f32.mrb[0].mxu0
  %v4672 = vadd.f32 %v4542, %v4671
  %v4673 = vpop.f32.mrb[0].mxu0
  %4674 = vdwg.mxu0
  %s4675 = scalar_lea.vmem %s10, 2
  %v4676 = vld [vmem:[%s4675] sm:$0x1]
  %v4678 = vlaneseq
  %v4679 = vshrl.u32 %v4678, 7
  %v4680 = vsub.s32 0, %v4679
  %v4681 = vrot.slane %v4676, %v4680
  %v4683 = vadd.f32 %v4612, %v4681
  %v4684 = vadd.f32 %v4617, %v4681
  %v4685 = vadd.f32 %v4622, %v4681
  %v4686 = vadd.f32 %v4627, %v4681
  %v4687 = vadd.f32 %v4632, %v4681
  %v4688 = vadd.f32 %v4637, %v4681
  %v4689 = vadd.f32 %v4642, %v4681
  %v4690 = vadd.f32 %v4647, %v4681
  %v4691 = vadd.f32 %v4652, %v4681
  %v4692 = vadd.f32 %v4657, %v4681
  %v4693 = vadd.f32 %v4662, %v4681
  %v4694 = vadd.f32 %v4667, %v4681
  %v4695 = vadd.f32 %v4672, %v4681
  %v4696 = vmul.f32 %v4683, %v4683
  %v4697 = vmul.f32 %v4684, %v4684
  %v4698 = vmul.f32 %v4685, %v4685
  %v4699 = vmul.f32 %v4686, %v4686
  %v4700 = vmul.f32 %v4687, %v4687
  %v4701 = vmul.f32 %v4688, %v4688
  %v4702 = vmul.f32 %v4689, %v4689
  %v4703 = vmul.f32 %v4690, %v4690
  %v4704 = vmul.f32 %v4691, %v4691
  %v4705 = vmul.f32 %v4692, %v4692
  %v4706 = vmul.f32 %v4693, %v4693
  %v4707 = vmul.f32 %v4694, %v4694
  %v4708 = vmul.f32 %v4695, %v4695
  %v4709 = vmul.f32 %v4683, %v4696
  %v4710 = vmul.f32 %v4684, %v4697
  %v4711 = vmul.f32 %v4685, %v4698
  %v4712 = vmul.f32 %v4686, %v4699
  %v4713 = vmul.f32 %v4687, %v4700
  %v4714 = vmul.f32 %v4688, %v4701
  %v4715 = vmul.f32 %v4689, %v4702
  %v4716 = vmul.f32 %v4690, %v4703
  %v4717 = vmul.f32 %v4691, %v4704
  %v4718 = vmul.f32 %v4692, %v4705
  %v4719 = vmul.f32 %v4693, %v4706
  %v4720 = vmul.f32 %v4694, %v4707
  %v4721 = vmul.f32 %v4695, %v4708
  %v4722 = vmul.f32 %v4709, 0.044715
  %v4723 = vmul.f32 %v4710, 0.044715
  %v4724 = vmul.f32 %v4711, 0.044715
  %v4725 = vmul.f32 %v4712, 0.044715
  %v4726 = vmul.f32 %v4713, 0.044715
  %v4727 = vmul.f32 %v4714, 0.044715
  %v4728 = vmul.f32 %v4715, 0.044715
  %v4729 = vmul.f32 %v4716, 0.044715
  %v4730 = vmul.f32 %v4717, 0.044715
  %v4731 = vmul.f32 %v4718, 0.044715
  %v4732 = vmul.f32 %v4719, 0.044715
  %v4733 = vmul.f32 %v4720, 0.044715
  %v4734 = vmul.f32 %v4721, 0.044715
  %v4735 = vadd.f32 %v4683, %v4722
  %v4736 = vadd.f32 %v4684, %v4723
  %v4737 = vadd.f32 %v4685, %v4724
  %v4738 = vadd.f32 %v4686, %v4725
  %v4739 = vadd.f32 %v4687, %v4726
  %v4740 = vadd.f32 %v4688, %v4727
  %v4741 = vadd.f32 %v4689, %v4728
  %v4742 = vadd.f32 %v4690, %v4729
  %v4743 = vadd.f32 %v4691, %v4730
  %v4744 = vadd.f32 %v4692, %v4731
  %v4745 = vadd.f32 %v4693, %v4732
  %v4746 = vadd.f32 %v4694, %v4733
  %v4747 = vadd.f32 %v4695, %v4734
  %v4748 = vmul.f32 %v4735, 0.7978846
  %v4749 = vmul.f32 %v4736, 0.7978846
  %v4750 = vmul.f32 %v4737, 0.7978846
  %v4751 = vmul.f32 %v4738, 0.7978846
  %v4752 = vmul.f32 %v4739, 0.7978846
  %v4753 = vmul.f32 %v4740, 0.7978846
  %v4754 = vmul.f32 %v4741, 0.7978846
  %v4755 = vmul.f32 %v4742, 0.7978846
  %v4756 = vmul.f32 %v4743, 0.7978846
  %v4757 = vmul.f32 %v4744, 0.7978846
  %v4758 = vmul.f32 %v4745, 0.7978846
  %v4759 = vmul.f32 %v4746, 0.7978846
  %v4760 = vmul.f32 %v4747, 0.7978846
  %v4761 = vtanh.pop %v4748
  %v4762 = vtanh.pop %v4749
  %v4763 = vtanh.pop %v4750
  %v4764 = vtanh.pop %v4751
  %v4765 = vtanh.pop %v4752
  %v4766 = vtanh.pop %v4753
  %v4767 = vtanh.pop %v4754
  %v4768 = vtanh.pop %v4755
  %v4769 = vtanh.pop %v4756
  %v4770 = vtanh.pop %v4757
  %v4771 = vtanh.pop %v4758
  %v4772 = vtanh.pop %v4759
  %v4773 = vtanh.pop %v4760
  %v4774 = vadd.f32 %v4761, 1.0
  %v4775 = vadd.f32 %v4762, 1.0
  %v4776 = vadd.f32 %v4763, 1.0
  %v4777 = vadd.f32 %v4764, 1.0
  %v4778 = vadd.f32 %v4765, 1.0
  %v4779 = vadd.f32 %v4766, 1.0
  %v4780 = vadd.f32 %v4767, 1.0
  %v4781 = vadd.f32 %v4768, 1.0
  %v4782 = vadd.f32 %v4769, 1.0
  %v4783 = vadd.f32 %v4770, 1.0
  %v4784 = vadd.f32 %v4771, 1.0
  %v4785 = vadd.f32 %v4772, 1.0
  %v4786 = vadd.f32 %v4773, 1.0
  %v4787 = vmul.f32 %v4774, 0.5
  %v4788 = vmul.f32 %v4775, 0.5
  %v4789 = vmul.f32 %v4776, 0.5
  %v4790 = vmul.f32 %v4777, 0.5
  %v4791 = vmul.f32 %v4778, 0.5
  %v4792 = vmul.f32 %v4779, 0.5
  %v4793 = vmul.f32 %v4780, 0.5
  %v4794 = vmul.f32 %v4781, 0.5
  %v4795 = vmul.f32 %v4782, 0.5
  %v4796 = vmul.f32 %v4783, 0.5
  %v4797 = vmul.f32 %v4784, 0.5
  %v4798 = vmul.f32 %v4785, 0.5
  %v4799 = vmul.f32 %v4786, 0.5
  %v4800 = vmul.f32 %v4683, %v4787
  %v4801 = vmul.f32 %v4684, %v4788
  %v4802 = vmul.f32 %v4685, %v4789
  %v4803 = vmul.f32 %v4686, %v4790
  %v4804 = vmul.f32 %v4687, %v4791
  %v4805 = vmul.f32 %v4688, %v4792
  %v4806 = vmul.f32 %v4689, %v4793
  %v4807 = vmul.f32 %v4690, %v4794
  %v4808 = vmul.f32 %v4691, %v4795
  %v4809 = vmul.f32 %v4692, %v4796
  %v4810 = vmul.f32 %v4693, %v4797
  %v4811 = vmul.f32 %v4694, %v4798
  %v4812 = vmul.f32 %v4695, %v4799
  %v4813 = vld [vmem:[%s20] sm:$0xff]
  %v4814 = vld [vmem:[%s20 + $0x8] sm:$0xff]
  %v4815 = vld [vmem:[%s20 + $0x10] sm:$0xff]
  %v4816 = vld [vmem:[%s20 + $0x18] sm:$0xff]
  %v4817 = vld [vmem:[%s20 + $0x20] sm:$0xff]
  %v4818 = vld [vmem:[%s20 + $0x28] sm:$0xff]
  %v4819 = vld [vmem:[%s20 + $0x30] sm:$0xff]
  %v4820 = vld [vmem:[%s20 + $0x38] sm:$0xff]
  %v4821 = vld [vmem:[%s21] sm:$0x1]
  %v4823 = vlaneseq
  %v4824 = vshrl.u32 %v4823, 7
  %v4825 = vsub.s32 0, %v4824
  %v4826 = vrot.slane %v4821, %v4825
  %v4829 = vsel %vm144, %v4800, 0
  %v4832 = vsel %vm144, %v4801, 0
  %v4835 = vsel %vm144, %v4802, 0
  %v4838 = vsel %vm144, %v4803, 0
  %v4841 = vsel %vm144, %v4804, 0
  %v4844 = vsel %vm144, %v4805, 0
  %v4847 = vsel %vm144, %v4806, 0
  %v4850 = vsel %vm144, %v4807, 0
  %v4853 = vsel %vm144, %v4808, 0
  %v4856 = vsel %vm144, %v4809, 0
  %v4859 = vsel %vm144, %v4810, 0
  %v4862 = vsel %vm144, %v4811, 0
  %v4865 = vsel %vm144, %v4812, 0
  %4867 = vmatprep.subr.mxu0 0.0
  %4868 = vmatpush1.msra.mxu0 %v4813
  %4869 = vmatprep.subr.mxu0 0.0
  %4870 = vmatpush1.msra.mxu0 %v4814
  %4871 = vmatprep.subr.mxu0 0.0
  %4872 = vmatpush1.msra.mxu0 %v4815
  %4873 = vmatprep.subr.mxu0 0.0
  %4874 = vmatpush1.msra.mxu0 %v4816
  %4875 = vmatprep.subr.mxu0 0.0
  %4876 = vmatpush1.msra.mxu0 %v4817
  %4877 = vmatprep.subr.mxu0 0.0
  %4878 = vmatpush1.msra.mxu0 %v4818
  %4879 = vmatprep.subr.mxu0 0.0
  %4880 = vmatpush1.msra.mxu0 %v4819
  %4881 = vmatprep.subr.mxu0 0.0
  %4882 = vmatpush1.msra.mxu0 %v4820
  %4883 = vmatprep.subr.mxu0 0.0
  %4884 = vmatpush1.msra.mxu0 0.0
  %4885 = vmatprep.subr.mxu0 0.0
  %4886 = vmatpush1.msra.mxu0 0.0
  %4887 = vmatprep.subr.mxu0 0.0
  %4888 = vmatpush1.msra.mxu0 0.0
  %4889 = vmatprep.subr.mxu0 0.0
  %4890 = vmatpush1.msra.mxu0 0.0
  %4891 = vmatprep.subr.mxu0 0.0
  %4892 = vmatpush1.msra.mxu0 0.0
  %4893 = vmatprep.subr.mxu0 0.0
  %4894 = vmatpush1.msra.mxu0 0.0
  %4895 = vmatprep.subr.mxu0 0.0
  %4896 = vmatpush1.msra.mxu0 0.0
  %4897 = vmatprep.subr.mxu0 0.0
  %4898 = vmatpush1.msra.mxu0 0.0
  %4899 = vmatprep.subr.mxu0 0.0
  %4900 = vmatpush1.msra.mxu0 0.0
  %4901 = vmatprep.subr.mxu0 0.0
  %4902 = vmatpush1.msra.mxu0 0.0
  %4903 = vmatprep.subr.mxu0 0.0
  %4904 = vmatpush1.msra.mxu0 0.0
  %4905 = vmatprep.subr.mxu0 0.0
  %4906 = vmatpush1.msra.mxu0 0.0
  %4907 = vmatprep.subr.mxu0 0.0
  %4908 = vmatpush1.msra.mxu0 0.0
  %4909 = vmatprep.subr.mxu0 0.0
  %4910 = vmatpush1.msra.mxu0 0.0
  %4911 = vmatprep.subr.mxu0 0.0
  %4912 = vmatpush1.msra.mxu0 0.0
  %4913 = vmatprep.subr.mxu0 0.0
  %4914 = vmatpush1.msra.mxu0 0.0
  %4915 = vmatprep.subr.mxu0 0.0
  %4916 = vmatpush1.msra.mxu0 0.0
  %4917 = vmatprep.subr.mxu0 0.0
  %4918 = vmatpush1.msra.mxu0 0.0
  %4919 = vmatprep.subr.mxu0 0.0
  %4920 = vmatpush1.msra.mxu0 0.0
  %4921 = vmatprep.subr.mxu0 0.0
  %4922 = vmatpush1.msra.mxu0 0.0
  %4923 = vmatprep.subr.mxu0 0.0
  %4924 = vmatpush1.msra.mxu0 0.0
  %4925 = vmatprep.subr.mxu0 0.0
  %4926 = vmatpush1.msra.mxu0 0.0
  %4927 = vmatprep.subr.mxu0 0.0
  %4928 = vmatpush1.msra.mxu0 0.0
  %4929 = vmatprep.subr.mxu0 0.0
  %4930 = vmatpush1.msra.mxu0 0.0
  %4931 = vmatprep.mubr.f32.mxu0 0.0
  %4932 = vmatmul.mubr.f32.gmra.mrb[0].mxu0 %v4829
  %v4933 = vpop.f32.mrb[0].mxu0
  %v4934 = vadd.f32 %v4826, %v4933
  %v4935 = vpop.f32.mrb[0].mxu0
  %4936 = vmatprep.mubr.f32.mxu0 0.0
  %4937 = vmatmul.mubr.f32.gmra.mrb[0].mxu0 %v4832
  %v4938 = vpop.f32.mrb[0].mxu0
  %v4939 = vadd.f32 %v4826, %v4938
  %v4940 = vpop.f32.mrb[0].mxu0
  %4941 = vmatprep.mubr.f32.mxu0 0.0
  %4942 = vmatmul.mubr.f32.gmra.mrb[0].mxu0 %v4835
  %v4943 = vpop.f32.mrb[0].mxu0
  %v4944 = vadd.f32 %v4826, %v4943
  %v4945 = vpop.f32.mrb[0].mxu0
  %4946 = vmatprep.mubr.f32.mxu0 0.0
  %4947 = vmatmul.mubr.f32.gmra.mrb[0].mxu0 %v4838
  %v4948 = vpop.f32.mrb[0].mxu0
  %v4949 = vadd.f32 %v4826, %v4948
  %v4950 = vpop.f32.mrb[0].mxu0
  %4951 = vmatprep.mubr.f32.mxu0 0.0
  %4952 = vmatmul.mubr.f32.gmra.mrb[0].mxu0 %v4841
  %v4953 = vpop.f32.mrb[0].mxu0
  %v4954 = vadd.f32 %v4826, %v4953
  %v4955 = vpop.f32.mrb[0].mxu0
  %4956 = vmatprep.mubr.f32.mxu0 0.0
  %4957 = vmatmul.mubr.f32.gmra.mrb[0].mxu0 %v4844
  %v4958 = vpop.f32.mrb[0].mxu0
  %v4959 = vadd.f32 %v4826, %v4958
  %v4960 = vpop.f32.mrb[0].mxu0
  %4961 = vmatprep.mubr.f32.mxu0 0.0
  %4962 = vmatmul.mubr.f32.gmra.mrb[0].mxu0 %v4847
  %v4963 = vpop.f32.mrb[0].mxu0
  %v4964 = vadd.f32 %v4826, %v4963
  %v4965 = vpop.f32.mrb[0].mxu0
  %4966 = vmatprep.mubr.f32.mxu0 0.0
  %4967 = vmatmul.mubr.f32.gmra.mrb[0].mxu0 %v4850
  %v4968 = vpop.f32.mrb[0].mxu0
  %v4969 = vadd.f32 %v4826, %v4968
  %v4970 = vpop.f32.mrb[0].mxu0
  %4971 = vmatprep.mubr.f32.mxu0 0.0
  %4972 = vmatmul.mubr.f32.gmra.mrb[0].mxu0 %v4853
  %v4973 = vpop.f32.mrb[0].mxu0
  %v4974 = vadd.f32 %v4826, %v4973
  %v4975 = vpop.f32.mrb[0].mxu0
  %4976 = vmatprep.mubr.f32.mxu0 0.0
  %4977 = vmatmul.mubr.f32.gmra.mrb[0].mxu0 %v4856
  %v4978 = vpop.f32.mrb[0].mxu0
  %v4979 = vadd.f32 %v4826, %v4978
  %v4980 = vpop.f32.mrb[0].mxu0
  %4981 = vmatprep.mubr.f32.mxu0 0.0
  %4982 = vmatmul.mubr.f32.gmra.mrb[0].mxu0 %v4859
  %v4983 = vpop.f32.mrb[0].mxu0
  %v4984 = vadd.f32 %v4826, %v4983
  %v4985 = vpop.f32.mrb[0].mxu0
  %4986 = vmatprep.mubr.f32.mxu0 0.0
  %4987 = vmatmul.mubr.f32.gmra.mrb[0].mxu0 %v4862
  %v4988 = vpop.f32.mrb[0].mxu0
  %v4989 = vadd.f32 %v4826, %v4988
  %v4990 = vpop.f32.mrb[0].mxu0
  %4991 = vmatprep.mubr.f32.mxu0 0.0
  %4992 = vmatmul.mubr.f32.gmra.mrb[0].mxu0 %v4865
  %v4993 = vpop.f32.mrb[0].mxu0
  %v4994 = vadd.f32 %v4826, %v4993
  %v4995 = vpop.f32.mrb[0].mxu0
  %4996 = vdwg.mxu0
  %v4997 = vmul.f32 %v4934, %v4934
  %v4998 = vmul.f32 %v4939, %v4939
  %v4999 = vmul.f32 %v4944, %v4944
  %v5000 = vmul.f32 %v4949, %v4949
  %v5001 = vmul.f32 %v4954, %v4954
  %v5002 = vmul.f32 %v4959, %v4959
  %v5003 = vmul.f32 %v4964, %v4964
  %v5004 = vmul.f32 %v4969, %v4969
  %v5005 = vmul.f32 %v4974, %v4974
  %v5006 = vmul.f32 %v4979, %v4979
  %v5007 = vmul.f32 %v4984, %v4984
  %v5008 = vmul.f32 %v4989, %v4989
  %v5009 = vmul.f32 %v4994, %v4994
  %v5010 = vmul.f32 %v4934, %v4997
  %v5011 = vmul.f32 %v4939, %v4998
  %v5012 = vmul.f32 %v4944, %v4999
  %v5013 = vmul.f32 %v4949, %v5000
  %v5014 = vmul.f32 %v4954, %v5001
  %v5015 = vmul.f32 %v4959, %v5002
  %v5016 = vmul.f32 %v4964, %v5003
  %v5017 = vmul.f32 %v4969, %v5004
  %v5018 = vmul.f32 %v4974, %v5005
  %v5019 = vmul.f32 %v4979, %v5006
  %v5020 = vmul.f32 %v4984, %v5007
  %v5021 = vmul.f32 %v4989, %v5008
  %v5022 = vmul.f32 %v4994, %v5009
  %v5023 = vmul.f32 %v5010, 0.044715
  %v5024 = vmul.f32 %v5011, 0.044715
  %v5025 = vmul.f32 %v5012, 0.044715
  %v5026 = vmul.f32 %v5013, 0.044715
  %v5027 = vmul.f32 %v5014, 0.044715
  %v5028 = vmul.f32 %v5015, 0.044715
  %v5029 = vmul.f32 %v5016, 0.044715
  %v5030 = vmul.f32 %v5017, 0.044715
  %v5031 = vmul.f32 %v5018, 0.044715
  %v5032 = vmul.f32 %v5019, 0.044715
  %v5033 = vmul.f32 %v5020, 0.044715
  %v5034 = vmul.f32 %v5021, 0.044715
  %v5035 = vmul.f32 %v5022, 0.044715
  %v5036 = vadd.f32 %v4934, %v5023
  %v5037 = vadd.f32 %v4939, %v5024
  %v5038 = vadd.f32 %v4944, %v5025
  %v5039 = vadd.f32 %v4949, %v5026
  %v5040 = vadd.f32 %v4954, %v5027
  %v5041 = vadd.f32 %v4959, %v5028
  %v5042 = vadd.f32 %v4964, %v5029
  %v5043 = vadd.f32 %v4969, %v5030
  %v5044 = vadd.f32 %v4974, %v5031
  %v5045 = vadd.f32 %v4979, %v5032
  %v5046 = vadd.f32 %v4984, %v5033
  %v5047 = vadd.f32 %v4989, %v5034
  %v5048 = vadd.f32 %v4994, %v5035
  %v5049 = vmul.f32 %v5036, 0.7978846
  %v5050 = vmul.f32 %v5037, 0.7978846
  %v5051 = vmul.f32 %v5038, 0.7978846
  %v5052 = vmul.f32 %v5039, 0.7978846
  %v5053 = vmul.f32 %v5040, 0.7978846
  %v5054 = vmul.f32 %v5041, 0.7978846
  %v5055 = vmul.f32 %v5042, 0.7978846
  %v5056 = vmul.f32 %v5043, 0.7978846
  %v5057 = vmul.f32 %v5044, 0.7978846
  %v5058 = vmul.f32 %v5045, 0.7978846
  %v5059 = vmul.f32 %v5046, 0.7978846
  %v5060 = vmul.f32 %v5047, 0.7978846
  %v5061 = vmul.f32 %v5048, 0.7978846
  %v5062 = vtanh.pop %v5049
  %v5063 = vtanh.pop %v5050
  %v5064 = vtanh.pop %v5051
  %v5065 = vtanh.pop %v5052
  %v5066 = vtanh.pop %v5053
  %v5067 = vtanh.pop %v5054
  %v5068 = vtanh.pop %v5055
  %v5069 = vtanh.pop %v5056
  %v5070 = vtanh.pop %v5057
  %v5071 = vtanh.pop %v5058
  %v5072 = vtanh.pop %v5059
  %v5073 = vtanh.pop %v5060
  %v5074 = vtanh.pop %v5061
  %v5075 = vadd.f32 %v5062, 1.0
  %v5076 = vadd.f32 %v5063, 1.0
  %v5077 = vadd.f32 %v5064, 1.0
  %v5078 = vadd.f32 %v5065, 1.0
  %v5079 = vadd.f32 %v5066, 1.0
  %v5080 = vadd.f32 %v5067, 1.0
  %v5081 = vadd.f32 %v5068, 1.0
  %v5082 = vadd.f32 %v5069, 1.0
  %v5083 = vadd.f32 %v5070, 1.0
  %v5084 = vadd.f32 %v5071, 1.0
  %v5085 = vadd.f32 %v5072, 1.0
  %v5086 = vadd.f32 %v5073, 1.0
  %v5087 = vadd.f32 %v5074, 1.0
  %v5088 = vmul.f32 %v5075, 0.5
  %v5089 = vmul.f32 %v5076, 0.5
  %v5090 = vmul.f32 %v5077, 0.5
  %v5091 = vmul.f32 %v5078, 0.5
  %v5092 = vmul.f32 %v5079, 0.5
  %v5093 = vmul.f32 %v5080, 0.5
  %v5094 = vmul.f32 %v5081, 0.5
  %v5095 = vmul.f32 %v5082, 0.5
  %v5096 = vmul.f32 %v5083, 0.5
  %v5097 = vmul.f32 %v5084, 0.5
  %v5098 = vmul.f32 %v5085, 0.5
  %v5099 = vmul.f32 %v5086, 0.5
  %v5100 = vmul.f32 %v5087, 0.5
  %v5101 = vmul.f32 %v4934, %v5088
  %v5102 = vmul.f32 %v4939, %v5089
  %v5103 = vmul.f32 %v4944, %v5090
  %v5104 = vmul.f32 %v4949, %v5091
  %v5105 = vmul.f32 %v4954, %v5092
  %v5106 = vmul.f32 %v4959, %v5093
  %v5107 = vmul.f32 %v4964, %v5094
  %v5108 = vmul.f32 %v4969, %v5095
  %v5109 = vmul.f32 %v4974, %v5096
  %v5110 = vmul.f32 %v4979, %v5097
  %v5111 = vmul.f32 %v4984, %v5098
  %v5112 = vmul.f32 %v4989, %v5099
  %v5113 = vmul.f32 %v4994, %v5100
  %v5114 = vld [vmem:[%s22] sm:$0xff]
  %v5115 = vld [vmem:[%s22 + $0x8] sm:$0xff]
  %v5116 = vld [vmem:[%s22 + $0x10] sm:$0xff]
  %v5117 = vld [vmem:[%s22 + $0x18] sm:$0xff]
  %v5118 = vld [vmem:[%s22 + $0x20] sm:$0xff]
  %v5119 = vld [vmem:[%s22 + $0x28] sm:$0xff]
  %v5120 = vld [vmem:[%s22 + $0x30] sm:$0xff]
  %v5121 = vld [vmem:[%s22 + $0x38] sm:$0xff]
  %v5122 = vld [vmem:[%s23] sm:$0x1]
  %v5124 = vlaneseq
  %v5125 = vshrl.u32 %v5124, 7
  %v5126 = vsub.s32 0, %v5125
  %v5127 = vrot.slane %v5122, %v5126
  %v5130 = vsel %vm144, %v5101, 0
  %v5133 = vsel %vm144, %v5102, 0
  %v5136 = vsel %vm144, %v5103, 0
  %v5139 = vsel %vm144, %v5104, 0
  %v5142 = vsel %vm144, %v5105, 0
  %v5145 = vsel %vm144, %v5106, 0
  %v5148 = vsel %vm144, %v5107, 0
  %v5151 = vsel %vm144, %v5108, 0
  %v5154 = vsel %vm144, %v5109, 0
  %v5157 = vsel %vm144, %v5110, 0
  %v5160 = vsel %vm144, %v5111, 0
  %v5163 = vsel %vm144, %v5112, 0
  %v5166 = vsel %vm144, %v5113, 0
  %5168 = vmatprep.subr.mxu0 0.0
  %5169 = vmatpush1.msra.mxu0 %v5114
  %5170 = vmatprep.subr.mxu0 0.0
  %5171 = vmatpush1.msra.mxu0 %v5115
  %5172 = vmatprep.subr.mxu0 0.0
  %5173 = vmatpush1.msra.mxu0 %v5116
  %5174 = vmatprep.subr.mxu0 0.0
  %5175 = vmatpush1.msra.mxu0 %v5117
  %5176 = vmatprep.subr.mxu0 0.0
  %5177 = vmatpush1.msra.mxu0 %v5118
  %5178 = vmatprep.subr.mxu0 0.0
  %5179 = vmatpush1.msra.mxu0 %v5119
  %5180 = vmatprep.subr.mxu0 0.0
  %5181 = vmatpush1.msra.mxu0 %v5120
  %5182 = vmatprep.subr.mxu0 0.0
  %5183 = vmatpush1.msra.mxu0 %v5121
  %5184 = vmatprep.subr.mxu0 0.0
  %5185 = vmatpush1.msra.mxu0 0.0
  %5186 = vmatprep.subr.mxu0 0.0
  %5187 = vmatpush1.msra.mxu0 0.0
  %5188 = vmatprep.subr.mxu0 0.0
  %5189 = vmatpush1.msra.mxu0 0.0
  %5190 = vmatprep.subr.mxu0 0.0
  %5191 = vmatpush1.msra.mxu0 0.0
  %5192 = vmatprep.subr.mxu0 0.0
  %5193 = vmatpush1.msra.mxu0 0.0
  %5194 = vmatprep.subr.mxu0 0.0
  %5195 = vmatpush1.msra.mxu0 0.0
  %5196 = vmatprep.subr.mxu0 0.0
  %5197 = vmatpush1.msra.mxu0 0.0
  %5198 = vmatprep.subr.mxu0 0.0
  %5199 = vmatpush1.msra.mxu0 0.0
  %5200 = vmatprep.subr.mxu0 0.0
  %5201 = vmatpush1.msra.mxu0 0.0
  %5202 = vmatprep.subr.mxu0 0.0
  %5203 = vmatpush1.msra.mxu0 0.0
  %5204 = vmatprep.subr.mxu0 0.0
  %5205 = vmatpush1.msra.mxu0 0.0
  %5206 = vmatprep.subr.mxu0 0.0
  %5207 = vmatpush1.msra.mxu0 0.0
  %5208 = vmatprep.subr.mxu0 0.0
  %5209 = vmatpush1.msra.mxu0 0.0
  %5210 = vmatprep.subr.mxu0 0.0
  %5211 = vmatpush1.msra.mxu0 0.0
  %5212 = vmatprep.subr.mxu0 0.0
  %5213 = vmatpush1.msra.mxu0 0.0
  %5214 = vmatprep.subr.mxu0 0.0
  %5215 = vmatpush1.msra.mxu0 0.0
  %5216 = vmatprep.subr.mxu0 0.0
  %5217 = vmatpush1.msra.mxu0 0.0
  %5218 = vmatprep.subr.mxu0 0.0
  %5219 = vmatpush1.msra.mxu0 0.0
  %5220 = vmatprep.subr.mxu0 0.0
  %5221 = vmatpush1.msra.mxu0 0.0
  %5222 = vmatprep.subr.mxu0 0.0
  %5223 = vmatpush1.msra.mxu0 0.0
  %5224 = vmatprep.subr.mxu0 0.0
  %5225 = vmatpush1.msra.mxu0 0.0
  %5226 = vmatprep.subr.mxu0 0.0
  %5227 = vmatpush1.msra.mxu0 0.0
  %5228 = vmatprep.subr.mxu0 0.0
  %5229 = vmatpush1.msra.mxu0 0.0
  %5230 = vmatprep.subr.mxu0 0.0
  %5231 = vmatpush1.msra.mxu0 0.0
  %5232 = vmatprep.mubr.f32.mxu0 0.0
  %5233 = vmatmul.mubr.f32.gmra.mrb[0].mxu0 %v5130
  %v5234 = vpop.f32.mrb[0].mxu0
  %v5235 = vadd.f32 %v5127, %v5234
  %v5236 = vpop.f32.mrb[0].mxu0
  %5237 = vmatprep.mubr.f32.mxu0 0.0
  %5238 = vmatmul.mubr.f32.gmra.mrb[0].mxu0 %v5133
  %v5239 = vpop.f32.mrb[0].mxu0
  %v5240 = vadd.f32 %v5127, %v5239
  %v5241 = vpop.f32.mrb[0].mxu0
  %5242 = vmatprep.mubr.f32.mxu0 0.0
  %5243 = vmatmul.mubr.f32.gmra.mrb[0].mxu0 %v5136
  %v5244 = vpop.f32.mrb[0].mxu0
  %v5245 = vadd.f32 %v5127, %v5244
  %v5246 = vpop.f32.mrb[0].mxu0
  %5247 = vmatprep.mubr.f32.mxu0 0.0
  %5248 = vmatmul.mubr.f32.gmra.mrb[0].mxu0 %v5139
  %v5249 = vpop.f32.mrb[0].mxu0
  %v5250 = vadd.f32 %v5127, %v5249
  %v5251 = vpop.f32.mrb[0].mxu0
  %5252 = vmatprep.mubr.f32.mxu0 0.0
  %5253 = vmatmul.mubr.f32.gmra.mrb[0].mxu0 %v5142
  %v5254 = vpop.f32.mrb[0].mxu0
  %v5255 = vadd.f32 %v5127, %v5254
  %v5256 = vpop.f32.mrb[0].mxu0
  %5257 = vmatprep.mubr.f32.mxu0 0.0
  %5258 = vmatmul.mubr.f32.gmra.mrb[0].mxu0 %v5145
  %v5259 = vpop.f32.mrb[0].mxu0
  %v5260 = vadd.f32 %v5127, %v5259
  %v5261 = vpop.f32.mrb[0].mxu0
  %5262 = vmatprep.mubr.f32.mxu0 0.0
  %5263 = vmatmul.mubr.f32.gmra.mrb[0].mxu0 %v5148
  %v5264 = vpop.f32.mrb[0].mxu0
  %v5265 = vadd.f32 %v5127, %v5264
  %v5266 = vpop.f32.mrb[0].mxu0
  %5267 = vmatprep.mubr.f32.mxu0 0.0
  %5268 = vmatmul.mubr.f32.gmra.mrb[0].mxu0 %v5151
  %v5269 = vpop.f32.mrb[0].mxu0
  %v5270 = vadd.f32 %v5127, %v5269
  %v5271 = vpop.f32.mrb[0].mxu0
  %5272 = vmatprep.mubr.f32.mxu0 0.0
  %5273 = vmatmul.mubr.f32.gmra.mrb[0].mxu0 %v5154
  %v5274 = vpop.f32.mrb[0].mxu0
  %v5275 = vadd.f32 %v5127, %v5274
  %v5276 = vpop.f32.mrb[0].mxu0
  %5277 = vmatprep.mubr.f32.mxu0 0.0
  %5278 = vmatmul.mubr.f32.gmra.mrb[0].mxu0 %v5157
  %v5279 = vpop.f32.mrb[0].mxu0
  %v5280 = vadd.f32 %v5127, %v5279
  %v5281 = vpop.f32.mrb[0].mxu0
  %5282 = vmatprep.mubr.f32.mxu0 0.0
  %5283 = vmatmul.mubr.f32.gmra.mrb[0].mxu0 %v5160
  %v5284 = vpop.f32.mrb[0].mxu0
  %v5285 = vadd.f32 %v5127, %v5284
  %v5286 = vpop.f32.mrb[0].mxu0
  %5287 = vmatprep.mubr.f32.mxu0 0.0
  %5288 = vmatmul.mubr.f32.gmra.mrb[0].mxu0 %v5163
  %v5289 = vpop.f32.mrb[0].mxu0
  %v5290 = vadd.f32 %v5127, %v5289
  %v5291 = vpop.f32.mrb[0].mxu0
  %5292 = vmatprep.mubr.f32.mxu0 0.0
  %5293 = vmatmul.mubr.f32.gmra.mrb[0].mxu0 %v5166
  %v5294 = vpop.f32.mrb[0].mxu0
  %v5295 = vadd.f32 %v5127, %v5294
  %v5296 = vpop.f32.mrb[0].mxu0
  %5297 = vdwg.mxu0
  %vm5298 = vcmask 179200
  %5299 = vst.msk [vmem:[%s24] sm:$0xff] %vm5298, %v5235
  %5300 = vst.msk [vmem:[%s24 + $0x8] sm:$0xff] %vm5298, %v5240
  %5301 = vst.msk [vmem:[%s24 + $0x10] sm:$0xff] %vm5298, %v5245
  %5302 = vst.msk [vmem:[%s24 + $0x18] sm:$0xff] %vm5298, %v5250
  %5303 = vst.msk [vmem:[%s24 + $0x20] sm:$0xff] %vm5298, %v5255
  %5304 = vst.msk [vmem:[%s24 + $0x28] sm:$0xff] %vm5298, %v5260
  %5305 = vst.msk [vmem:[%s24 + $0x30] sm:$0xff] %vm5298, %v5265
  %5306 = vst.msk [vmem:[%s24 + $0x38] sm:$0xff] %vm5298, %v5270
  %5307 = vst.msk [vmem:[%s24 + $0x40] sm:$0xff] %vm5298, %v5275
  %5308 = vst.msk [vmem:[%s24 + $0x48] sm:$0xff] %vm5298, %v5280
  %5309 = vst.msk [vmem:[%s24 + $0x50] sm:$0xff] %vm5298, %v5285
  %5310 = vst.msk [vmem:[%s24 + $0x58] sm:$0xff] %vm5298, %v5290
  %vm5311 = vcmask 173056
  %5312 = vst.msk [vmem:[%s24 + $0x60] sm:$0x3] %vm5311, %v5295
  %5326 = vrot.lane.b32.xlu0 %v1551, 22
  %v5327 = vpop.permute.xlu0 %5326
  %5328 = vrot.lane.b32.xlu0 %v1556, 22
  %v5329 = vpop.permute.xlu0 %5328
  %5330 = vrot.lane.b32.xlu0 %v1561, 22
  %v5331 = vpop.permute.xlu0 %5330
  %5332 = vrot.lane.b32.xlu0 %v1566, 22
  %v5333 = vpop.permute.xlu0 %5332
  %5334 = vrot.lane.b32.xlu0 %v1571, 22
  %v5335 = vpop.permute.xlu0 %5334
  %5336 = vrot.lane.b32.xlu0 %v1576, 22
  %v5337 = vpop.permute.xlu0 %5336
  %5338 = vrot.lane.b32.xlu0 %v1581, 22
  %v5339 = vpop.permute.xlu0 %5338
  %5340 = vrot.lane.b32.xlu0 %v1586, 22
  %v5341 = vpop.permute.xlu0 %5340
  %5342 = vrot.lane.b32.xlu0 %v1591, 22
  %v5343 = vpop.permute.xlu0 %5342
  %5344 = vrot.lane.b32.xlu0 %v1596, 22
  %v5345 = vpop.permute.xlu0 %5344
  %5346 = vrot.lane.b32.xlu0 %v1601, 22
  %v5347 = vpop.permute.xlu0 %5346
  %5348 = vrot.lane.b32.xlu0 %v1606, 22
  %v5349 = vpop.permute.xlu0 %5348
  %5350 = vrot.lane.b32.xlu0 %v1611, 22
  %v5351 = vpop.permute.xlu0 %5350
  %vm5365 = vcmask 195760
  %5366 = vst.msk [vmem:[%s24] sm:$0xff] %vm5365, %v5327
  %5367 = vst.msk [vmem:[%s24 + $0x8] sm:$0xff] %vm5365, %v5329
  %5368 = vst.msk [vmem:[%s24 + $0x10] sm:$0xff] %vm5365, %v5331
  %5369 = vst.msk [vmem:[%s24 + $0x18] sm:$0xff] %vm5365, %v5333
  %5370 = vst.msk [vmem:[%s24 + $0x20] sm:$0xff] %vm5365, %v5335
  %5371 = vst.msk [vmem:[%s24 + $0x28] sm:$0xff] %vm5365, %v5337
  %5372 = vst.msk [vmem:[%s24 + $0x30] sm:$0xff] %vm5365, %v5339
  %5373 = vst.msk [vmem:[%s24 + $0x38] sm:$0xff] %vm5365, %v5341
  %5374 = vst.msk [vmem:[%s24 + $0x40] sm:$0xff] %vm5365, %v5343
  %5375 = vst.msk [vmem:[%s24 + $0x48] sm:$0xff] %vm5365, %v5345
  %5376 = vst.msk [vmem:[%s24 + $0x50] sm:$0xff] %vm5365, %v5347
  %5377 = vst.msk [vmem:[%s24 + $0x58] sm:$0xff] %vm5365, %v5349
  %vm5378 = vcmask 189616
  %5379 = vst.msk [vmem:[%s24 + $0x60] sm:$0x3] %vm5378, %v5351
  %5393 = vrot.lane.b32.xlu0 %v3479, 24
  %v5394 = vpop.permute.xlu0 %5393
  %5395 = vrot.lane.b32.xlu0 %v3484, 24
  %v5396 = vpop.permute.xlu0 %5395
  %5397 = vrot.lane.b32.xlu0 %v3489, 24
  %v5398 = vpop.permute.xlu0 %5397
  %5399 = vrot.lane.b32.xlu0 %v3494, 24
  %v5400 = vpop.permute.xlu0 %5399
  %5401 = vrot.lane.b32.xlu0 %v3499, 24
  %v5402 = vpop.permute.xlu0 %5401
  %5403 = vrot.lane.b32.xlu0 %v3504, 24
  %v5404 = vpop.permute.xlu0 %5403
  %5405 = vrot.lane.b32.xlu0 %v3509, 24
  %v5406 = vpop.permute.xlu0 %5405
  %5407 = vrot.lane.b32.xlu0 %v3514, 24
  %v5408 = vpop.permute.xlu0 %5407
  %5409 = vrot.lane.b32.xlu0 %v3519, 24
  %v5410 = vpop.permute.xlu0 %5409
  %5411 = vrot.lane.b32.xlu0 %v3524, 24
  %v5412 = vpop.permute.xlu0 %5411
  %5413 = vrot.lane.b32.xlu0 %v3529, 24
  %v5414 = vpop.permute.xlu0 %5413
  %5415 = vrot.lane.b32.xlu0 %v3534, 24
  %v5416 = vpop.permute.xlu0 %5415
  %5417 = vrot.lane.b32.xlu0 %v3539, 24
  %v5418 = vpop.permute.xlu0 %5417
  %vm5432 = vcmask 212160
  %5433 = vst.msk [vmem:[%s24] sm:$0xff] %vm5432, %v5394
  %5434 = vst.msk [vmem:[%s24 + $0x8] sm:$0xff] %vm5432, %v5396
  %5435 = vst.msk [vmem:[%s24 + $0x10] sm:$0xff] %vm5432, %v5398
  %5436 = vst.msk [vmem:[%s24 + $0x18] sm:$0xff] %vm5432, %v5400
  %5437 = vst.msk [vmem:[%s24 + $0x20] sm:$0xff] %vm5432, %v5402
  %5438 = vst.msk [vmem:[%s24 + $0x28] sm:$0xff] %vm5432, %v5404
  %5439 = vst.msk [vmem:[%s24 + $0x30] sm:$0xff] %vm5432, %v5406
  %5440 = vst.msk [vmem:[%s24 + $0x38] sm:$0xff] %vm5432, %v5408
  %5441 = vst.msk [vmem:[%s24 + $0x40] sm:$0xff] %vm5432, %v5410
  %5442 = vst.msk [vmem:[%s24 + $0x48] sm:$0xff] %vm5432, %v5412
  %5443 = vst.msk [vmem:[%s24 + $0x50] sm:$0xff] %vm5432, %v5414
  %5444 = vst.msk [vmem:[%s24 + $0x58] sm:$0xff] %vm5432, %v5416
  %vm5445 = vcmask 206016
  %5446 = vst.msk [vmem:[%s24 + $0x60] sm:$0x3] %vm5445, %v5418
  // Predicated region
  $region98: #{_forward_impl.1} parent=0 // pred_check
    _
  $region99: #{_forward_impl.1} parent=0 // pred_check_branch
    %5448 = sbr.rel (0) target = $region101
  $region100: #{_forward_impl.1} parent=0 // pred_region
    _
  $region101: #{_forward_impl.1} parent=0 // pred_fallthru
    _
  // Predicated region
  $region102: #{_forward_impl.1} parent=0 // pred_check
    _
  $region103: #{_forward_impl.1} parent=0 // pred_check_branch
    %5450 = sbr.rel (0) target = $region105
  $region104: #{_forward_impl.1} parent=0 // pred_region
    _
  $region105: #{_forward_impl.1} parent=0 // pred_fallthru
    _

</llo_original>
